<compile_context>
chip_gen: v6e
topology: v6e:2x2x1
jax: 0.10.0
libtpu: 0.0.40
codegen_flags: <defaults>
</compile_context>

<pallas_src>
import jax
import jax.numpy as jnp
from jax.experimental import pallas as pl
from jax.experimental.pallas import tpu as pltpu

LANE = 128


def _round_up(n, m):
    return (n + m - 1) // m * m


def mlp_kernel(x_ref, w1_ref, b1_ref,
               w2_hbm, s2_ref, b2_ref,
               w3_hbm, s3_ref, b3_ref,
               w4_hbm, s4_ref, b4_ref,
               o_ref,
               w2_v, w3_v, w4_v, sem):
    # Kick off the dominant w2/w3/w4 HBM->VMEM DMAs immediately so they overlap
    # layer-1/2 compute (and the x/out DMAs).  At grid>1 these re-issue per
    # step; that regime is compute-bound, so the extra traffic is hidden.
    cp2 = pltpu.make_async_copy(w2_hbm, w2_v, sem.at[0])
    cp3 = pltpu.make_async_copy(w3_hbm, w3_v, sem.at[1])
    cp4 = pltpu.make_async_copy(w4_hbm, w4_v, sem.at[2])
    cp2.start()
    cp3.start()
    cp4.start()

    # Layer 1: lane-dense padded K=128, bf16 into the MXU, f32 accumulate.
    h = jnp.dot(x_ref[...].astype(jnp.bfloat16), w1_ref[...],
                preferred_element_type=jnp.float32)
    # bias + ReLU in f32 on the VPU; materialize the activation in bf16.
    h = jnp.maximum(h + b1_ref[...], 0.0).astype(jnp.bfloat16)

    # Layers 2-4: int8 weights dequantized as (int8 -> bf16) into the MXU; the
    # per-output-channel scale is applied in the f32 epilogue with the bias.
    cp2.wait()
    h = jnp.dot(h, w2_v[...].astype(jnp.bfloat16),
                preferred_element_type=jnp.float32)
    h = jnp.maximum(h * s2_ref[...] + b2_ref[...], 0.0).astype(jnp.bfloat16)

    cp3.wait()
    h = jnp.dot(h, w3_v[...].astype(jnp.bfloat16),
                preferred_element_type=jnp.float32)
    h = jnp.maximum(h * s3_ref[...] + b3_ref[...], 0.0).astype(jnp.bfloat16)

    cp4.wait()
    h = jnp.dot(h, w4_v[...].astype(jnp.bfloat16),
                preferred_element_type=jnp.float32)
    o_ref[...] = jnp.maximum(h * s4_ref[...] + b4_ref[...], 0.0)


def init_params(key, num_features, num_nodes, hidden=512):
    """PyTorch-Linear-style init: U(-1/sqrt(fan_in), 1/sqrt(fan_in)), f32."""
    dims = [(num_features, hidden), (hidden, hidden),
            (hidden, hidden), (hidden, num_nodes)]
    params = {}
    for idx, (fin, fout) in enumerate(dims, start=1):
        key, kw, kb = jax.random.split(key, 3)
        bound = 1.0 / (fin ** 0.5)
        params[f"w{idx}"] = jax.random.uniform(
            kw, (fin, fout), jnp.float32, -bound, bound)
        params[f"b{idx}"] = jax.random.uniform(
            kb, (1, fout), jnp.float32, -bound, bound)
    return params


def _quantize_per_channel(w, lane_pad=None):
    """Symmetric per-output-channel int8 quantization: w ~= q * scale."""
    if lane_pad is not None and lane_pad > w.shape[1]:
        w = jnp.zeros((w.shape[0], lane_pad), w.dtype).at[:, :w.shape[1]].set(w)
    maxabs = jnp.max(jnp.abs(w), axis=0, keepdims=True)
    scale = jnp.where(maxabs > 0, maxabs / 127.0, 1.0).astype(jnp.float32)
    q = jnp.clip(jnp.round(w / scale), -127, 127).astype(jnp.int8)
    return q, scale


def prepare_params(params, lane=LANE):
    """One-time export:
         w1       -> bf16, rows zero-padded to K = round_up(num_features, 128)
         w2/w3/w4 -> int8 + per-output-channel f32 scale (w4 lane-padded)
         biases   -> f32 (b4 lane-padded)."""
    F, H = params["w1"].shape
    N = params["w4"].shape[1]
    Fp = _round_up(F, lane)
    Np = _round_up(N, lane)

    w1 = jnp.zeros((Fp, H), params["w1"].dtype).at[:F, :].set(params["w1"])
    b4 = jnp.zeros((1, Np), params["b4"].dtype).at[:, :N].set(params["b4"])

    w2q, s2 = _quantize_per_channel(params["w2"])
    w3q, s3 = _quantize_per_channel(params["w3"])
    w4q, s4 = _quantize_per_channel(params["w4"], lane_pad=Np)

    prepped = dict(
        w1=w1.astype(jnp.bfloat16), b1=params["b1"].astype(jnp.float32),
        w2q=w2q, s2=s2, b2=params["b2"].astype(jnp.float32),
        w3q=w3q, s3=s3, b3=params["b3"].astype(jnp.float32),
        w4q=w4q, s4=s4, b4=b4.astype(jnp.float32),
    )
    meta = dict(num_features=F, padded_features=Fp,
                num_nodes=N, padded_nodes=Np, hidden=H)
    return prepped, meta


def net_forward(x, prepped, meta, *, tb=None):
    """x: (B, num_features) f32.  prepped/meta: output of prepare_params."""
    B, F = x.shape
    assert F == meta["num_features"]
    Fp, H, Np = meta["padded_features"], meta["hidden"], meta["padded_nodes"]

    if Fp > F:  # lane-dense x tile / full-K layer-1 MXU pass
        x = jnp.pad(x, ((0, 0), (0, Fp - F)))

    if tb is None:
        # Single grid step (weights fetched once, no per-step overhead) up to
        # 2048 rows; total VMEM footprint stays well under even v7x's 64 MiB.
        tb = B if B <= 2048 else 2048
    assert B % tb == 0, "batch must be divisible by the batch tile"
    grid = (B // tb,)

    full = lambda shape: pl.BlockSpec(shape, lambda i: (0, 0))
    hbm = pl.BlockSpec(memory_space=pl.ANY)

    if grid[0] == 1:
        x_spec = pl.BlockSpec((tb, Fp), lambda i: (i, 0))
        semantics = ("arbitrary",)
    else:
        # Shard the batch axis across TensorCores (v7x megacore) and buffer
        # x tiles a bit deeper — plenty of VMEM headroom for this kernel.
        x_spec = pl.BlockSpec((tb, Fp), lambda i: (i, 0),
                              pipeline_mode=pl.Buffered(3))
        semantics = ("parallel",)

    flops = 2 * B * (Fp * H + H * H + H * H + H * Np)
    bytes_accessed = (
        B * Fp * 4 + B * Np * 4
        + sum(int(v.size) * v.dtype.itemsize for v in prepped.values()))
    cost = pl.CostEstimate(flops=flops, transcendentals=0,
                           bytes_accessed=bytes_accessed)

    out = pl.pallas_call(
        mlp_kernel,
        out_shape=jax.ShapeDtypeStruct((B, Np), jnp.float32),
        grid_spec=pltpu.PrefetchScalarGridSpec(
            num_scalar_prefetch=0,
            grid=grid,
            in_specs=[
                x_spec,                               # x tile
                full((Fp, H)), full((1, H)),          # linear1 (bf16 w, f32 b)
                hbm, full((1, H)), full((1, H)),      # linear2 (int8 w, scale, b)
                hbm, full((1, H)), full((1, H)),      # linear3 (int8 w, scale, b)
                hbm, full((1, Np)), full((1, Np)),    # linear4 (int8 w, lane-padded)
            ],
            out_specs=pl.BlockSpec((tb, Np), lambda i: (i, 0)),
            scratch_shapes=[
                pltpu.VMEM((H, H), jnp.int8),         # w2 staging
                pltpu.VMEM((H, H), jnp.int8),         # w3 staging
                pltpu.VMEM((H, Np), jnp.int8),        # w4 staging
                pltpu.SemaphoreType.DMA((3,)),
            ]),
        compiler_params=pltpu.CompilerParams(dimension_semantics=semantics),
        cost_estimate=cost,
    )(x, prepped["w1"], prepped["b1"],
      prepped["w2q"], prepped["s2"], prepped["b2"],
      prepped["w3q"], prepped["s3"], prepped["b3"],
      prepped["w4q"], prepped["s4"], prepped["b4"])

    return out[:, :meta["num_nodes"]]


def net_reference(x, prepped, meta):
    """Same math as the kernel, outside Pallas (matched bf16/int8 numerics)."""
    F, Fp = meta["num_features"], meta["padded_features"]
    if Fp > F:
        x = jnp.pad(x, ((0, 0), (0, Fp - F)))
    h = jnp.dot(x.astype(jnp.bfloat16), prepped["w1"],
                preferred_element_type=jnp.float32)
    h = jnp.maximum(h + prepped["b1"], 0.0).astype(jnp.bfloat16)
    for i in (2, 3, 4):
        h = jnp.dot(h, prepped[f"w{i}q"].astype(jnp.bfloat16),
                    preferred_element_type=jnp.float32)
        h = jnp.maximum(h * prepped[f"s{i}"] + prepped[f"b{i}"], 0.0)
        if i < 4:
            h = h.astype(jnp.bfloat16)
    return h[:, :meta["num_nodes"]]


def net_reference_f32(x, params):
    """Original f32 PyTorch `Net` semantics (no quantization / casting)."""
    h = x
    for i in (1, 2, 3, 4):
        h = jnp.maximum(h @ params[f"w{i}"] + params[f"b{i}"], 0.0)
    return h


if __name__ == "__main__":
    # `data` in the PyTorch module defines num_nodes (rows) / num_features (cols).
    num_nodes, num_features, hidden = 64, 32, 512
    batch = 128  # rows of x fed through the MLP

    key = jax.random.PRNGKey(0)
    key, kx = jax.random.split(key)
    x = jax.random.normal(kx, (batch, num_features), jnp.float32)
    params = init_params(key, num_features, num_nodes, hidden)
    prepped, meta = prepare_params(params)

    out = jax.block_until_ready(net_forward(x, prepped, meta))
    assert out.shape == (batch, num_nodes)

    # Bit-matched check: identical bf16/int8 math outside Pallas.
    ref = net_reference(x, prepped, meta)
    assert jnp.allclose(out, ref, atol=1e-2, rtol=1e-2), \
        float(jnp.max(jnp.abs(out - ref)))

    # Quantization/bf16 drift vs. the original f32 model (weight-only int8 +
    # bf16 activations) — expected ~1% relative, validated to a 10% bound.
    ref32 = net_reference_f32(x, params)
    drift = float(jnp.max(jnp.abs(out - ref32)) /
                  (jnp.max(jnp.abs(ref32)) + 1e-6))
    assert drift < 0.1, drift

    print("KERNEL_OK")
</pallas_src>

<mosaic_0001>
module attributes {stable_mosaic.version = 11 : i64} {
  func.func @mlp_kernel(%arg0: i32, %arg1: memref<128x128xf32, #tpu.memory_space<vmem>>, %arg2: memref<128x512xbf16, #tpu.memory_space<vmem>>, %arg3: memref<1x512xf32, #tpu.memory_space<vmem>>, %arg4: memref<512x512xi8, #tpu.memory_space<any>>, %arg5: memref<1x512xf32, #tpu.memory_space<vmem>>, %arg6: memref<1x512xf32, #tpu.memory_space<vmem>>, %arg7: memref<512x512xi8, #tpu.memory_space<any>>, %arg8: memref<1x512xf32, #tpu.memory_space<vmem>>, %arg9: memref<1x512xf32, #tpu.memory_space<vmem>>, %arg10: memref<512x128xi8, #tpu.memory_space<any>>, %arg11: memref<1x128xf32, #tpu.memory_space<vmem>>, %arg12: memref<1x128xf32, #tpu.memory_space<vmem>>, %arg13: memref<128x128xf32, #tpu.memory_space<vmem>>, %arg14: memref<512x512xi8, #tpu.memory_space<vmem>>, %arg15: memref<512x512xi8, #tpu.memory_space<vmem>>, %arg16: memref<512x128xi8, #tpu.memory_space<vmem>>, %arg17: memref<3x!tpu.dma_semaphore, #tpu.memory_space<semaphore_mem>>) attributes {dimension_semantics = [#tpu.dimension_semantics<arbitrary>], iteration_bounds = array<i64: 1>, scalar_prefetch = 0 : i64, scratch_operands = 4 : i64, tpu.core_type = #tpu.core_type<tc>, window_params = [{transform_indices = @transform_0, window_bounds = array<i64: 128, 128>}, {pipeline_mode = #tpu.pipeline_mode<synchronous>, transform_indices = @transform_1, window_bounds = array<i64: 128, 512>}, {pipeline_mode = #tpu.pipeline_mode<synchronous>, transform_indices = @transform_2, window_bounds = array<i64: 1, 512>}, {}, {pipeline_mode = #tpu.pipeline_mode<synchronous>, transform_indices = @transform_4, window_bounds = array<i64: 1, 512>}, {pipeline_mode = #tpu.pipeline_mode<synchronous>, transform_indices = @transform_5, window_bounds = array<i64: 1, 512>}, {}, {pipeline_mode = #tpu.pipeline_mode<synchronous>, transform_indices = @transform_7, window_bounds = array<i64: 1, 512>}, {pipeline_mode = #tpu.pipeline_mode<synchronous>, transform_indices = @transform_8, window_bounds = array<i64: 1, 512>}, {}, {pipeline_mode = #tpu.pipeline_mode<synchronous>, transform_indices = @transform_10, window_bounds = array<i64: 1, 128>}, {pipeline_mode = #tpu.pipeline_mode<synchronous>, transform_indices = @transform_11, window_bounds = array<i64: 1, 128>}, {transform_indices = @transform_12, window_bounds = array<i64: 128, 128>}]} {
    %c0_i32 = arith.constant 0 : i32
    %0 = tpu.memref_slice %arg17[%c0_i32] : memref<3x!tpu.dma_semaphore, #tpu.memory_space<semaphore_mem>> -> memref<1x!tpu.dma_semaphore, #tpu.memory_space<semaphore_mem>>
    %1 = tpu.memref_squeeze %0 : memref<1x!tpu.dma_semaphore, #tpu.memory_space<semaphore_mem>> -> memref<!tpu.dma_semaphore, #tpu.memory_space<semaphore_mem>>
    tpu.enqueue_dma source(%arg4 : memref<512x512xi8, #tpu.memory_space<any>>) target(%arg14 : memref<512x512xi8, #tpu.memory_space<vmem>>) target_semaphore(%1 : memref<!tpu.dma_semaphore, #tpu.memory_space<semaphore_mem>>)
    %c1_i32 = arith.constant 1 : i32
    %2 = tpu.memref_slice %arg17[%c1_i32] : memref<3x!tpu.dma_semaphore, #tpu.memory_space<semaphore_mem>> -> memref<1x!tpu.dma_semaphore, #tpu.memory_space<semaphore_mem>>
    %3 = tpu.memref_squeeze %2 : memref<1x!tpu.dma_semaphore, #tpu.memory_space<semaphore_mem>> -> memref<!tpu.dma_semaphore, #tpu.memory_space<semaphore_mem>>
    tpu.enqueue_dma source(%arg7 : memref<512x512xi8, #tpu.memory_space<any>>) target(%arg15 : memref<512x512xi8, #tpu.memory_space<vmem>>) target_semaphore(%3 : memref<!tpu.dma_semaphore, #tpu.memory_space<semaphore_mem>>)
    %c2_i32 = arith.constant 2 : i32
    %4 = tpu.memref_slice %arg17[%c2_i32] : memref<3x!tpu.dma_semaphore, #tpu.memory_space<semaphore_mem>> -> memref<1x!tpu.dma_semaphore, #tpu.memory_space<semaphore_mem>>
    %5 = tpu.memref_squeeze %4 : memref<1x!tpu.dma_semaphore, #tpu.memory_space<semaphore_mem>> -> memref<!tpu.dma_semaphore, #tpu.memory_space<semaphore_mem>>
    tpu.enqueue_dma source(%arg10 : memref<512x128xi8, #tpu.memory_space<any>>) target(%arg16 : memref<512x128xi8, #tpu.memory_space<vmem>>) target_semaphore(%5 : memref<!tpu.dma_semaphore, #tpu.memory_space<semaphore_mem>>)
    %c0 = arith.constant 0 : index
    %c0_0 = arith.constant 0 : index
    %6 = vector.load %arg1[%c0, %c0_0] : memref<128x128xf32, #tpu.memory_space<vmem>>, vector<128x128xf32>
    %7 = arith.truncf %6 : vector<128x128xf32> to vector<128x128xbf16>
    %c0_1 = arith.constant 0 : index
    %c0_2 = arith.constant 0 : index
    %8 = vector.load %arg2[%c0_1, %c0_2] : memref<128x512xbf16, #tpu.memory_space<vmem>>, vector<128x512xbf16>
    %cst = arith.constant dense<0.000000e+00> : vector<128x512xf32>
    %9 = tpu.matmul %7, %8, %cst {dimension_numbers = #tpu.dot_dimension_numbers<[1], [0], [0], [1], [0, 0, 1, 1], [], []>} : vector<128x128xbf16>, vector<128x512xbf16>, vector<128x512xf32> -> vector<128x512xf32>
    %c0_3 = arith.constant 0 : index
    %c0_4 = arith.constant 0 : index
    %10 = vector.load %arg3[%c0_3, %c0_4] : memref<1x512xf32, #tpu.memory_space<vmem>>, vector<1x512xf32>
    %11 = vector.broadcast %10 : vector<1x512xf32> to vector<128x512xf32>
    %12 = arith.addf %9, %11 : vector<128x512xf32>
    %cst_5 = arith.constant 0.000000e+00 : f32
    %13 = vector.broadcast %cst_5 : f32 to vector<128x512xf32>
    %14 = arith.maximumf %12, %13 : vector<128x512xf32>
    %15 = arith.truncf %14 : vector<128x512xf32> to vector<128x512xbf16>
    %c0_i32_6 = arith.constant 0 : i32
    %16 = tpu.memref_slice %arg17[%c0_i32_6] : memref<3x!tpu.dma_semaphore, #tpu.memory_space<semaphore_mem>> -> memref<1x!tpu.dma_semaphore, #tpu.memory_space<semaphore_mem>>
    %17 = tpu.memref_squeeze %16 : memref<1x!tpu.dma_semaphore, #tpu.memory_space<semaphore_mem>> -> memref<!tpu.dma_semaphore, #tpu.memory_space<semaphore_mem>>
    tpu.wait_dma2 semaphore(%17 : memref<!tpu.dma_semaphore, #tpu.memory_space<semaphore_mem>>) src(%arg4 : memref<512x512xi8, #tpu.memory_space<any>>) dst(%arg14 : memref<512x512xi8, #tpu.memory_space<vmem>>)
    %c0_7 = arith.constant 0 : index
    %c0_8 = arith.constant 0 : index
    %18 = vector.load %arg14[%c0_7, %c0_8] : memref<512x512xi8, #tpu.memory_space<vmem>>, vector<512x512xi8>
    %19 = arith.sitofp %18 : vector<512x512xi8> to vector<512x512xbf16>
    %cst_9 = arith.constant dense<0.000000e+00> : vector<128x512xf32>
    %20 = tpu.matmul %15, %19, %cst_9 {dimension_numbers = #tpu.dot_dimension_numbers<[1], [0], [0], [1], [0, 0, 1, 1], [], []>} : vector<128x512xbf16>, vector<512x512xbf16>, vector<128x512xf32> -> vector<128x512xf32>
    %c0_10 = arith.constant 0 : index
    %c0_11 = arith.constant 0 : index
    %21 = vector.load %arg5[%c0_10, %c0_11] : memref<1x512xf32, #tpu.memory_space<vmem>>, vector<1x512xf32>
    %22 = vector.broadcast %21 : vector<1x512xf32> to vector<128x512xf32>
    %23 = arith.mulf %20, %22 : vector<128x512xf32>
    %c0_12 = arith.constant 0 : index
    %c0_13 = arith.constant 0 : index
    %24 = vector.load %arg6[%c0_12, %c0_13] : memref<1x512xf32, #tpu.memory_space<vmem>>, vector<1x512xf32>
    %25 = vector.broadcast %24 : vector<1x512xf32> to vector<128x512xf32>
    %26 = arith.addf %23, %25 : vector<128x512xf32>
    %cst_14 = arith.constant 0.000000e+00 : f32
    %27 = vector.broadcast %cst_14 : f32 to vector<128x512xf32>
    %28 = arith.maximumf %26, %27 : vector<128x512xf32>
    %29 = arith.truncf %28 : vector<128x512xf32> to vector<128x512xbf16>
    %c1_i32_15 = arith.constant 1 : i32
    %30 = tpu.memref_slice %arg17[%c1_i32_15] : memref<3x!tpu.dma_semaphore, #tpu.memory_space<semaphore_mem>> -> memref<1x!tpu.dma_semaphore, #tpu.memory_space<semaphore_mem>>
    %31 = tpu.memref_squeeze %30 : memref<1x!tpu.dma_semaphore, #tpu.memory_space<semaphore_mem>> -> memref<!tpu.dma_semaphore, #tpu.memory_space<semaphore_mem>>
    tpu.wait_dma2 semaphore(%31 : memref<!tpu.dma_semaphore, #tpu.memory_space<semaphore_mem>>) src(%arg7 : memref<512x512xi8, #tpu.memory_space<any>>) dst(%arg15 : memref<512x512xi8, #tpu.memory_space<vmem>>)
    %c0_16 = arith.constant 0 : index
    %c0_17 = arith.constant 0 : index
    %32 = vector.load %arg15[%c0_16, %c0_17] : memref<512x512xi8, #tpu.memory_space<vmem>>, vector<512x512xi8>
    %33 = arith.sitofp %32 : vector<512x512xi8> to vector<512x512xbf16>
    %cst_18 = arith.constant dense<0.000000e+00> : vector<128x512xf32>
    %34 = tpu.matmul %29, %33, %cst_18 {dimension_numbers = #tpu.dot_dimension_numbers<[1], [0], [0], [1], [0, 0, 1, 1], [], []>} : vector<128x512xbf16>, vector<512x512xbf16>, vector<128x512xf32> -> vector<128x512xf32>
    %c0_19 = arith.constant 0 : index
    %c0_20 = arith.constant 0 : index
    %35 = vector.load %arg8[%c0_19, %c0_20] : memref<1x512xf32, #tpu.memory_space<vmem>>, vector<1x512xf32>
    %36 = vector.broadcast %35 : vector<1x512xf32> to vector<128x512xf32>
    %37 = arith.mulf %34, %36 : vector<128x512xf32>
    %c0_21 = arith.constant 0 : index
    %c0_22 = arith.constant 0 : index
    %38 = vector.load %arg9[%c0_21, %c0_22] : memref<1x512xf32, #tpu.memory_space<vmem>>, vector<1x512xf32>
    %39 = vector.broadcast %38 : vector<1x512xf32> to vector<128x512xf32>
    %40 = arith.addf %37, %39 : vector<128x512xf32>
    %cst_23 = arith.constant 0.000000e+00 : f32
    %41 = vector.broadcast %cst_23 : f32 to vector<128x512xf32>
    %42 = arith.maximumf %40, %41 : vector<128x512xf32>
    %43 = arith.truncf %42 : vector<128x512xf32> to vector<128x512xbf16>
    %c2_i32_24 = arith.constant 2 : i32
    %44 = tpu.memref_slice %arg17[%c2_i32_24] : memref<3x!tpu.dma_semaphore, #tpu.memory_space<semaphore_mem>> -> memref<1x!tpu.dma_semaphore, #tpu.memory_space<semaphore_mem>>
    %45 = tpu.memref_squeeze %44 : memref<1x!tpu.dma_semaphore, #tpu.memory_space<semaphore_mem>> -> memref<!tpu.dma_semaphore, #tpu.memory_space<semaphore_mem>>
    tpu.wait_dma2 semaphore(%45 : memref<!tpu.dma_semaphore, #tpu.memory_space<semaphore_mem>>) src(%arg10 : memref<512x128xi8, #tpu.memory_space<any>>) dst(%arg16 : memref<512x128xi8, #tpu.memory_space<vmem>>)
    %c0_25 = arith.constant 0 : index
    %c0_26 = arith.constant 0 : index
    %46 = vector.load %arg16[%c0_25, %c0_26] : memref<512x128xi8, #tpu.memory_space<vmem>>, vector<512x128xi8>
    %47 = arith.sitofp %46 : vector<512x128xi8> to vector<512x128xbf16>
    %cst_27 = arith.constant dense<0.000000e+00> : vector<128x128xf32>
    %48 = tpu.matmul %43, %47, %cst_27 {dimension_numbers = #tpu.dot_dimension_numbers<[1], [0], [0], [1], [0, 0, 1, 1], [], []>} : vector<128x512xbf16>, vector<512x128xbf16>, vector<128x128xf32> -> vector<128x128xf32>
    %c0_28 = arith.constant 0 : index
    %c0_29 = arith.constant 0 : index
    %49 = vector.load %arg11[%c0_28, %c0_29] : memref<1x128xf32, #tpu.memory_space<vmem>>, vector<1x128xf32>
    %50 = vector.broadcast %49 : vector<1x128xf32> to vector<128x128xf32>
    %51 = arith.mulf %48, %50 : vector<128x128xf32>
    %c0_30 = arith.constant 0 : index
    %c0_31 = arith.constant 0 : index
    %52 = vector.load %arg12[%c0_30, %c0_31] : memref<1x128xf32, #tpu.memory_space<vmem>>, vector<1x128xf32>
    %53 = vector.broadcast %52 : vector<1x128xf32> to vector<128x128xf32>
    %54 = arith.addf %51, %53 : vector<128x128xf32>
    %cst_32 = arith.constant 0.000000e+00 : f32
    %55 = vector.broadcast %cst_32 : f32 to vector<128x128xf32>
    %56 = arith.maximumf %54, %55 : vector<128x128xf32>
    %c0_33 = arith.constant 0 : index
    %c0_34 = arith.constant 0 : index
    %57 = vector.load %arg13[%c0_33, %c0_34] : memref<128x128xf32, #tpu.memory_space<vmem>>, vector<128x128xf32>
    tpu.vector_store %arg13[%c0_33, %c0_34], %56 {strides = array<i32>} : memref<128x128xf32, #tpu.memory_space<vmem>>, vector<128x128xf32>,
    return
  }
  func.func @transform_0(%arg0: i32) -> (i32, i32) {
    %c0_i32 = arith.constant 0 : i32
    %c0_i32_0 = arith.constant 0 : i32
    return %arg0, %c0_i32 : i32, i32
  }
  func.func @transform_1(%arg0: i32) -> (i32, i32) {
    %c0_i32 = arith.constant 0 : i32
    %c0_i32_0 = arith.constant 0 : i32
    %c0_i32_1 = arith.constant 0 : i32
    return %c0_i32, %c0_i32_0 : i32, i32
  }
  func.func @transform_2(%arg0: i32) -> (i32, i32) {
    %c0_i32 = arith.constant 0 : i32
    %c0_i32_0 = arith.constant 0 : i32
    %c0_i32_1 = arith.constant 0 : i32
    return %c0_i32, %c0_i32_0 : i32, i32
  }
  func.func @transform_4(%arg0: i32) -> (i32, i32) {
    %c0_i32 = arith.constant 0 : i32
    %c0_i32_0 = arith.constant 0 : i32
    %c0_i32_1 = arith.constant 0 : i32
    return %c0_i32, %c0_i32_0 : i32, i32
  }
  func.func @transform_5(%arg0: i32) -> (i32, i32) {
    %c0_i32 = arith.constant 0 : i32
    %c0_i32_0 = arith.constant 0 : i32
    %c0_i32_1 = arith.constant 0 : i32
    return %c0_i32, %c0_i32_0 : i32, i32
  }
  func.func @transform_7(%arg0: i32) -> (i32, i32) {
    %c0_i32 = arith.constant 0 : i32
    %c0_i32_0 = arith.constant 0 : i32
    %c0_i32_1 = arith.constant 0 : i32
    return %c0_i32, %c0_i32_0 : i32, i32
  }
  func.func @transform_8(%arg0: i32) -> (i32, i32) {
    %c0_i32 = arith.constant 0 : i32
    %c0_i32_0 = arith.constant 0 : i32
    %c0_i32_1 = arith.constant 0 : i32
    return %c0_i32, %c0_i32_0 : i32, i32
  }
  func.func @transform_10(%arg0: i32) -> (i32, i32) {
    %c0_i32 = arith.constant 0 : i32
    %c0_i32_0 = arith.constant 0 : i32
    %c0_i32_1 = arith.constant 0 : i32
    return %c0_i32, %c0_i32_0 : i32, i32
  }
  func.func @transform_11(%arg0: i32) -> (i32, i32) {
    %c0_i32 = arith.constant 0 : i32
    %c0_i32_0 = arith.constant 0 : i32
    %c0_i32_1 = arith.constant 0 : i32
    return %c0_i32, %c0_i32_0 : i32, i32
  }
  func.func @transform_12(%arg0: i32) -> (i32, i32) {
    %c0_i32 = arith.constant 0 : i32
    %c0_i32_0 = arith.constant 0 : i32
    return %arg0, %c0_i32 : i32, i32
  }
}

</mosaic_0001>

<llo_original>
// kernel: tpu_custom_call.1
$region0: #{tpu_custom_call.1}
  #allocation0 [shape = 'u32[]', space=smem, size = 0x4, offset = 0x4, fixed_abs, tag = 'smem constant byte address 0x4 - core index']
  #allocation1 [shape = 'u32[144,128]{1,0:T(1,128)}', space=vmem, size = 0x12000, scoped, tag = 'internal scratch']
  #allocation2 [shape = 's8[512,512]{1,0:T(32,128)(4,1)}', space=vmem, size = 0x40000, scoped, tag = 'scratch operand']
  #allocation3 [shape = 's8[512,512]{1,0:T(32,128)(4,1)}', space=vmem, size = 0x40000, scoped, tag = 'scratch operand']
  #allocation4 [shape = 's8[512,128]{1,0:T(32,128)(4,1)}', space=vmem, size = 0x10000, scoped, tag = 'scratch operand']
  #allocation5 [shape = 's32[3]{0}', space=sflag, size = 0xc, scoped, tag = 'scratch operand']
  #allocation15 [shape = 's32[]', space=sflag, size = 0x4, offset = 0, fixed_abs, tag = 'sflag constant byte address 0x0 - dummy sync flag']
  #allocation16 [shape = 's32[]', space=sflag, size = 0x4, offset = 0, fixed_abs, tag = 'sflag constant byte address 0x0 - dummy sync flag']
  #allocation17 [shape = 'u32[]', space=smem, size = 0x4, offset = 0x44, fixed_abs, tag = 'smem constant byte address 0x44 - assertion arg 0']
  #allocation18 [shape = 'u32[]', space=smem, size = 0x4, offset = 0x48, fixed_abs, tag = 'smem constant byte address 0x48 - assertion arg 1']
  #allocation19 [shape = 's32[]', space=sflag, size = 0x4, offset = 0, fixed_abs, tag = 'sflag constant byte address 0x0 - dummy sync flag']
  #allocation20 [shape = 's32[]', space=sflag, size = 0x4, offset = 0, fixed_abs, tag = 'sflag constant byte address 0x0 - dummy sync flag']
  #allocation21 [shape = 's32[]', space=sflag, size = 0x4, offset = 0, fixed_abs, tag = 'sflag constant byte address 0x0 - dummy sync flag']
  #allocation22 [shape = 's32[]', space=sflag, size = 0x4, offset = 0, fixed_abs, tag = 'sflag constant byte address 0x0 - dummy sync flag']
  %s0 = inlined_call_operand.hbm [shape: f32[128,128], index: 0, kind: input, shape index: {}]
  %s1 = inlined_call_operand.hbm [shape: bf16[128,512], index: 1, kind: input, shape index: {}]
  %s2 = inlined_call_operand.hbm [shape: f32[1,512], index: 2, kind: input, shape index: {}]
  %s3 = inlined_call_operand.hbm [shape: s8[512,512], index: 3, kind: input, shape index: {}]
  %s4 = inlined_call_operand.vmem [shape: f32[1,512], index: 4, kind: input, shape index: {}]
  %s5 = inlined_call_operand.vmem [shape: f32[1,512], index: 5, kind: input, shape index: {}]
  %s6 = inlined_call_operand.hbm [shape: s8[512,512], index: 6, kind: input, shape index: {}]
  %s7 = inlined_call_operand.vmem [shape: f32[1,512], index: 7, kind: input, shape index: {}]
  %s8 = inlined_call_operand.hbm [shape: f32[1,512], index: 8, kind: input, shape index: {}]
  %s9 = inlined_call_operand.hbm [shape: s8[512,128], index: 9, kind: input, shape index: {}]
  %s10 = inlined_call_operand.vmem [shape: f32[1,128], index: 10, kind: input, shape index: {}]
  %s11 = inlined_call_operand.vmem [shape: f32[1,128], index: 11, kind: input, shape index: {}]
  %s12 = inlined_call_operand.hbm [shape: f32[128,128], index: 12, kind: output, shape index: {}]
  %s13 = sld [smem:[#allocation0]]
  $region74: #{tpu_custom_call.1} parent=0
    _
  %s15 = ssub.s32 1, %s13
  %s16 = scalar_select 0, %s15, %s13
  $region1: #{tpu_custom_call.1} parent=0
    #allocation6 [shape = 'u8[65536]{0}', space=vmem, size = 0x10000, scoped, tag = 'input window, operand 0, single buffered']
    #allocation7 [shape = 's32[1]{0}', space=sflag, size = 0x4, scoped, tag = 'scoped memory for tpu_custom_call.1']
    #allocation8 [shape = 's32[1]{0}', space=sflag, size = 0x4, scoped, tag = 'scoped memory for tpu_custom_call.1']
    #allocation9 [shape = 'u8[131072]{0}', space=vmem, size = 0x20000, scoped, tag = 'input window, operand 1, single buffered']
    #allocation10 [shape = 's32[1]{0}', space=sflag, size = 0x4, scoped, tag = 'scoped memory for tpu_custom_call.1']
    #allocation11 [shape = 'u8[2048]{0}', space=vmem, size = 0x800, scoped, tag = 'input window, operand 2, single buffered']
    #allocation12 [shape = 'u8[2048]{0}', space=vmem, size = 0x800, scoped, tag = 'input window, operand 8, single buffered']
    #allocation13 [shape = 's32[1]{0}', space=sflag, size = 0x4, scoped, tag = 'scoped memory for tpu_custom_call.1']
    #allocation14 [shape = 'u8[65536]{0}', space=vmem, size = 0x10000, scoped, tag = 'output window, operand 0, single buffered']
    %17 = vsyncpa [#allocation7], 0
    %18 = vsyncpa [#allocation10], 0
    %19 = vsyncpa [#allocation13], 0
    %20 = vsyncpa [#allocation8], 0
    // Predicated region
    $region2: #{tpu_custom_call.1} parent=1 // pred_check
      _
    $region3: #{tpu_custom_call.1} parent=1 // pred_check_branch
      %22 = sbr.rel (0) target = $region5
    $region4: #{tpu_custom_call.1} parent=1 // pred_region
      %s24 = ssub.s32 2048, 2048
      %25 = vsyncadd [#allocation7], %s24
      %s26 = sshll.u32 [#allocation6], 4
      %s27 = int_to_ptr.vmem [resolvable:$true] %s26
      %32 = dma.hbm_to_vmem [thread:$0]  %s0, 2048, %s27, [#allocation7], 128, 128, 8
    $region5: #{tpu_custom_call.1} parent=1 // pred_fallthru
      _
    // Predicated region
    $region6: #{tpu_custom_call.1} parent=1 // pred_check
      _
    $region7: #{tpu_custom_call.1} parent=1 // pred_check_branch
      %34 = sbr.rel (0) target = $region9
    $region8: #{tpu_custom_call.1} parent=1 // pred_region
      %s36 = ssub.s32 4096, 4096
      %37 = vsyncadd [#allocation10], %s36
      %s38 = sshll.u32 [#allocation9], 4
      %s39 = int_to_ptr.vmem [resolvable:$true] %s38
      %44 = dma.hbm_to_vmem [thread:$0]  %s1, 4096, %s39, [#allocation10], 256, 256, 16
    $region9: #{tpu_custom_call.1} parent=1 // pred_fallthru
      _
    // Predicated region
    $region10: #{tpu_custom_call.1} parent=1 // pred_check
      _
    $region11: #{tpu_custom_call.1} parent=1 // pred_check_branch
      %46 = sbr.rel (0) target = $region13
    $region12: #{tpu_custom_call.1} parent=1 // pred_region
      %s48 = ssub.s32 64, 64
      %49 = vsyncadd [#allocation10], %s48
      %s51 = sshll.u32 [#allocation11], 4
      %s52 = int_to_ptr.vmem [resolvable:$true] %s51
      %54 = dma.hbm_to_vmem [thread:$0]  %s2, 64, %s52, [#allocation10]
    $region13: #{tpu_custom_call.1} parent=1 // pred_fallthru
      _
    // Predicated region
    $region14: #{tpu_custom_call.1} parent=1 // pred_check
      _
    $region15: #{tpu_custom_call.1} parent=1 // pred_check_branch
      %56 = sbr.rel (0) target = $region17
    $region16: #{tpu_custom_call.1} parent=1 // pred_region
      _
    $region17: #{tpu_custom_call.1} parent=1 // pred_fallthru
      _
    // Predicated region
    $region18: #{tpu_custom_call.1} parent=1 // pred_check
      _
    $region19: #{tpu_custom_call.1} parent=1 // pred_check_branch
      %58 = sbr.rel (0) target = $region21
    $region20: #{tpu_custom_call.1} parent=1 // pred_region
      _
    $region21: #{tpu_custom_call.1} parent=1 // pred_fallthru
      _
    // Predicated region
    $region22: #{tpu_custom_call.1} parent=1 // pred_check
      _
    $region23: #{tpu_custom_call.1} parent=1 // pred_check_branch
      %60 = sbr.rel (0) target = $region25
    $region24: #{tpu_custom_call.1} parent=1 // pred_region
      _
    $region25: #{tpu_custom_call.1} parent=1 // pred_fallthru
      _
    // Predicated region
    $region26: #{tpu_custom_call.1} parent=1 // pred_check
      _
    $region27: #{tpu_custom_call.1} parent=1 // pred_check_branch
      %62 = sbr.rel (0) target = $region29
    $region28: #{tpu_custom_call.1} parent=1 // pred_region
      %s64 = ssub.s32 64, 64
      %65 = vsyncadd [#allocation13], %s64
      %s67 = sshll.u32 [#allocation12], 4
      %s68 = int_to_ptr.vmem [resolvable:$true] %s67
      %70 = dma.hbm_to_vmem [thread:$0]  %s8, 64, %s68, [#allocation13]
    $region29: #{tpu_custom_call.1} parent=1 // pred_fallthru
      _
    // Predicated region
    $region30: #{tpu_custom_call.1} parent=1 // pred_check
      _
    $region31: #{tpu_custom_call.1} parent=1 // pred_check_branch
      %72 = sbr.rel (0) target = $region33
    $region32: #{tpu_custom_call.1} parent=1 // pred_region
      _
    $region33: #{tpu_custom_call.1} parent=1 // pred_fallthru
      _
    // Predicated region
    $region34: #{tpu_custom_call.1} parent=1 // pred_check
      _
    $region35: #{tpu_custom_call.1} parent=1 // pred_check_branch
      %74 = sbr.rel (0) target = $region37
    $region36: #{tpu_custom_call.1} parent=1 // pred_region
      _
    $region37: #{tpu_custom_call.1} parent=1 // pred_fallthru
      _
    // Predicated region
    $region38: #{tpu_custom_call.1} parent=1 // pred_check
      _
    $region39: #{tpu_custom_call.1} parent=1 // pred_check_branch
      %76 = sbr.rel (0) target = $region41
    $region40: #{tpu_custom_call.1} parent=1 // pred_region
      %77 = dma.done [#allocation7], 2048
    $region41: #{tpu_custom_call.1} parent=1 // pred_fallthru
      _
    // Predicated region
    $region42: #{tpu_custom_call.1} parent=1 // pred_check
      _
    $region43: #{tpu_custom_call.1} parent=1 // pred_check_branch
      %79 = sbr.rel (0) target = $region45
    $region44: #{tpu_custom_call.1} parent=1 // pred_region
      %80 = dma.done [#allocation10], 4096
    $region45: #{tpu_custom_call.1} parent=1 // pred_fallthru
      _
    // Predicated region
    $region46: #{tpu_custom_call.1} parent=1 // pred_check
      _
    $region47: #{tpu_custom_call.1} parent=1 // pred_check_branch
      %82 = sbr.rel (0) target = $region49
    $region48: #{tpu_custom_call.1} parent=1 // pred_region
      %83 = dma.done [#allocation10], 64
    $region49: #{tpu_custom_call.1} parent=1 // pred_fallthru
      _
    // Predicated region
    $region50: #{tpu_custom_call.1} parent=1 // pred_check
      _
    $region51: #{tpu_custom_call.1} parent=1 // pred_check_branch
      %85 = sbr.rel (0) target = $region53
    $region52: #{tpu_custom_call.1} parent=1 // pred_region
      %86 = dma.done [#allocation13], 64
    $region53: #{tpu_custom_call.1} parent=1 // pred_fallthru
      _
    // Predicated region
    $region54: #{tpu_custom_call.1} parent=1 // pred_check
      _
    $region55: #{tpu_custom_call.1} parent=1 // pred_check_branch
      %89 = sbr.rel target = $region57
    $region56: #{tpu_custom_call.1} parent=1 // pred_region
      %90 = sst [smem:[#allocation17]] [#allocation16]
      %91 = sst [smem:[#allocation18]] [#allocation15]
    $region57: #{tpu_custom_call.1} parent=1 // pred_fallthru
      _
    %93 = shalt.err (0)
    %s95 = sshll.u32 [#allocation2], 4
    %s96 = int_to_ptr.vmem [resolvable:$true] %s95
    %98 = dma.hbm_to_vmem [thread:$0]  %s3, 8192, %s96, [#allocation5]
    %s99 = scalar_lea.sflag [#allocation5], 1
    // Predicated region
    $region58: #{tpu_custom_call.1} parent=1 // pred_check
      _
    $region59: #{tpu_custom_call.1} parent=1 // pred_check_branch
      %101 = sbr.rel target = $region61
    $region60: #{tpu_custom_call.1} parent=1 // pred_region
      %102 = sst [smem:[#allocation17]] [#allocation20]
      %103 = sst [smem:[#allocation18]] [#allocation19]
    $region61: #{tpu_custom_call.1} parent=1 // pred_fallthru
      _
    %105 = shalt.err (0)
    %s107 = sshll.u32 [#allocation3], 4
    %s108 = int_to_ptr.vmem [resolvable:$true] %s107
    %110 = dma.hbm_to_vmem [thread:$0]  %s6, 8192, %s108, %s99
    %s111 = scalar_lea.sflag [#allocation5], 2
    // Predicated region
    $region62: #{tpu_custom_call.1} parent=1 // pred_check
      _
    $region63: #{tpu_custom_call.1} parent=1 // pred_check_branch
      %113 = sbr.rel target = $region65
    $region64: #{tpu_custom_call.1} parent=1 // pred_region
      %114 = sst [smem:[#allocation17]] [#allocation22]
      %115 = sst [smem:[#allocation18]] [#allocation21]
    $region65: #{tpu_custom_call.1} parent=1 // pred_fallthru
      _
    %117 = shalt.err (0)
    %s119 = sshll.u32 [#allocation4], 4
    %s120 = int_to_ptr.vmem [resolvable:$true] %s119
    %122 = dma.hbm_to_vmem [thread:$0]  %s9, 2048, %s120, %s111
    %v123 = vld [vmem:[#allocation6] sm:$0xff]
    %v124 = vld [vmem:[#allocation6 + $0x8] sm:$0xff]
    %v125 = vld [vmem:[#allocation6 + $0x10] sm:$0xff]
    %v126 = vld [vmem:[#allocation6 + $0x18] sm:$0xff]
    %v127 = vld [vmem:[#allocation6 + $0x20] sm:$0xff]
    %v128 = vld [vmem:[#allocation6 + $0x28] sm:$0xff]
    %v129 = vld [vmem:[#allocation6 + $0x30] sm:$0xff]
    %v130 = vld [vmem:[#allocation6 + $0x38] sm:$0xff]
    %v131 = vld [vmem:[#allocation6 + $0x40] sm:$0xff]
    %v132 = vld [vmem:[#allocation6 + $0x48] sm:$0xff]
    %v133 = vld [vmem:[#allocation6 + $0x50] sm:$0xff]
    %v134 = vld [vmem:[#allocation6 + $0x58] sm:$0xff]
    %v135 = vld [vmem:[#allocation6 + $0x60] sm:$0xff]
    %v136 = vld [vmem:[#allocation6 + $0x68] sm:$0xff]
    %v137 = vld [vmem:[#allocation6 + $0x70] sm:$0xff]
    %v138 = vld [vmem:[#allocation6 + $0x78] sm:$0xff]
    %v139 = vpack.c.bf16 %v124, %v123
    %v140 = vpack.c.bf16 %v126, %v125
    %v141 = vpack.c.bf16 %v128, %v127
    %v142 = vpack.c.bf16 %v130, %v129
    %v143 = vpack.c.bf16 %v132, %v131
    %v144 = vpack.c.bf16 %v134, %v133
    %v145 = vpack.c.bf16 %v136, %v135
    %v146 = vpack.c.bf16 %v138, %v137
    %v147 = vld [vmem:[#allocation9] sm:$0xff]
    %v148 = vld [vmem:[#allocation9 + $0x8] sm:$0xff]
    %v149 = vld [vmem:[#allocation9 + $0x10] sm:$0xff]
    %v150 = vld [vmem:[#allocation9 + $0x18] sm:$0xff]
    %v151 = vld [vmem:[#allocation9 + $0x20] sm:$0xff]
    %v152 = vld [vmem:[#allocation9 + $0x28] sm:$0xff]
    %v153 = vld [vmem:[#allocation9 + $0x30] sm:$0xff]
    %v154 = vld [vmem:[#allocation9 + $0x38] sm:$0xff]
    %v155 = vld [vmem:[#allocation9 + $0x40] sm:$0xff]
    %v156 = vld [vmem:[#allocation9 + $0x48] sm:$0xff]
    %v157 = vld [vmem:[#allocation9 + $0x50] sm:$0xff]
    %v158 = vld [vmem:[#allocation9 + $0x58] sm:$0xff]
    %v159 = vld [vmem:[#allocation9 + $0x60] sm:$0xff]
    %v160 = vld [vmem:[#allocation9 + $0x68] sm:$0xff]
    %v161 = vld [vmem:[#allocation9 + $0x70] sm:$0xff]
    %v162 = vld [vmem:[#allocation9 + $0x78] sm:$0xff]
    %v163 = vld [vmem:[#allocation9 + $0x80] sm:$0xff]
    %v164 = vld [vmem:[#allocation9 + $0x88] sm:$0xff]
    %v165 = vld [vmem:[#allocation9 + $0x90] sm:$0xff]
    %v166 = vld [vmem:[#allocation9 + $0x98] sm:$0xff]
    %v167 = vld [vmem:[#allocation9 + $0xa0] sm:$0xff]
    %v168 = vld [vmem:[#allocation9 + $0xa8] sm:$0xff]
    %v169 = vld [vmem:[#allocation9 + $0xb0] sm:$0xff]
    %v170 = vld [vmem:[#allocation9 + $0xb8] sm:$0xff]
    %v171 = vld [vmem:[#allocation9 + $0xc0] sm:$0xff]
    %v172 = vld [vmem:[#allocation9 + $0xc8] sm:$0xff]
    %v173 = vld [vmem:[#allocation9 + $0xd0] sm:$0xff]
    %v174 = vld [vmem:[#allocation9 + $0xd8] sm:$0xff]
    %v175 = vld [vmem:[#allocation9 + $0xe0] sm:$0xff]
    %v176 = vld [vmem:[#allocation9 + $0xe8] sm:$0xff]
    %v177 = vld [vmem:[#allocation9 + $0xf0] sm:$0xff]
    %v178 = vld [vmem:[#allocation9 + $0xf8] sm:$0xff]
    %v179 = vld [vmem:[#allocation11] sm:$0xf]
    %v181 = vlaneseq
    %v182 = vshrl.u32 %v181, 7
    %v183 = vsub.s32 0, %v182
    %v184 = vrot.slane %v179, %v183
    %v185 = vlaneseq
    %v186 = vshrl.u32 %v185, 7
    %v187 = vsub.s32 1, %v186
    %v188 = vrot.slane %v179, %v187
    %v189 = vlaneseq
    %v190 = vshrl.u32 %v189, 7
    %v191 = vsub.s32 2, %v190
    %v192 = vrot.slane %v179, %v191
    %v193 = vlaneseq
    %v194 = vshrl.u32 %v193, 7
    %v195 = vsub.s32 3, %v194
    %v196 = vrot.slane %v179, %v195
    %v233 = vunpack.c.l.b16 %v147
    %v234 = vunpack.c.h.b16 %v147
    %v235 = vunpack.c.l.b16 %v148
    %v236 = vunpack.c.h.b16 %v148
    %v237 = vunpack.c.l.b16 %v149
    %v238 = vunpack.c.h.b16 %v149
    %v239 = vunpack.c.l.b16 %v150
    %v240 = vunpack.c.h.b16 %v150
    %v241 = vunpack.c.l.b16 %v151
    %v242 = vunpack.c.h.b16 %v151
    %v243 = vunpack.c.l.b16 %v152
    %v244 = vunpack.c.h.b16 %v152
    %v245 = vunpack.c.l.b16 %v153
    %v246 = vunpack.c.h.b16 %v153
    %v247 = vunpack.c.l.b16 %v154
    %v248 = vunpack.c.h.b16 %v154
    %v249 = vunpack.c.l.b16 %v155
    %v250 = vunpack.c.h.b16 %v155
    %v251 = vunpack.c.l.b16 %v156
    %v252 = vunpack.c.h.b16 %v156
    %v253 = vunpack.c.l.b16 %v157
    %v254 = vunpack.c.h.b16 %v157
    %v255 = vunpack.c.l.b16 %v158
    %v256 = vunpack.c.h.b16 %v158
    %v257 = vunpack.c.l.b16 %v159
    %v258 = vunpack.c.h.b16 %v159
    %v259 = vunpack.c.l.b16 %v160
    %v260 = vunpack.c.h.b16 %v160
    %v261 = vunpack.c.l.b16 %v161
    %v262 = vunpack.c.h.b16 %v161
    %v263 = vunpack.c.l.b16 %v162
    %v264 = vunpack.c.h.b16 %v162
    %v265 = vunpack.c.l.b16 %v163
    %v266 = vunpack.c.h.b16 %v163
    %v267 = vunpack.c.l.b16 %v164
    %v268 = vunpack.c.h.b16 %v164
    %v269 = vunpack.c.l.b16 %v165
    %v270 = vunpack.c.h.b16 %v165
    %v271 = vunpack.c.l.b16 %v166
    %v272 = vunpack.c.h.b16 %v166
    %v273 = vunpack.c.l.b16 %v167
    %v274 = vunpack.c.h.b16 %v167
    %v275 = vunpack.c.l.b16 %v168
    %v276 = vunpack.c.h.b16 %v168
    %v277 = vunpack.c.l.b16 %v169
    %v278 = vunpack.c.h.b16 %v169
    %v279 = vunpack.c.l.b16 %v170
    %v280 = vunpack.c.h.b16 %v170
    %v281 = vunpack.c.l.b16 %v171
    %v282 = vunpack.c.h.b16 %v171
    %v283 = vunpack.c.l.b16 %v172
    %v284 = vunpack.c.h.b16 %v172
    %v285 = vunpack.c.l.b16 %v173
    %v286 = vunpack.c.h.b16 %v173
    %v287 = vunpack.c.l.b16 %v174
    %v288 = vunpack.c.h.b16 %v174
    %v289 = vunpack.c.l.b16 %v175
    %v290 = vunpack.c.h.b16 %v175
    %v291 = vunpack.c.l.b16 %v176
    %v292 = vunpack.c.h.b16 %v176
    %v293 = vunpack.c.l.b16 %v177
    %v294 = vunpack.c.h.b16 %v177
    %v295 = vunpack.c.l.b16 %v178
    %v296 = vunpack.c.h.b16 %v178
    %v297 = vpack.c.b16 %v237, %v233
    %v298 = vpack.c.b16 %v238, %v234
    %v299 = vpack.c.b16 %v239, %v235
    %v300 = vpack.c.b16 %v240, %v236
    %v301 = vpack.c.b16 %v245, %v241
    %v302 = vpack.c.b16 %v246, %v242
    %v303 = vpack.c.b16 %v247, %v243
    %v304 = vpack.c.b16 %v248, %v244
    %v305 = vpack.c.b16 %v253, %v249
    %v306 = vpack.c.b16 %v254, %v250
    %v307 = vpack.c.b16 %v255, %v251
    %v308 = vpack.c.b16 %v256, %v252
    %v309 = vpack.c.b16 %v261, %v257
    %v310 = vpack.c.b16 %v262, %v258
    %v311 = vpack.c.b16 %v263, %v259
    %v312 = vpack.c.b16 %v264, %v260
    %v313 = vpack.c.b16 %v269, %v265
    %v314 = vpack.c.b16 %v270, %v266
    %v315 = vpack.c.b16 %v271, %v267
    %v316 = vpack.c.b16 %v272, %v268
    %v317 = vpack.c.b16 %v277, %v273
    %v318 = vpack.c.b16 %v278, %v274
    %v319 = vpack.c.b16 %v279, %v275
    %v320 = vpack.c.b16 %v280, %v276
    %v321 = vpack.c.b16 %v285, %v281
    %v322 = vpack.c.b16 %v286, %v282
    %v323 = vpack.c.b16 %v287, %v283
    %v324 = vpack.c.b16 %v288, %v284
    %v325 = vpack.c.b16 %v293, %v289
    %v326 = vpack.c.b16 %v294, %v290
    %v327 = vpack.c.b16 %v295, %v291
    %v328 = vpack.c.b16 %v296, %v292
    %361 = vmatprep.subr.bf16.mxu0 %v326
    %362 = vmatpush1.bf16.msra.mxu0 %v325
    %363 = vmatprep.subr.bf16.mxu0 %v322
    %364 = vmatpush1.bf16.msra.mxu0 %v321
    %365 = vmatprep.subr.bf16.mxu0 %v318
    %366 = vmatpush1.bf16.msra.mxu0 %v317
    %367 = vmatprep.subr.bf16.mxu0 %v314
    %368 = vmatpush1.bf16.msra.mxu0 %v313
    %369 = vmatprep.subr.bf16.mxu0 %v310
    %370 = vmatpush1.bf16.msra.mxu0 %v309
    %371 = vmatprep.subr.bf16.mxu0 %v306
    %372 = vmatpush1.bf16.msra.mxu0 %v305
    %373 = vmatprep.subr.bf16.mxu0 %v302
    %374 = vmatpush1.bf16.msra.mxu0 %v301
    %375 = vmatprep.subr.bf16.mxu0 %v298
    %376 = vmatpush1.bf16.msra.mxu0 %v297
    %377 = vmatprep.subr.bf16.mxu0 0
    %378 = vmatpush2.bf16.msra.mxu0 0
    %379 = vmatprep.subr.bf16.mxu0 0
    %380 = vmatpush2.bf16.msra.mxu0 0
    %381 = vmatprep.subr.bf16.mxu0 0
    %382 = vmatpush2.bf16.msra.mxu0 0
    %383 = vmatprep.subr.bf16.mxu0 0
    %384 = vmatpush2.bf16.msra.mxu0 0
    %385 = vmatprep.subr.bf16.mxu0 0
    %386 = vmatpush2.bf16.msra.mxu0 0
    %387 = vmatprep.subr.bf16.mxu0 0
    %388 = vmatpush2.bf16.msra.mxu0 0
    %389 = vmatprep.subr.bf16.mxu0 0
    %390 = vmatpush2.bf16.msra.mxu0 0
    %391 = vmatprep.subr.bf16.mxu0 0
    %392 = vmatpush2.bf16.msra.mxu0 0
    %393 = vmatprep.mubr.bf16.mxu0 0
    %394 = vmatmul.mubr.bf16.gmra.mxu0 %v139
    %v395 = vpop.f32.mrf.mxu0
    %v396 = vadd.f32 %v184, %v395
    %v397 = vpop.f32.mrf.mxu0
    %v398 = vadd.f32 %v188, %v397
    %v399 = vpop.f32.mrf.mxu0
    %v400 = vadd.f32 %v184, %v399
    %v401 = vpop.f32.mrf.mxu0
    %v402 = vadd.f32 %v188, %v401
    %403 = vmatprep.mubr.bf16.mxu0 0
    %404 = vmatmul.mubr.bf16.gmra.mxu0 %v140
    %v405 = vpop.f32.mrf.mxu0
    %v406 = vadd.f32 %v184, %v405
    %v407 = vpop.f32.mrf.mxu0
    %v408 = vadd.f32 %v188, %v407
    %v409 = vpop.f32.mrf.mxu0
    %v410 = vadd.f32 %v184, %v409
    %v411 = vpop.f32.mrf.mxu0
    %v412 = vadd.f32 %v188, %v411
    %413 = vmatprep.mubr.bf16.mxu0 0
    %414 = vmatmul.mubr.bf16.gmra.mxu0 %v141
    %v415 = vpop.f32.mrf.mxu0
    %v416 = vadd.f32 %v184, %v415
    %v417 = vpop.f32.mrf.mxu0
    %v418 = vadd.f32 %v188, %v417
    %v419 = vpop.f32.mrf.mxu0
    %v420 = vadd.f32 %v184, %v419
    %v421 = vpop.f32.mrf.mxu0
    %v422 = vadd.f32 %v188, %v421
    %423 = vmatprep.mubr.bf16.mxu0 0
    %424 = vmatmul.mubr.bf16.gmra.mxu0 %v142
    %v425 = vpop.f32.mrf.mxu0
    %v426 = vadd.f32 %v184, %v425
    %v427 = vpop.f32.mrf.mxu0
    %v428 = vadd.f32 %v188, %v427
    %v429 = vpop.f32.mrf.mxu0
    %v430 = vadd.f32 %v184, %v429
    %v431 = vpop.f32.mrf.mxu0
    %v432 = vadd.f32 %v188, %v431
    %433 = vmatprep.mubr.bf16.mxu0 0
    %434 = vmatmul.mubr.bf16.gmra.mxu0 %v143
    %v435 = vpop.f32.mrf.mxu0
    %v436 = vadd.f32 %v184, %v435
    %v437 = vpop.f32.mrf.mxu0
    %v438 = vadd.f32 %v188, %v437
    %v439 = vpop.f32.mrf.mxu0
    %v440 = vadd.f32 %v184, %v439
    %v441 = vpop.f32.mrf.mxu0
    %v442 = vadd.f32 %v188, %v441
    %443 = vmatprep.mubr.bf16.mxu0 0
    %444 = vmatmul.mubr.bf16.gmra.mxu0 %v144
    %v445 = vpop.f32.mrf.mxu0
    %v446 = vadd.f32 %v184, %v445
    %v447 = vpop.f32.mrf.mxu0
    %v448 = vadd.f32 %v188, %v447
    %v449 = vpop.f32.mrf.mxu0
    %v450 = vadd.f32 %v184, %v449
    %v451 = vpop.f32.mrf.mxu0
    %v452 = vadd.f32 %v188, %v451
    %453 = vmatprep.mubr.bf16.mxu0 0
    %454 = vmatmul.mubr.bf16.gmra.mxu0 %v145
    %v455 = vpop.f32.mrf.mxu0
    %v456 = vadd.f32 %v184, %v455
    %v457 = vpop.f32.mrf.mxu0
    %v458 = vadd.f32 %v188, %v457
    %v459 = vpop.f32.mrf.mxu0
    %v460 = vadd.f32 %v184, %v459
    %v461 = vpop.f32.mrf.mxu0
    %v462 = vadd.f32 %v188, %v461
    %463 = vmatprep.mubr.bf16.mxu0 0
    %464 = vmatmul.mubr.bf16.gmra.mxu0 %v146
    %v465 = vpop.f32.mrf.mxu0
    %v466 = vadd.f32 %v184, %v465
    %v467 = vpop.f32.mrf.mxu0
    %v468 = vadd.f32 %v188, %v467
    %v469 = vpop.f32.mrf.mxu0
    %v470 = vadd.f32 %v184, %v469
    %v471 = vpop.f32.mrf.mxu0
    %v472 = vadd.f32 %v188, %v471
    %473 = vdwg.mxu0
    %474 = vmatprep.subr.bf16.mxu0 %v328
    %475 = vmatpush1.bf16.msra.mxu0 %v327
    %476 = vmatprep.subr.bf16.mxu0 %v324
    %477 = vmatpush1.bf16.msra.mxu0 %v323
    %478 = vmatprep.subr.bf16.mxu0 %v320
    %479 = vmatpush1.bf16.msra.mxu0 %v319
    %480 = vmatprep.subr.bf16.mxu0 %v316
    %481 = vmatpush1.bf16.msra.mxu0 %v315
    %482 = vmatprep.subr.bf16.mxu0 %v312
    %483 = vmatpush1.bf16.msra.mxu0 %v311
    %484 = vmatprep.subr.bf16.mxu0 %v308
    %485 = vmatpush1.bf16.msra.mxu0 %v307
    %486 = vmatprep.subr.bf16.mxu0 %v304
    %487 = vmatpush1.bf16.msra.mxu0 %v303
    %488 = vmatprep.subr.bf16.mxu0 %v300
    %489 = vmatpush1.bf16.msra.mxu0 %v299
    %490 = vmatprep.subr.bf16.mxu0 0
    %491 = vmatpush2.bf16.msra.mxu0 0
    %492 = vmatprep.subr.bf16.mxu0 0
    %493 = vmatpush2.bf16.msra.mxu0 0
    %494 = vmatprep.subr.bf16.mxu0 0
    %495 = vmatpush2.bf16.msra.mxu0 0
    %496 = vmatprep.subr.bf16.mxu0 0
    %497 = vmatpush2.bf16.msra.mxu0 0
    %498 = vmatprep.subr.bf16.mxu0 0
    %499 = vmatpush2.bf16.msra.mxu0 0
    %500 = vmatprep.subr.bf16.mxu0 0
    %501 = vmatpush2.bf16.msra.mxu0 0
    %502 = vmatprep.subr.bf16.mxu0 0
    %503 = vmatpush2.bf16.msra.mxu0 0
    %504 = vmatprep.subr.bf16.mxu0 0
    %505 = vmatpush2.bf16.msra.mxu0 0
    %506 = vmatprep.mubr.bf16.mxu0 0
    %507 = vmatmul.mubr.bf16.gmra.mxu0 %v139
    %v508 = vpop.f32.mrf.mxu0
    %v509 = vadd.f32 %v192, %v508
    %v510 = vpop.f32.mrf.mxu0
    %v511 = vadd.f32 %v196, %v510
    %v512 = vpop.f32.mrf.mxu0
    %v513 = vadd.f32 %v192, %v512
    %v514 = vpop.f32.mrf.mxu0
    %v515 = vadd.f32 %v196, %v514
    %516 = vmatprep.mubr.bf16.mxu0 0
    %517 = vmatmul.mubr.bf16.gmra.mxu0 %v140
    %v518 = vpop.f32.mrf.mxu0
    %v519 = vadd.f32 %v192, %v518
    %v520 = vpop.f32.mrf.mxu0
    %v521 = vadd.f32 %v196, %v520
    %v522 = vpop.f32.mrf.mxu0
    %v523 = vadd.f32 %v192, %v522
    %v524 = vpop.f32.mrf.mxu0
    %v525 = vadd.f32 %v196, %v524
    %526 = vmatprep.mubr.bf16.mxu0 0
    %527 = vmatmul.mubr.bf16.gmra.mxu0 %v141
    %v528 = vpop.f32.mrf.mxu0
    %v529 = vadd.f32 %v192, %v528
    %v530 = vpop.f32.mrf.mxu0
    %v531 = vadd.f32 %v196, %v530
    %v532 = vpop.f32.mrf.mxu0
    %v533 = vadd.f32 %v192, %v532
    %v534 = vpop.f32.mrf.mxu0
    %v535 = vadd.f32 %v196, %v534
    %536 = vmatprep.mubr.bf16.mxu0 0
    %537 = vmatmul.mubr.bf16.gmra.mxu0 %v142
    %v538 = vpop.f32.mrf.mxu0
    %v539 = vadd.f32 %v192, %v538
    %v540 = vpop.f32.mrf.mxu0
    %v541 = vadd.f32 %v196, %v540
    %v542 = vpop.f32.mrf.mxu0
    %v543 = vadd.f32 %v192, %v542
    %v544 = vpop.f32.mrf.mxu0
    %v545 = vadd.f32 %v196, %v544
    %546 = vmatprep.mubr.bf16.mxu0 0
    %547 = vmatmul.mubr.bf16.gmra.mxu0 %v143
    %v548 = vpop.f32.mrf.mxu0
    %v549 = vadd.f32 %v192, %v548
    %v550 = vpop.f32.mrf.mxu0
    %v551 = vadd.f32 %v196, %v550
    %v552 = vpop.f32.mrf.mxu0
    %v553 = vadd.f32 %v192, %v552
    %v554 = vpop.f32.mrf.mxu0
    %v555 = vadd.f32 %v196, %v554
    %556 = vmatprep.mubr.bf16.mxu0 0
    %557 = vmatmul.mubr.bf16.gmra.mxu0 %v144
    %v558 = vpop.f32.mrf.mxu0
    %v559 = vadd.f32 %v192, %v558
    %v560 = vpop.f32.mrf.mxu0
    %v561 = vadd.f32 %v196, %v560
    %v562 = vpop.f32.mrf.mxu0
    %v563 = vadd.f32 %v192, %v562
    %v564 = vpop.f32.mrf.mxu0
    %v565 = vadd.f32 %v196, %v564
    %566 = vmatprep.mubr.bf16.mxu0 0
    %567 = vmatmul.mubr.bf16.gmra.mxu0 %v145
    %v568 = vpop.f32.mrf.mxu0
    %v569 = vadd.f32 %v192, %v568
    %v570 = vpop.f32.mrf.mxu0
    %v571 = vadd.f32 %v196, %v570
    %v572 = vpop.f32.mrf.mxu0
    %v573 = vadd.f32 %v192, %v572
    %v574 = vpop.f32.mrf.mxu0
    %v575 = vadd.f32 %v196, %v574
    %576 = vmatprep.mubr.bf16.mxu0 0
    %577 = vmatmul.mubr.bf16.gmra.mxu0 %v146
    %v578 = vpop.f32.mrf.mxu0
    %v579 = vadd.f32 %v192, %v578
    %v580 = vpop.f32.mrf.mxu0
    %v581 = vadd.f32 %v196, %v580
    %v582 = vpop.f32.mrf.mxu0
    %v583 = vadd.f32 %v192, %v582
    %v584 = vpop.f32.mrf.mxu0
    %v585 = vadd.f32 %v196, %v584
    %586 = vdwg.mxu0
    %v587 = vmax.f32 %v396, 0.0
    %v588 = vmax.f32 %v398, 0.0
    %v589 = vmax.f32 %v509, 0.0
    %v590 = vmax.f32 %v511, 0.0
    %v591 = vmax.f32 %v400, 0.0
    %v592 = vmax.f32 %v402, 0.0
    %v593 = vmax.f32 %v513, 0.0
    %v594 = vmax.f32 %v515, 0.0
    %v595 = vmax.f32 %v406, 0.0
    %v596 = vmax.f32 %v408, 0.0
    %v597 = vmax.f32 %v519, 0.0
    %v598 = vmax.f32 %v521, 0.0
    %v599 = vmax.f32 %v410, 0.0
    %v600 = vmax.f32 %v412, 0.0
    %v601 = vmax.f32 %v523, 0.0
    %v602 = vmax.f32 %v525, 0.0
    %v603 = vmax.f32 %v416, 0.0
    %v604 = vmax.f32 %v418, 0.0
    %v605 = vmax.f32 %v529, 0.0
    %v606 = vmax.f32 %v531, 0.0
    %v607 = vmax.f32 %v420, 0.0
    %v608 = vmax.f32 %v422, 0.0
    %v609 = vmax.f32 %v533, 0.0
    %v610 = vmax.f32 %v535, 0.0
    %v611 = vmax.f32 %v426, 0.0
    %v612 = vmax.f32 %v428, 0.0
    %v613 = vmax.f32 %v539, 0.0
    %v614 = vmax.f32 %v541, 0.0
    %v615 = vmax.f32 %v430, 0.0
    %v616 = vmax.f32 %v432, 0.0
    %v617 = vmax.f32 %v543, 0.0
    %v618 = vmax.f32 %v545, 0.0
    %v619 = vmax.f32 %v436, 0.0
    %v620 = vmax.f32 %v438, 0.0
    %v621 = vmax.f32 %v549, 0.0
    %v622 = vmax.f32 %v551, 0.0
    %v623 = vmax.f32 %v440, 0.0
    %v624 = vmax.f32 %v442, 0.0
    %v625 = vmax.f32 %v553, 0.0
    %v626 = vmax.f32 %v555, 0.0
    %v627 = vmax.f32 %v446, 0.0
    %v628 = vmax.f32 %v448, 0.0
    %v629 = vmax.f32 %v559, 0.0
    %v630 = vmax.f32 %v561, 0.0
    %v631 = vmax.f32 %v450, 0.0
    %v632 = vmax.f32 %v452, 0.0
    %v633 = vmax.f32 %v563, 0.0
    %v634 = vmax.f32 %v565, 0.0
    %v635 = vmax.f32 %v456, 0.0
    %v636 = vmax.f32 %v458, 0.0
    %v637 = vmax.f32 %v569, 0.0
    %v638 = vmax.f32 %v571, 0.0
    %v639 = vmax.f32 %v460, 0.0
    %v640 = vmax.f32 %v462, 0.0
    %v641 = vmax.f32 %v573, 0.0
    %v642 = vmax.f32 %v575, 0.0
    %v643 = vmax.f32 %v466, 0.0
    %v644 = vmax.f32 %v468, 0.0
    %v645 = vmax.f32 %v579, 0.0
    %v646 = vmax.f32 %v581, 0.0
    %v647 = vmax.f32 %v470, 0.0
    %v648 = vmax.f32 %v472, 0.0
    %v649 = vmax.f32 %v583, 0.0
    %v650 = vmax.f32 %v585, 0.0
    %v651 = vpack.c.bf16 %v591, %v587
    %v652 = vpack.c.bf16 %v592, %v588
    %v653 = vpack.c.bf16 %v593, %v589
    %v654 = vpack.c.bf16 %v594, %v590
    %v655 = vpack.c.bf16 %v599, %v595
    %v656 = vpack.c.bf16 %v600, %v596
    %v657 = vpack.c.bf16 %v601, %v597
    %v658 = vpack.c.bf16 %v602, %v598
    %v659 = vpack.c.bf16 %v607, %v603
    %v660 = vpack.c.bf16 %v608, %v604
    %v661 = vpack.c.bf16 %v609, %v605
    %v662 = vpack.c.bf16 %v610, %v606
    %v663 = vpack.c.bf16 %v615, %v611
    %v664 = vpack.c.bf16 %v616, %v612
    %v665 = vpack.c.bf16 %v617, %v613
    %v666 = vpack.c.bf16 %v618, %v614
    %v667 = vpack.c.bf16 %v623, %v619
    %v668 = vpack.c.bf16 %v624, %v620
    %v669 = vpack.c.bf16 %v625, %v621
    %v670 = vpack.c.bf16 %v626, %v622
    %v671 = vpack.c.bf16 %v631, %v627
    %v672 = vpack.c.bf16 %v632, %v628
    %v673 = vpack.c.bf16 %v633, %v629
    %v674 = vpack.c.bf16 %v634, %v630
    %v675 = vpack.c.bf16 %v639, %v635
    %v676 = vpack.c.bf16 %v640, %v636
    %v677 = vpack.c.bf16 %v641, %v637
    %v678 = vpack.c.bf16 %v642, %v638
    %v679 = vpack.c.bf16 %v647, %v643
    %v680 = vpack.c.bf16 %v648, %v644
    %v681 = vpack.c.bf16 %v649, %v645
    %v682 = vpack.c.bf16 %v650, %v646
    %s683 = smul.u32 2, 64
    %s684 = smul.u32 %s683, 4
    %s685 = sshll.u32 %s684, 4
    %686 = dma.done [#allocation5], %s685
    %v687 = vld [vmem:[#allocation2] sm:$0xff]
    %v688 = vld [vmem:[#allocation2 + $0x8] sm:$0xff]
    %v689 = vld [vmem:[#allocation2 + $0x10] sm:$0xff]
    %v690 = vld [vmem:[#allocation2 + $0x18] sm:$0xff]
    %v691 = vld [vmem:[#allocation2 + $0x20] sm:$0xff]
    %v692 = vld [vmem:[#allocation2 + $0x28] sm:$0xff]
    %v693 = vld [vmem:[#allocation2 + $0x30] sm:$0xff]
    %v694 = vld [vmem:[#allocation2 + $0x38] sm:$0xff]
    %v695 = vld [vmem:[#allocation2 + $0x40] sm:$0xff]
    %v696 = vld [vmem:[#allocation2 + $0x48] sm:$0xff]
    %v697 = vld [vmem:[#allocation2 + $0x50] sm:$0xff]
    %v698 = vld [vmem:[#allocation2 + $0x58] sm:$0xff]
    %v699 = vld [vmem:[#allocation2 + $0x60] sm:$0xff]
    %v700 = vld [vmem:[#allocation2 + $0x68] sm:$0xff]
    %v701 = vld [vmem:[#allocation2 + $0x70] sm:$0xff]
    %v702 = vld [vmem:[#allocation2 + $0x78] sm:$0xff]
    %v703 = vld [vmem:[#allocation2 + $0x80] sm:$0xff]
    %v704 = vld [vmem:[#allocation2 + $0x88] sm:$0xff]
    %v705 = vld [vmem:[#allocation2 + $0x90] sm:$0xff]
    %v706 = vld [vmem:[#allocation2 + $0x98] sm:$0xff]
    %v707 = vld [vmem:[#allocation2 + $0xa0] sm:$0xff]
    %v708 = vld [vmem:[#allocation2 + $0xa8] sm:$0xff]
    %v709 = vld [vmem:[#allocation2 + $0xb0] sm:$0xff]
    %v710 = vld [vmem:[#allocation2 + $0xb8] sm:$0xff]
    %v711 = vld [vmem:[#allocation2 + $0xc0] sm:$0xff]
    %v712 = vld [vmem:[#allocation2 + $0xc8] sm:$0xff]
    %v713 = vld [vmem:[#allocation2 + $0xd0] sm:$0xff]
    %v714 = vld [vmem:[#allocation2 + $0xd8] sm:$0xff]
    %v715 = vld [vmem:[#allocation2 + $0xe0] sm:$0xff]
    %v716 = vld [vmem:[#allocation2 + $0xe8] sm:$0xff]
    %v717 = vld [vmem:[#allocation2 + $0xf0] sm:$0xff]
    %v718 = vld [vmem:[#allocation2 + $0xf8] sm:$0xff]
    %v719 = vld [vmem:[#allocation2 + $0x100] sm:$0xff]
    %v720 = vld [vmem:[#allocation2 + $0x108] sm:$0xff]
    %v721 = vld [vmem:[#allocation2 + $0x110] sm:$0xff]
    %v722 = vld [vmem:[#allocation2 + $0x118] sm:$0xff]
    %v723 = vld [vmem:[#allocation2 + $0x120] sm:$0xff]
    %v724 = vld [vmem:[#allocation2 + $0x128] sm:$0xff]
    %v725 = vld [vmem:[#allocation2 + $0x130] sm:$0xff]
    %v726 = vld [vmem:[#allocation2 + $0x138] sm:$0xff]
    %v727 = vld [vmem:[#allocation2 + $0x140] sm:$0xff]
    %v728 = vld [vmem:[#allocation2 + $0x148] sm:$0xff]
    %v729 = vld [vmem:[#allocation2 + $0x150] sm:$0xff]
    %v730 = vld [vmem:[#allocation2 + $0x158] sm:$0xff]
    %v731 = vld [vmem:[#allocation2 + $0x160] sm:$0xff]
    %v732 = vld [vmem:[#allocation2 + $0x168] sm:$0xff]
    %v733 = vld [vmem:[#allocation2 + $0x170] sm:$0xff]
    %v734 = vld [vmem:[#allocation2 + $0x178] sm:$0xff]
    %v735 = vld [vmem:[#allocation2 + $0x180] sm:$0xff]
    %v736 = vld [vmem:[#allocation2 + $0x188] sm:$0xff]
    %v737 = vld [vmem:[#allocation2 + $0x190] sm:$0xff]
    %v738 = vld [vmem:[#allocation2 + $0x198] sm:$0xff]
    %v739 = vld [vmem:[#allocation2 + $0x1a0] sm:$0xff]
    %v740 = vld [vmem:[#allocation2 + $0x1a8] sm:$0xff]
    %v741 = vld [vmem:[#allocation2 + $0x1b0] sm:$0xff]
    %v742 = vld [vmem:[#allocation2 + $0x1b8] sm:$0xff]
    %v743 = vld [vmem:[#allocation2 + $0x1c0] sm:$0xff]
    %v744 = vld [vmem:[#allocation2 + $0x1c8] sm:$0xff]
    %v745 = vld [vmem:[#allocation2 + $0x1d0] sm:$0xff]
    %v746 = vld [vmem:[#allocation2 + $0x1d8] sm:$0xff]
    %v747 = vld [vmem:[#allocation2 + $0x1e0] sm:$0xff]
    %v748 = vld [vmem:[#allocation2 + $0x1e8] sm:$0xff]
    %v749 = vld [vmem:[#allocation2 + $0x1f0] sm:$0xff]
    %v750 = vld [vmem:[#allocation2 + $0x1f8] sm:$0xff]
    %v751 = vunpack.c.l.s8.bf16 %v687
    %v752 = vunpack.c.l.s8.bf16 %v688
    %v753 = vunpack.c.l.s8.bf16 %v689
    %v754 = vunpack.c.l.s8.bf16 %v690
    %v755 = vunpack.c.h.s8.bf16 %v687
    %v756 = vunpack.c.h.s8.bf16 %v688
    %v757 = vunpack.c.h.s8.bf16 %v689
    %v758 = vunpack.c.h.s8.bf16 %v690
    %v759 = vunpack.c.l.s8.bf16 %v691
    %v760 = vunpack.c.l.s8.bf16 %v692
    %v761 = vunpack.c.l.s8.bf16 %v693
    %v762 = vunpack.c.l.s8.bf16 %v694
    %v763 = vunpack.c.h.s8.bf16 %v691
    %v764 = vunpack.c.h.s8.bf16 %v692
    %v765 = vunpack.c.h.s8.bf16 %v693
    %v766 = vunpack.c.h.s8.bf16 %v694
    %v767 = vunpack.c.l.s8.bf16 %v695
    %v768 = vunpack.c.l.s8.bf16 %v696
    %v769 = vunpack.c.l.s8.bf16 %v697
    %v770 = vunpack.c.l.s8.bf16 %v698
    %v771 = vunpack.c.h.s8.bf16 %v695
    %v772 = vunpack.c.h.s8.bf16 %v696
    %v773 = vunpack.c.h.s8.bf16 %v697
    %v774 = vunpack.c.h.s8.bf16 %v698
    %v775 = vunpack.c.l.s8.bf16 %v699
    %v776 = vunpack.c.l.s8.bf16 %v700
    %v777 = vunpack.c.l.s8.bf16 %v701
    %v778 = vunpack.c.l.s8.bf16 %v702
    %v779 = vunpack.c.h.s8.bf16 %v699
    %v780 = vunpack.c.h.s8.bf16 %v700
    %v781 = vunpack.c.h.s8.bf16 %v701
    %v782 = vunpack.c.h.s8.bf16 %v702
    %v783 = vunpack.c.l.s8.bf16 %v703
    %v784 = vunpack.c.l.s8.bf16 %v704
    %v785 = vunpack.c.l.s8.bf16 %v705
    %v786 = vunpack.c.l.s8.bf16 %v706
    %v787 = vunpack.c.h.s8.bf16 %v703
    %v788 = vunpack.c.h.s8.bf16 %v704
    %v789 = vunpack.c.h.s8.bf16 %v705
    %v790 = vunpack.c.h.s8.bf16 %v706
    %v791 = vunpack.c.l.s8.bf16 %v707
    %v792 = vunpack.c.l.s8.bf16 %v708
    %v793 = vunpack.c.l.s8.bf16 %v709
    %v794 = vunpack.c.l.s8.bf16 %v710
    %v795 = vunpack.c.h.s8.bf16 %v707
    %v796 = vunpack.c.h.s8.bf16 %v708
    %v797 = vunpack.c.h.s8.bf16 %v709
    %v798 = vunpack.c.h.s8.bf16 %v710
    %v799 = vunpack.c.l.s8.bf16 %v711
    %v800 = vunpack.c.l.s8.bf16 %v712
    %v801 = vunpack.c.l.s8.bf16 %v713
    %v802 = vunpack.c.l.s8.bf16 %v714
    %v803 = vunpack.c.h.s8.bf16 %v711
    %v804 = vunpack.c.h.s8.bf16 %v712
    %v805 = vunpack.c.h.s8.bf16 %v713
    %v806 = vunpack.c.h.s8.bf16 %v714
    %v807 = vunpack.c.l.s8.bf16 %v715
    %v808 = vunpack.c.l.s8.bf16 %v716
    %v809 = vunpack.c.l.s8.bf16 %v717
    %v810 = vunpack.c.l.s8.bf16 %v718
    %v811 = vunpack.c.h.s8.bf16 %v715
    %v812 = vunpack.c.h.s8.bf16 %v716
    %v813 = vunpack.c.h.s8.bf16 %v717
    %v814 = vunpack.c.h.s8.bf16 %v718
    %v815 = vunpack.c.l.s8.bf16 %v719
    %v816 = vunpack.c.l.s8.bf16 %v720
    %v817 = vunpack.c.l.s8.bf16 %v721
    %v818 = vunpack.c.l.s8.bf16 %v722
    %v819 = vunpack.c.h.s8.bf16 %v719
    %v820 = vunpack.c.h.s8.bf16 %v720
    %v821 = vunpack.c.h.s8.bf16 %v721
    %v822 = vunpack.c.h.s8.bf16 %v722
    %v823 = vunpack.c.l.s8.bf16 %v723
    %v824 = vunpack.c.l.s8.bf16 %v724
    %v825 = vunpack.c.l.s8.bf16 %v725
    %v826 = vunpack.c.l.s8.bf16 %v726
    %v827 = vunpack.c.h.s8.bf16 %v723
    %v828 = vunpack.c.h.s8.bf16 %v724
    %v829 = vunpack.c.h.s8.bf16 %v725
    %v830 = vunpack.c.h.s8.bf16 %v726
    %v831 = vunpack.c.l.s8.bf16 %v727
    %v832 = vunpack.c.l.s8.bf16 %v728
    %v833 = vunpack.c.l.s8.bf16 %v729
    %v834 = vunpack.c.l.s8.bf16 %v730
    %v835 = vunpack.c.h.s8.bf16 %v727
    %v836 = vunpack.c.h.s8.bf16 %v728
    %v837 = vunpack.c.h.s8.bf16 %v729
    %v838 = vunpack.c.h.s8.bf16 %v730
    %v839 = vunpack.c.l.s8.bf16 %v731
    %v840 = vunpack.c.l.s8.bf16 %v732
    %v841 = vunpack.c.l.s8.bf16 %v733
    %v842 = vunpack.c.l.s8.bf16 %v734
    %v843 = vunpack.c.h.s8.bf16 %v731
    %v844 = vunpack.c.h.s8.bf16 %v732
    %v845 = vunpack.c.h.s8.bf16 %v733
    %v846 = vunpack.c.h.s8.bf16 %v734
    %v847 = vunpack.c.l.s8.bf16 %v735
    %v848 = vunpack.c.l.s8.bf16 %v736
    %v849 = vunpack.c.l.s8.bf16 %v737
    %v850 = vunpack.c.l.s8.bf16 %v738
    %v851 = vunpack.c.h.s8.bf16 %v735
    %v852 = vunpack.c.h.s8.bf16 %v736
    %v853 = vunpack.c.h.s8.bf16 %v737
    %v854 = vunpack.c.h.s8.bf16 %v738
    %v855 = vunpack.c.l.s8.bf16 %v739
    %v856 = vunpack.c.l.s8.bf16 %v740
    %v857 = vunpack.c.l.s8.bf16 %v741
    %v858 = vunpack.c.l.s8.bf16 %v742
    %v859 = vunpack.c.h.s8.bf16 %v739
    %v860 = vunpack.c.h.s8.bf16 %v740
    %v861 = vunpack.c.h.s8.bf16 %v741
    %v862 = vunpack.c.h.s8.bf16 %v742
    %v863 = vunpack.c.l.s8.bf16 %v743
    %v864 = vunpack.c.l.s8.bf16 %v744
    %v865 = vunpack.c.l.s8.bf16 %v745
    %v866 = vunpack.c.l.s8.bf16 %v746
    %v867 = vunpack.c.h.s8.bf16 %v743
    %v868 = vunpack.c.h.s8.bf16 %v744
    %v869 = vunpack.c.h.s8.bf16 %v745
    %v870 = vunpack.c.h.s8.bf16 %v746
    %v871 = vunpack.c.l.s8.bf16 %v747
    %v872 = vunpack.c.l.s8.bf16 %v748
    %v873 = vunpack.c.l.s8.bf16 %v749
    %v874 = vunpack.c.l.s8.bf16 %v750
    %v875 = vunpack.c.h.s8.bf16 %v747
    %v876 = vunpack.c.h.s8.bf16 %v748
    %v877 = vunpack.c.h.s8.bf16 %v749
    %v878 = vunpack.c.h.s8.bf16 %v750
    %879 = vmatprep.subr.bf16.mxu0 %v780
    %880 = vmatpush1.bf16.msra.mxu0 %v779
    %881 = vmatprep.subr.bf16.mxu0 %v776
    %882 = vmatpush1.bf16.msra.mxu0 %v775
    %883 = vmatprep.subr.bf16.mxu0 %v772
    %884 = vmatpush1.bf16.msra.mxu0 %v771
    %885 = vmatprep.subr.bf16.mxu0 %v768
    %886 = vmatpush1.bf16.msra.mxu0 %v767
    %887 = vmatprep.subr.bf16.mxu0 %v764
    %888 = vmatpush1.bf16.msra.mxu0 %v763
    %889 = vmatprep.subr.bf16.mxu0 %v760
    %890 = vmatpush1.bf16.msra.mxu0 %v759
    %891 = vmatprep.subr.bf16.mxu0 %v756
    %892 = vmatpush1.bf16.msra.mxu0 %v755
    %893 = vmatprep.subr.bf16.mxu0 %v752
    %894 = vmatpush1.bf16.msra.mxu0 %v751
    %895 = vmatprep.subr.bf16.mxu0 %v812
    %896 = vmatpush2.bf16.msra.mxu0 %v811
    %897 = vmatprep.subr.bf16.mxu0 %v808
    %898 = vmatpush2.bf16.msra.mxu0 %v807
    %899 = vmatprep.subr.bf16.mxu0 %v804
    %900 = vmatpush2.bf16.msra.mxu0 %v803
    %901 = vmatprep.subr.bf16.mxu0 %v800
    %902 = vmatpush2.bf16.msra.mxu0 %v799
    %903 = vmatprep.subr.bf16.mxu0 %v796
    %904 = vmatpush2.bf16.msra.mxu0 %v795
    %905 = vmatprep.subr.bf16.mxu0 %v792
    %906 = vmatpush2.bf16.msra.mxu0 %v791
    %907 = vmatprep.subr.bf16.mxu0 %v788
    %908 = vmatpush2.bf16.msra.mxu0 %v787
    %909 = vmatprep.subr.bf16.mxu0 %v784
    %910 = vmatpush2.bf16.msra.mxu0 %v783
    %911 = vmatprep.mubr.bf16.mxu0 %v652
    %912 = vmatmul.mubr.bf16.gmra.mxu0 %v651
    %v913 = vpop.f32.mrf.mxu0
    %v914 = vadd.f32 0.0, %v913
    %v915 = vpop.f32.mrf.mxu0
    %v916 = vadd.f32 0.0, %v915
    %v917 = vpop.f32.mrf.mxu0
    %v918 = vadd.f32 0.0, %v917
    %v919 = vpop.f32.mrf.mxu0
    %v920 = vadd.f32 0.0, %v919
    %921 = vmatprep.mubr.bf16.mxu0 %v656
    %922 = vmatmul.mubr.bf16.gmra.mxu0 %v655
    %v923 = vpop.f32.mrf.mxu0
    %v924 = vadd.f32 0.0, %v923
    %v925 = vpop.f32.mrf.mxu0
    %v926 = vadd.f32 0.0, %v925
    %v927 = vpop.f32.mrf.mxu0
    %v928 = vadd.f32 0.0, %v927
    %v929 = vpop.f32.mrf.mxu0
    %v930 = vadd.f32 0.0, %v929
    %931 = vmatprep.mubr.bf16.mxu0 %v660
    %932 = vmatmul.mubr.bf16.gmra.mxu0 %v659
    %v933 = vpop.f32.mrf.mxu0
    %v934 = vadd.f32 0.0, %v933
    %v935 = vpop.f32.mrf.mxu0
    %v936 = vadd.f32 0.0, %v935
    %v937 = vpop.f32.mrf.mxu0
    %v938 = vadd.f32 0.0, %v937
    %v939 = vpop.f32.mrf.mxu0
    %v940 = vadd.f32 0.0, %v939
    %941 = vmatprep.mubr.bf16.mxu0 %v664
    %942 = vmatmul.mubr.bf16.gmra.mxu0 %v663
    %v943 = vpop.f32.mrf.mxu0
    %v944 = vadd.f32 0.0, %v943
    %v945 = vpop.f32.mrf.mxu0
    %v946 = vadd.f32 0.0, %v945
    %v947 = vpop.f32.mrf.mxu0
    %v948 = vadd.f32 0.0, %v947
    %v949 = vpop.f32.mrf.mxu0
    %v950 = vadd.f32 0.0, %v949
    %951 = vmatprep.mubr.bf16.mxu0 %v668
    %952 = vmatmul.mubr.bf16.gmra.mxu0 %v667
    %v953 = vpop.f32.mrf.mxu0
    %v954 = vadd.f32 0.0, %v953
    %v955 = vpop.f32.mrf.mxu0
    %v956 = vadd.f32 0.0, %v955
    %v957 = vpop.f32.mrf.mxu0
    %v958 = vadd.f32 0.0, %v957
    %v959 = vpop.f32.mrf.mxu0
    %v960 = vadd.f32 0.0, %v959
    %961 = vmatprep.mubr.bf16.mxu0 %v672
    %962 = vmatmul.mubr.bf16.gmra.mxu0 %v671
    %v963 = vpop.f32.mrf.mxu0
    %v964 = vadd.f32 0.0, %v963
    %v965 = vpop.f32.mrf.mxu0
    %v966 = vadd.f32 0.0, %v965
    %v967 = vpop.f32.mrf.mxu0
    %v968 = vadd.f32 0.0, %v967
    %v969 = vpop.f32.mrf.mxu0
    %v970 = vadd.f32 0.0, %v969
    %971 = vmatprep.mubr.bf16.mxu0 %v676
    %972 = vmatmul.mubr.bf16.gmra.mxu0 %v675
    %v973 = vpop.f32.mrf.mxu0
    %v974 = vadd.f32 0.0, %v973
    %v975 = vpop.f32.mrf.mxu0
    %v976 = vadd.f32 0.0, %v975
    %v977 = vpop.f32.mrf.mxu0
    %v978 = vadd.f32 0.0, %v977
    %v979 = vpop.f32.mrf.mxu0
    %v980 = vadd.f32 0.0, %v979
    %981 = vmatprep.mubr.bf16.mxu0 %v680
    %982 = vmatmul.mubr.bf16.gmra.mxu0 %v679
    %v983 = vpop.f32.mrf.mxu0
    %v984 = vadd.f32 0.0, %v983
    %v985 = vpop.f32.mrf.mxu0
    %v986 = vadd.f32 0.0, %v985
    %v987 = vpop.f32.mrf.mxu0
    %v988 = vadd.f32 0.0, %v987
    %v989 = vpop.f32.mrf.mxu0
    %v990 = vadd.f32 0.0, %v989
    %991 = vdwg.mxu0
    %992 = vmatprep.subr.bf16.mxu0 %v844
    %993 = vmatpush1.bf16.msra.mxu0 %v843
    %994 = vmatprep.subr.bf16.mxu0 %v840
    %995 = vmatpush1.bf16.msra.mxu0 %v839
    %996 = vmatprep.subr.bf16.mxu0 %v836
    %997 = vmatpush1.bf16.msra.mxu0 %v835
    %998 = vmatprep.subr.bf16.mxu0 %v832
    %999 = vmatpush1.bf16.msra.mxu0 %v831
    %1000 = vmatprep.subr.bf16.mxu0 %v828
    %1001 = vmatpush1.bf16.msra.mxu0 %v827
    %1002 = vmatprep.subr.bf16.mxu0 %v824
    %1003 = vmatpush1.bf16.msra.mxu0 %v823
    %1004 = vmatprep.subr.bf16.mxu0 %v820
    %1005 = vmatpush1.bf16.msra.mxu0 %v819
    %1006 = vmatprep.subr.bf16.mxu0 %v816
    %1007 = vmatpush1.bf16.msra.mxu0 %v815
    %1008 = vmatprep.subr.bf16.mxu0 %v876
    %1009 = vmatpush2.bf16.msra.mxu0 %v875
    %1010 = vmatprep.subr.bf16.mxu0 %v872
    %1011 = vmatpush2.bf16.msra.mxu0 %v871
    %1012 = vmatprep.subr.bf16.mxu0 %v868
    %1013 = vmatpush2.bf16.msra.mxu0 %v867
    %1014 = vmatprep.subr.bf16.mxu0 %v864
    %1015 = vmatpush2.bf16.msra.mxu0 %v863
    %1016 = vmatprep.subr.bf16.mxu0 %v860
    %1017 = vmatpush2.bf16.msra.mxu0 %v859
    %1018 = vmatprep.subr.bf16.mxu0 %v856
    %1019 = vmatpush2.bf16.msra.mxu0 %v855
    %1020 = vmatprep.subr.bf16.mxu0 %v852
    %1021 = vmatpush2.bf16.msra.mxu0 %v851
    %1022 = vmatprep.subr.bf16.mxu0 %v848
    %1023 = vmatpush2.bf16.msra.mxu0 %v847
    %1024 = vmatprep.mubr.bf16.mxu0 %v654
    %1025 = vmatmul.mubr.bf16.gmra.mxu0 %v653
    %v1026 = vpop.f32.mrf.mxu0
    %v1027 = vadd.f32 %v914, %v1026
    %v1028 = vpop.f32.mrf.mxu0
    %v1029 = vadd.f32 %v916, %v1028
    %v1030 = vpop.f32.mrf.mxu0
    %v1031 = vadd.f32 %v918, %v1030
    %v1032 = vpop.f32.mrf.mxu0
    %v1033 = vadd.f32 %v920, %v1032
    %1034 = vmatprep.mubr.bf16.mxu0 %v658
    %1035 = vmatmul.mubr.bf16.gmra.mxu0 %v657
    %v1036 = vpop.f32.mrf.mxu0
    %v1037 = vadd.f32 %v924, %v1036
    %v1038 = vpop.f32.mrf.mxu0
    %v1039 = vadd.f32 %v926, %v1038
    %v1040 = vpop.f32.mrf.mxu0
    %v1041 = vadd.f32 %v928, %v1040
    %v1042 = vpop.f32.mrf.mxu0
    %v1043 = vadd.f32 %v930, %v1042
    %1044 = vmatprep.mubr.bf16.mxu0 %v662
    %1045 = vmatmul.mubr.bf16.gmra.mxu0 %v661
    %v1046 = vpop.f32.mrf.mxu0
    %v1047 = vadd.f32 %v934, %v1046
    %v1048 = vpop.f32.mrf.mxu0
    %v1049 = vadd.f32 %v936, %v1048
    %v1050 = vpop.f32.mrf.mxu0
    %v1051 = vadd.f32 %v938, %v1050
    %v1052 = vpop.f32.mrf.mxu0
    %v1053 = vadd.f32 %v940, %v1052
    %1054 = vmatprep.mubr.bf16.mxu0 %v666
    %1055 = vmatmul.mubr.bf16.gmra.mxu0 %v665
    %v1056 = vpop.f32.mrf.mxu0
    %v1057 = vadd.f32 %v944, %v1056
    %v1058 = vpop.f32.mrf.mxu0
    %v1059 = vadd.f32 %v946, %v1058
    %v1060 = vpop.f32.mrf.mxu0
    %v1061 = vadd.f32 %v948, %v1060
    %v1062 = vpop.f32.mrf.mxu0
    %v1063 = vadd.f32 %v950, %v1062
    %1064 = vmatprep.mubr.bf16.mxu0 %v670
    %1065 = vmatmul.mubr.bf16.gmra.mxu0 %v669
    %v1066 = vpop.f32.mrf.mxu0
    %v1067 = vadd.f32 %v954, %v1066
    %v1068 = vpop.f32.mrf.mxu0
    %v1069 = vadd.f32 %v956, %v1068
    %v1070 = vpop.f32.mrf.mxu0
    %v1071 = vadd.f32 %v958, %v1070
    %v1072 = vpop.f32.mrf.mxu0
    %v1073 = vadd.f32 %v960, %v1072
    %1074 = vmatprep.mubr.bf16.mxu0 %v674
    %1075 = vmatmul.mubr.bf16.gmra.mxu0 %v673
    %v1076 = vpop.f32.mrf.mxu0
    %v1077 = vadd.f32 %v964, %v1076
    %v1078 = vpop.f32.mrf.mxu0
    %v1079 = vadd.f32 %v966, %v1078
    %v1080 = vpop.f32.mrf.mxu0
    %v1081 = vadd.f32 %v968, %v1080
    %v1082 = vpop.f32.mrf.mxu0
    %v1083 = vadd.f32 %v970, %v1082
    %1084 = vmatprep.mubr.bf16.mxu0 %v678
    %1085 = vmatmul.mubr.bf16.gmra.mxu0 %v677
    %v1086 = vpop.f32.mrf.mxu0
    %v1087 = vadd.f32 %v974, %v1086
    %v1088 = vpop.f32.mrf.mxu0
    %v1089 = vadd.f32 %v976, %v1088
    %v1090 = vpop.f32.mrf.mxu0
    %v1091 = vadd.f32 %v978, %v1090
    %v1092 = vpop.f32.mrf.mxu0
    %v1093 = vadd.f32 %v980, %v1092
    %1094 = vmatprep.mubr.bf16.mxu0 %v682
    %1095 = vmatmul.mubr.bf16.gmra.mxu0 %v681
    %v1096 = vpop.f32.mrf.mxu0
    %v1097 = vadd.f32 %v984, %v1096
    %v1098 = vpop.f32.mrf.mxu0
    %v1099 = vadd.f32 %v986, %v1098
    %v1100 = vpop.f32.mrf.mxu0
    %v1101 = vadd.f32 %v988, %v1100
    %v1102 = vpop.f32.mrf.mxu0
    %v1103 = vadd.f32 %v990, %v1102
    %1104 = vdwg.mxu0
    %1105 = vmatprep.subr.bf16.mxu0 %v782
    %1106 = vmatpush1.bf16.msra.mxu0 %v781
    %1107 = vmatprep.subr.bf16.mxu0 %v778
    %1108 = vmatpush1.bf16.msra.mxu0 %v777
    %1109 = vmatprep.subr.bf16.mxu0 %v774
    %1110 = vmatpush1.bf16.msra.mxu0 %v773
    %1111 = vmatprep.subr.bf16.mxu0 %v770
    %1112 = vmatpush1.bf16.msra.mxu0 %v769
    %1113 = vmatprep.subr.bf16.mxu0 %v766
    %1114 = vmatpush1.bf16.msra.mxu0 %v765
    %1115 = vmatprep.subr.bf16.mxu0 %v762
    %1116 = vmatpush1.bf16.msra.mxu0 %v761
    %1117 = vmatprep.subr.bf16.mxu0 %v758
    %1118 = vmatpush1.bf16.msra.mxu0 %v757
    %1119 = vmatprep.subr.bf16.mxu0 %v754
    %1120 = vmatpush1.bf16.msra.mxu0 %v753
    %1121 = vmatprep.subr.bf16.mxu0 %v814
    %1122 = vmatpush2.bf16.msra.mxu0 %v813
    %1123 = vmatprep.subr.bf16.mxu0 %v810
    %1124 = vmatpush2.bf16.msra.mxu0 %v809
    %1125 = vmatprep.subr.bf16.mxu0 %v806
    %1126 = vmatpush2.bf16.msra.mxu0 %v805
    %1127 = vmatprep.subr.bf16.mxu0 %v802
    %1128 = vmatpush2.bf16.msra.mxu0 %v801
    %1129 = vmatprep.subr.bf16.mxu0 %v798
    %1130 = vmatpush2.bf16.msra.mxu0 %v797
    %1131 = vmatprep.subr.bf16.mxu0 %v794
    %1132 = vmatpush2.bf16.msra.mxu0 %v793
    %1133 = vmatprep.subr.bf16.mxu0 %v790
    %1134 = vmatpush2.bf16.msra.mxu0 %v789
    %1135 = vmatprep.subr.bf16.mxu0 %v786
    %1136 = vmatpush2.bf16.msra.mxu0 %v785
    %1137 = vmatprep.mubr.bf16.mxu0 %v652
    %1138 = vmatmul.mubr.bf16.gmra.mxu0 %v651
    %v1139 = vpop.f32.mrf.mxu0
    %v1140 = vadd.f32 0.0, %v1139
    %v1141 = vpop.f32.mrf.mxu0
    %v1142 = vadd.f32 0.0, %v1141
    %v1143 = vpop.f32.mrf.mxu0
    %v1144 = vadd.f32 0.0, %v1143
    %v1145 = vpop.f32.mrf.mxu0
    %v1146 = vadd.f32 0.0, %v1145
    %1147 = vmatprep.mubr.bf16.mxu0 %v656
    %1148 = vmatmul.mubr.bf16.gmra.mxu0 %v655
    %v1149 = vpop.f32.mrf.mxu0
    %v1150 = vadd.f32 0.0, %v1149
    %v1151 = vpop.f32.mrf.mxu0
    %v1152 = vadd.f32 0.0, %v1151
    %v1153 = vpop.f32.mrf.mxu0
    %v1154 = vadd.f32 0.0, %v1153
    %v1155 = vpop.f32.mrf.mxu0
    %v1156 = vadd.f32 0.0, %v1155
    %1157 = vmatprep.mubr.bf16.mxu0 %v660
    %1158 = vmatmul.mubr.bf16.gmra.mxu0 %v659
    %v1159 = vpop.f32.mrf.mxu0
    %v1160 = vadd.f32 0.0, %v1159
    %v1161 = vpop.f32.mrf.mxu0
    %v1162 = vadd.f32 0.0, %v1161
    %v1163 = vpop.f32.mrf.mxu0
    %v1164 = vadd.f32 0.0, %v1163
    %v1165 = vpop.f32.mrf.mxu0
    %v1166 = vadd.f32 0.0, %v1165
    %1167 = vmatprep.mubr.bf16.mxu0 %v664
    %1168 = vmatmul.mubr.bf16.gmra.mxu0 %v663
    %v1169 = vpop.f32.mrf.mxu0
    %v1170 = vadd.f32 0.0, %v1169
    %v1171 = vpop.f32.mrf.mxu0
    %v1172 = vadd.f32 0.0, %v1171
    %v1173 = vpop.f32.mrf.mxu0
    %v1174 = vadd.f32 0.0, %v1173
    %v1175 = vpop.f32.mrf.mxu0
    %v1176 = vadd.f32 0.0, %v1175
    %1177 = vmatprep.mubr.bf16.mxu0 %v668
    %1178 = vmatmul.mubr.bf16.gmra.mxu0 %v667
    %v1179 = vpop.f32.mrf.mxu0
    %v1180 = vadd.f32 0.0, %v1179
    %v1181 = vpop.f32.mrf.mxu0
    %v1182 = vadd.f32 0.0, %v1181
    %v1183 = vpop.f32.mrf.mxu0
    %v1184 = vadd.f32 0.0, %v1183
    %v1185 = vpop.f32.mrf.mxu0
    %v1186 = vadd.f32 0.0, %v1185
    %1187 = vmatprep.mubr.bf16.mxu0 %v672
    %1188 = vmatmul.mubr.bf16.gmra.mxu0 %v671
    %v1189 = vpop.f32.mrf.mxu0
    %v1190 = vadd.f32 0.0, %v1189
    %v1191 = vpop.f32.mrf.mxu0
    %v1192 = vadd.f32 0.0, %v1191
    %v1193 = vpop.f32.mrf.mxu0
    %v1194 = vadd.f32 0.0, %v1193
    %v1195 = vpop.f32.mrf.mxu0
    %v1196 = vadd.f32 0.0, %v1195
    %1197 = vmatprep.mubr.bf16.mxu0 %v676
    %1198 = vmatmul.mubr.bf16.gmra.mxu0 %v675
    %v1199 = vpop.f32.mrf.mxu0
    %v1200 = vadd.f32 0.0, %v1199
    %v1201 = vpop.f32.mrf.mxu0
    %v1202 = vadd.f32 0.0, %v1201
    %v1203 = vpop.f32.mrf.mxu0
    %v1204 = vadd.f32 0.0, %v1203
    %v1205 = vpop.f32.mrf.mxu0
    %v1206 = vadd.f32 0.0, %v1205
    %1207 = vmatprep.mubr.bf16.mxu0 %v680
    %1208 = vmatmul.mubr.bf16.gmra.mxu0 %v679
    %v1209 = vpop.f32.mrf.mxu0
    %v1210 = vadd.f32 0.0, %v1209
    %v1211 = vpop.f32.mrf.mxu0
    %v1212 = vadd.f32 0.0, %v1211
    %v1213 = vpop.f32.mrf.mxu0
    %v1214 = vadd.f32 0.0, %v1213
    %v1215 = vpop.f32.mrf.mxu0
    %v1216 = vadd.f32 0.0, %v1215
    %1217 = vdwg.mxu0
    %1218 = vmatprep.subr.bf16.mxu0 %v846
    %1219 = vmatpush1.bf16.msra.mxu0 %v845
    %1220 = vmatprep.subr.bf16.mxu0 %v842
    %1221 = vmatpush1.bf16.msra.mxu0 %v841
    %1222 = vmatprep.subr.bf16.mxu0 %v838
    %1223 = vmatpush1.bf16.msra.mxu0 %v837
    %1224 = vmatprep.subr.bf16.mxu0 %v834
    %1225 = vmatpush1.bf16.msra.mxu0 %v833
    %1226 = vmatprep.subr.bf16.mxu0 %v830
    %1227 = vmatpush1.bf16.msra.mxu0 %v829
    %1228 = vmatprep.subr.bf16.mxu0 %v826
    %1229 = vmatpush1.bf16.msra.mxu0 %v825
    %1230 = vmatprep.subr.bf16.mxu0 %v822
    %1231 = vmatpush1.bf16.msra.mxu0 %v821
    %1232 = vmatprep.subr.bf16.mxu0 %v818
    %1233 = vmatpush1.bf16.msra.mxu0 %v817
    %1234 = vmatprep.subr.bf16.mxu0 %v878
    %1235 = vmatpush2.bf16.msra.mxu0 %v877
    %1236 = vmatprep.subr.bf16.mxu0 %v874
    %1237 = vmatpush2.bf16.msra.mxu0 %v873
    %1238 = vmatprep.subr.bf16.mxu0 %v870
    %1239 = vmatpush2.bf16.msra.mxu0 %v869
    %1240 = vmatprep.subr.bf16.mxu0 %v866
    %1241 = vmatpush2.bf16.msra.mxu0 %v865
    %1242 = vmatprep.subr.bf16.mxu0 %v862
    %1243 = vmatpush2.bf16.msra.mxu0 %v861
    %1244 = vmatprep.subr.bf16.mxu0 %v858
    %1245 = vmatpush2.bf16.msra.mxu0 %v857
    %1246 = vmatprep.subr.bf16.mxu0 %v854
    %1247 = vmatpush2.bf16.msra.mxu0 %v853
    %1248 = vmatprep.subr.bf16.mxu0 %v850
    %1249 = vmatpush2.bf16.msra.mxu0 %v849
    %1250 = vmatprep.mubr.bf16.mxu0 %v654
    %1251 = vmatmul.mubr.bf16.gmra.mxu0 %v653
    %v1252 = vpop.f32.mrf.mxu0
    %v1253 = vadd.f32 %v1140, %v1252
    %v1254 = vpop.f32.mrf.mxu0
    %v1255 = vadd.f32 %v1142, %v1254
    %v1256 = vpop.f32.mrf.mxu0
    %v1257 = vadd.f32 %v1144, %v1256
    %v1258 = vpop.f32.mrf.mxu0
    %v1259 = vadd.f32 %v1146, %v1258
    %1260 = vmatprep.mubr.bf16.mxu0 %v658
    %1261 = vmatmul.mubr.bf16.gmra.mxu0 %v657
    %v1262 = vpop.f32.mrf.mxu0
    %v1263 = vadd.f32 %v1150, %v1262
    %v1264 = vpop.f32.mrf.mxu0
    %v1265 = vadd.f32 %v1152, %v1264
    %v1266 = vpop.f32.mrf.mxu0
    %v1267 = vadd.f32 %v1154, %v1266
    %v1268 = vpop.f32.mrf.mxu0
    %v1269 = vadd.f32 %v1156, %v1268
    %1270 = vmatprep.mubr.bf16.mxu0 %v662
    %1271 = vmatmul.mubr.bf16.gmra.mxu0 %v661
    %v1272 = vpop.f32.mrf.mxu0
    %v1273 = vadd.f32 %v1160, %v1272
    %v1274 = vpop.f32.mrf.mxu0
    %v1275 = vadd.f32 %v1162, %v1274
    %v1276 = vpop.f32.mrf.mxu0
    %v1277 = vadd.f32 %v1164, %v1276
    %v1278 = vpop.f32.mrf.mxu0
    %v1279 = vadd.f32 %v1166, %v1278
    %1280 = vmatprep.mubr.bf16.mxu0 %v666
    %1281 = vmatmul.mubr.bf16.gmra.mxu0 %v665
    %v1282 = vpop.f32.mrf.mxu0
    %v1283 = vadd.f32 %v1170, %v1282
    %v1284 = vpop.f32.mrf.mxu0
    %v1285 = vadd.f32 %v1172, %v1284
    %v1286 = vpop.f32.mrf.mxu0
    %v1287 = vadd.f32 %v1174, %v1286
    %v1288 = vpop.f32.mrf.mxu0
    %v1289 = vadd.f32 %v1176, %v1288
    %1290 = vmatprep.mubr.bf16.mxu0 %v670
    %1291 = vmatmul.mubr.bf16.gmra.mxu0 %v669
    %v1292 = vpop.f32.mrf.mxu0
    %v1293 = vadd.f32 %v1180, %v1292
    %v1294 = vpop.f32.mrf.mxu0
    %v1295 = vadd.f32 %v1182, %v1294
    %v1296 = vpop.f32.mrf.mxu0
    %v1297 = vadd.f32 %v1184, %v1296
    %v1298 = vpop.f32.mrf.mxu0
    %v1299 = vadd.f32 %v1186, %v1298
    %1300 = vmatprep.mubr.bf16.mxu0 %v674
    %1301 = vmatmul.mubr.bf16.gmra.mxu0 %v673
    %v1302 = vpop.f32.mrf.mxu0
    %v1303 = vadd.f32 %v1190, %v1302
    %v1304 = vpop.f32.mrf.mxu0
    %v1305 = vadd.f32 %v1192, %v1304
    %v1306 = vpop.f32.mrf.mxu0
    %v1307 = vadd.f32 %v1194, %v1306
    %v1308 = vpop.f32.mrf.mxu0
    %v1309 = vadd.f32 %v1196, %v1308
    %1310 = vmatprep.mubr.bf16.mxu0 %v678
    %1311 = vmatmul.mubr.bf16.gmra.mxu0 %v677
    %v1312 = vpop.f32.mrf.mxu0
    %v1313 = vadd.f32 %v1200, %v1312
    %v1314 = vpop.f32.mrf.mxu0
    %v1315 = vadd.f32 %v1202, %v1314
    %v1316 = vpop.f32.mrf.mxu0
    %v1317 = vadd.f32 %v1204, %v1316
    %v1318 = vpop.f32.mrf.mxu0
    %v1319 = vadd.f32 %v1206, %v1318
    %1320 = vmatprep.mubr.bf16.mxu0 %v682
    %1321 = vmatmul.mubr.bf16.gmra.mxu0 %v681
    %v1322 = vpop.f32.mrf.mxu0
    %v1323 = vadd.f32 %v1210, %v1322
    %v1324 = vpop.f32.mrf.mxu0
    %v1325 = vadd.f32 %v1212, %v1324
    %v1326 = vpop.f32.mrf.mxu0
    %v1327 = vadd.f32 %v1214, %v1326
    %v1328 = vpop.f32.mrf.mxu0
    %v1329 = vadd.f32 %v1216, %v1328
    %1330 = vdwg.mxu0
    %v1331 = vld [vmem:[%s4] sm:$0xf]
    %v1333 = vlaneseq
    %v1334 = vshrl.u32 %v1333, 7
    %v1335 = vsub.s32 0, %v1334
    %v1336 = vrot.slane %v1331, %v1335
    %v1337 = vlaneseq
    %v1338 = vshrl.u32 %v1337, 7
    %v1339 = vsub.s32 1, %v1338
    %v1340 = vrot.slane %v1331, %v1339
    %v1341 = vlaneseq
    %v1342 = vshrl.u32 %v1341, 7
    %v1343 = vsub.s32 2, %v1342
    %v1344 = vrot.slane %v1331, %v1343
    %v1345 = vlaneseq
    %v1346 = vshrl.u32 %v1345, 7
    %v1347 = vsub.s32 3, %v1346
    %v1348 = vrot.slane %v1331, %v1347
    %v1353 = vmul.f32 %v1027, %v1336
    %v1354 = vmul.f32 %v1029, %v1340
    %v1355 = vmul.f32 %v1253, %v1344
    %v1356 = vmul.f32 %v1255, %v1348
    %v1357 = vmul.f32 %v1031, %v1336
    %v1358 = vmul.f32 %v1033, %v1340
    %v1359 = vmul.f32 %v1257, %v1344
    %v1360 = vmul.f32 %v1259, %v1348
    %v1361 = vmul.f32 %v1037, %v1336
    %v1362 = vmul.f32 %v1039, %v1340
    %v1363 = vmul.f32 %v1263, %v1344
    %v1364 = vmul.f32 %v1265, %v1348
    %v1365 = vmul.f32 %v1041, %v1336
    %v1366 = vmul.f32 %v1043, %v1340
    %v1367 = vmul.f32 %v1267, %v1344
    %v1368 = vmul.f32 %v1269, %v1348
    %v1369 = vmul.f32 %v1047, %v1336
    %v1370 = vmul.f32 %v1049, %v1340
    %v1371 = vmul.f32 %v1273, %v1344
    %v1372 = vmul.f32 %v1275, %v1348
    %v1373 = vmul.f32 %v1051, %v1336
    %v1374 = vmul.f32 %v1053, %v1340
    %v1375 = vmul.f32 %v1277, %v1344
    %v1376 = vmul.f32 %v1279, %v1348
    %v1377 = vmul.f32 %v1057, %v1336
    %v1378 = vmul.f32 %v1059, %v1340
    %v1379 = vmul.f32 %v1283, %v1344
    %v1380 = vmul.f32 %v1285, %v1348
    %v1381 = vmul.f32 %v1061, %v1336
    %v1382 = vmul.f32 %v1063, %v1340
    %v1383 = vmul.f32 %v1287, %v1344
    %v1384 = vmul.f32 %v1289, %v1348
    %v1385 = vmul.f32 %v1067, %v1336
    %v1386 = vmul.f32 %v1069, %v1340
    %v1387 = vmul.f32 %v1293, %v1344
    %v1388 = vmul.f32 %v1295, %v1348
    %v1389 = vmul.f32 %v1071, %v1336
    %v1390 = vmul.f32 %v1073, %v1340
    %v1391 = vmul.f32 %v1297, %v1344
    %v1392 = vmul.f32 %v1299, %v1348
    %v1393 = vmul.f32 %v1077, %v1336
    %v1394 = vmul.f32 %v1079, %v1340
    %v1395 = vmul.f32 %v1303, %v1344
    %v1396 = vmul.f32 %v1305, %v1348
    %v1397 = vmul.f32 %v1081, %v1336
    %v1398 = vmul.f32 %v1083, %v1340
    %v1399 = vmul.f32 %v1307, %v1344
    %v1400 = vmul.f32 %v1309, %v1348
    %v1401 = vmul.f32 %v1087, %v1336
    %v1402 = vmul.f32 %v1089, %v1340
    %v1403 = vmul.f32 %v1313, %v1344
    %v1404 = vmul.f32 %v1315, %v1348
    %v1405 = vmul.f32 %v1091, %v1336
    %v1406 = vmul.f32 %v1093, %v1340
    %v1407 = vmul.f32 %v1317, %v1344
    %v1408 = vmul.f32 %v1319, %v1348
    %v1409 = vmul.f32 %v1097, %v1336
    %v1410 = vmul.f32 %v1099, %v1340
    %v1411 = vmul.f32 %v1323, %v1344
    %v1412 = vmul.f32 %v1325, %v1348
    %v1413 = vmul.f32 %v1101, %v1336
    %v1414 = vmul.f32 %v1103, %v1340
    %v1415 = vmul.f32 %v1327, %v1344
    %v1416 = vmul.f32 %v1329, %v1348
    %v1417 = vld [vmem:[%s5] sm:$0xf]
    %v1419 = vlaneseq
    %v1420 = vshrl.u32 %v1419, 7
    %v1421 = vsub.s32 0, %v1420
    %v1422 = vrot.slane %v1417, %v1421
    %v1423 = vlaneseq
    %v1424 = vshrl.u32 %v1423, 7
    %v1425 = vsub.s32 1, %v1424
    %v1426 = vrot.slane %v1417, %v1425
    %v1427 = vlaneseq
    %v1428 = vshrl.u32 %v1427, 7
    %v1429 = vsub.s32 2, %v1428
    %v1430 = vrot.slane %v1417, %v1429
    %v1431 = vlaneseq
    %v1432 = vshrl.u32 %v1431, 7
    %v1433 = vsub.s32 3, %v1432
    %v1434 = vrot.slane %v1417, %v1433
    %v1439 = vadd.f32 %v1353, %v1422
    %v1440 = vadd.f32 %v1354, %v1426
    %v1441 = vadd.f32 %v1355, %v1430
    %v1442 = vadd.f32 %v1356, %v1434
    %v1443 = vadd.f32 %v1357, %v1422
    %v1444 = vadd.f32 %v1358, %v1426
    %v1445 = vadd.f32 %v1359, %v1430
    %v1446 = vadd.f32 %v1360, %v1434
    %v1447 = vadd.f32 %v1361, %v1422
    %v1448 = vadd.f32 %v1362, %v1426
    %v1449 = vadd.f32 %v1363, %v1430
    %v1450 = vadd.f32 %v1364, %v1434
    %v1451 = vadd.f32 %v1365, %v1422
    %v1452 = vadd.f32 %v1366, %v1426
    %v1453 = vadd.f32 %v1367, %v1430
    %v1454 = vadd.f32 %v1368, %v1434
    %v1455 = vadd.f32 %v1369, %v1422
    %v1456 = vadd.f32 %v1370, %v1426
    %v1457 = vadd.f32 %v1371, %v1430
    %v1458 = vadd.f32 %v1372, %v1434
    %v1459 = vadd.f32 %v1373, %v1422
    %v1460 = vadd.f32 %v1374, %v1426
    %v1461 = vadd.f32 %v1375, %v1430
    %v1462 = vadd.f32 %v1376, %v1434
    %v1463 = vadd.f32 %v1377, %v1422
    %v1464 = vadd.f32 %v1378, %v1426
    %v1465 = vadd.f32 %v1379, %v1430
    %v1466 = vadd.f32 %v1380, %v1434
    %v1467 = vadd.f32 %v1381, %v1422
    %v1468 = vadd.f32 %v1382, %v1426
    %v1469 = vadd.f32 %v1383, %v1430
    %v1470 = vadd.f32 %v1384, %v1434
    %v1471 = vadd.f32 %v1385, %v1422
    %v1472 = vadd.f32 %v1386, %v1426
    %v1473 = vadd.f32 %v1387, %v1430
    %v1474 = vadd.f32 %v1388, %v1434
    %v1475 = vadd.f32 %v1389, %v1422
    %v1476 = vadd.f32 %v1390, %v1426
    %v1477 = vadd.f32 %v1391, %v1430
    %v1478 = vadd.f32 %v1392, %v1434
    %v1479 = vadd.f32 %v1393, %v1422
    %v1480 = vadd.f32 %v1394, %v1426
    %v1481 = vadd.f32 %v1395, %v1430
    %v1482 = vadd.f32 %v1396, %v1434
    %v1483 = vadd.f32 %v1397, %v1422
    %v1484 = vadd.f32 %v1398, %v1426
    %v1485 = vadd.f32 %v1399, %v1430
    %v1486 = vadd.f32 %v1400, %v1434
    %v1487 = vadd.f32 %v1401, %v1422
    %v1488 = vadd.f32 %v1402, %v1426
    %v1489 = vadd.f32 %v1403, %v1430
    %v1490 = vadd.f32 %v1404, %v1434
    %v1491 = vadd.f32 %v1405, %v1422
    %v1492 = vadd.f32 %v1406, %v1426
    %v1493 = vadd.f32 %v1407, %v1430
    %v1494 = vadd.f32 %v1408, %v1434
    %v1495 = vadd.f32 %v1409, %v1422
    %v1496 = vadd.f32 %v1410, %v1426
    %v1497 = vadd.f32 %v1411, %v1430
    %v1498 = vadd.f32 %v1412, %v1434
    %v1499 = vadd.f32 %v1413, %v1422
    %v1500 = vadd.f32 %v1414, %v1426
    %v1501 = vadd.f32 %v1415, %v1430
    %v1502 = vadd.f32 %v1416, %v1434
    %v1503 = vmax.f32 %v1439, 0.0
    %v1504 = vmax.f32 %v1440, 0.0
    %v1505 = vmax.f32 %v1441, 0.0
    %v1506 = vmax.f32 %v1442, 0.0
    %v1507 = vmax.f32 %v1443, 0.0
    %v1508 = vmax.f32 %v1444, 0.0
    %v1509 = vmax.f32 %v1445, 0.0
    %v1510 = vmax.f32 %v1446, 0.0
    %v1511 = vmax.f32 %v1447, 0.0
    %v1512 = vmax.f32 %v1448, 0.0
    %v1513 = vmax.f32 %v1449, 0.0
    %v1514 = vmax.f32 %v1450, 0.0
    %v1515 = vmax.f32 %v1451, 0.0
    %v1516 = vmax.f32 %v1452, 0.0
    %v1517 = vmax.f32 %v1453, 0.0
    %v1518 = vmax.f32 %v1454, 0.0
    %v1519 = vmax.f32 %v1455, 0.0
    %v1520 = vmax.f32 %v1456, 0.0
    %v1521 = vmax.f32 %v1457, 0.0
    %v1522 = vmax.f32 %v1458, 0.0
    %v1523 = vmax.f32 %v1459, 0.0
    %v1524 = vmax.f32 %v1460, 0.0
    %v1525 = vmax.f32 %v1461, 0.0
    %v1526 = vmax.f32 %v1462, 0.0
    %v1527 = vmax.f32 %v1463, 0.0
    %v1528 = vmax.f32 %v1464, 0.0
    %v1529 = vmax.f32 %v1465, 0.0
    %v1530 = vmax.f32 %v1466, 0.0
    %v1531 = vmax.f32 %v1467, 0.0
    %v1532 = vmax.f32 %v1468, 0.0
    %v1533 = vmax.f32 %v1469, 0.0
    %v1534 = vmax.f32 %v1470, 0.0
    %v1535 = vmax.f32 %v1471, 0.0
    %v1536 = vmax.f32 %v1472, 0.0
    %v1537 = vmax.f32 %v1473, 0.0
    %v1538 = vmax.f32 %v1474, 0.0
    %v1539 = vmax.f32 %v1475, 0.0
    %v1540 = vmax.f32 %v1476, 0.0
    %v1541 = vmax.f32 %v1477, 0.0
    %v1542 = vmax.f32 %v1478, 0.0
    %v1543 = vmax.f32 %v1479, 0.0
    %v1544 = vmax.f32 %v1480, 0.0
    %v1545 = vmax.f32 %v1481, 0.0
    %v1546 = vmax.f32 %v1482, 0.0
    %v1547 = vmax.f32 %v1483, 0.0
    %v1548 = vmax.f32 %v1484, 0.0
    %v1549 = vmax.f32 %v1485, 0.0
    %v1550 = vmax.f32 %v1486, 0.0
    %v1551 = vmax.f32 %v1487, 0.0
    %v1552 = vmax.f32 %v1488, 0.0
    %v1553 = vmax.f32 %v1489, 0.0
    %v1554 = vmax.f32 %v1490, 0.0
    %v1555 = vmax.f32 %v1491, 0.0
    %v1556 = vmax.f32 %v1492, 0.0
    %v1557 = vmax.f32 %v1493, 0.0
    %v1558 = vmax.f32 %v1494, 0.0
    %v1559 = vmax.f32 %v1495, 0.0
    %v1560 = vmax.f32 %v1496, 0.0
    %v1561 = vmax.f32 %v1497, 0.0
    %v1562 = vmax.f32 %v1498, 0.0
    %v1563 = vmax.f32 %v1499, 0.0
    %v1564 = vmax.f32 %v1500, 0.0
    %v1565 = vmax.f32 %v1501, 0.0
    %v1566 = vmax.f32 %v1502, 0.0
    %v1567 = vpack.c.bf16 %v1507, %v1503
    %v1568 = vpack.c.bf16 %v1508, %v1504
    %v1569 = vpack.c.bf16 %v1509, %v1505
    %v1570 = vpack.c.bf16 %v1510, %v1506
    %v1571 = vpack.c.bf16 %v1515, %v1511
    %v1572 = vpack.c.bf16 %v1516, %v1512
    %v1573 = vpack.c.bf16 %v1517, %v1513
    %v1574 = vpack.c.bf16 %v1518, %v1514
    %v1575 = vpack.c.bf16 %v1523, %v1519
    %v1576 = vpack.c.bf16 %v1524, %v1520
    %v1577 = vpack.c.bf16 %v1525, %v1521
    %v1578 = vpack.c.bf16 %v1526, %v1522
    %v1579 = vpack.c.bf16 %v1531, %v1527
    %v1580 = vpack.c.bf16 %v1532, %v1528
    %v1581 = vpack.c.bf16 %v1533, %v1529
    %v1582 = vpack.c.bf16 %v1534, %v1530
    %v1583 = vpack.c.bf16 %v1539, %v1535
    %v1584 = vpack.c.bf16 %v1540, %v1536
    %v1585 = vpack.c.bf16 %v1541, %v1537
    %v1586 = vpack.c.bf16 %v1542, %v1538
    %v1587 = vpack.c.bf16 %v1547, %v1543
    %v1588 = vpack.c.bf16 %v1548, %v1544
    %v1589 = vpack.c.bf16 %v1549, %v1545
    %v1590 = vpack.c.bf16 %v1550, %v1546
    %v1591 = vpack.c.bf16 %v1555, %v1551
    %v1592 = vpack.c.bf16 %v1556, %v1552
    %v1593 = vpack.c.bf16 %v1557, %v1553
    %v1594 = vpack.c.bf16 %v1558, %v1554
    %v1595 = vpack.c.bf16 %v1563, %v1559
    %v1596 = vpack.c.bf16 %v1564, %v1560
    %v1597 = vpack.c.bf16 %v1565, %v1561
    %v1598 = vpack.c.bf16 %v1566, %v1562
    %s1599 = sshll.u32 %s684, 4
    %1600 = dma.done %s99, %s1599
    %v1601 = vld [vmem:[#allocation3] sm:$0xff]
    %v1602 = vld [vmem:[#allocation3 + $0x8] sm:$0xff]
    %v1603 = vld [vmem:[#allocation3 + $0x10] sm:$0xff]
    %v1604 = vld [vmem:[#allocation3 + $0x18] sm:$0xff]
    %v1605 = vld [vmem:[#allocation3 + $0x20] sm:$0xff]
    %v1606 = vld [vmem:[#allocation3 + $0x28] sm:$0xff]
    %v1607 = vld [vmem:[#allocation3 + $0x30] sm:$0xff]
    %v1608 = vld [vmem:[#allocation3 + $0x38] sm:$0xff]
    %v1609 = vld [vmem:[#allocation3 + $0x40] sm:$0xff]
    %v1610 = vld [vmem:[#allocation3 + $0x48] sm:$0xff]
    %v1611 = vld [vmem:[#allocation3 + $0x50] sm:$0xff]
    %v1612 = vld [vmem:[#allocation3 + $0x58] sm:$0xff]
    %v1613 = vld [vmem:[#allocation3 + $0x60] sm:$0xff]
    %v1614 = vld [vmem:[#allocation3 + $0x68] sm:$0xff]
    %v1615 = vld [vmem:[#allocation3 + $0x70] sm:$0xff]
    %v1616 = vld [vmem:[#allocation3 + $0x78] sm:$0xff]
    %v1617 = vld [vmem:[#allocation3 + $0x80] sm:$0xff]
    %v1618 = vld [vmem:[#allocation3 + $0x88] sm:$0xff]
    %v1619 = vld [vmem:[#allocation3 + $0x90] sm:$0xff]
    %v1620 = vld [vmem:[#allocation3 + $0x98] sm:$0xff]
    %v1621 = vld [vmem:[#allocation3 + $0xa0] sm:$0xff]
    %v1622 = vld [vmem:[#allocation3 + $0xa8] sm:$0xff]
    %v1623 = vld [vmem:[#allocation3 + $0xb0] sm:$0xff]
    %v1624 = vld [vmem:[#allocation3 + $0xb8] sm:$0xff]
    %v1625 = vld [vmem:[#allocation3 + $0xc0] sm:$0xff]
    %v1626 = vld [vmem:[#allocation3 + $0xc8] sm:$0xff]
    %v1627 = vld [vmem:[#allocation3 + $0xd0] sm:$0xff]
    %v1628 = vld [vmem:[#allocation3 + $0xd8] sm:$0xff]
    %v1629 = vld [vmem:[#allocation3 + $0xe0] sm:$0xff]
    %v1630 = vld [vmem:[#allocation3 + $0xe8] sm:$0xff]
    %v1631 = vld [vmem:[#allocation3 + $0xf0] sm:$0xff]
    %v1632 = vld [vmem:[#allocation3 + $0xf8] sm:$0xff]
    %v1633 = vld [vmem:[#allocation3 + $0x100] sm:$0xff]
    %v1634 = vld [vmem:[#allocation3 + $0x108] sm:$0xff]
    %v1635 = vld [vmem:[#allocation3 + $0x110] sm:$0xff]
    %v1636 = vld [vmem:[#allocation3 + $0x118] sm:$0xff]
    %v1637 = vld [vmem:[#allocation3 + $0x120] sm:$0xff]
    %v1638 = vld [vmem:[#allocation3 + $0x128] sm:$0xff]
    %v1639 = vld [vmem:[#allocation3 + $0x130] sm:$0xff]
    %v1640 = vld [vmem:[#allocation3 + $0x138] sm:$0xff]
    %v1641 = vld [vmem:[#allocation3 + $0x140] sm:$0xff]
    %v1642 = vld [vmem:[#allocation3 + $0x148] sm:$0xff]
    %v1643 = vld [vmem:[#allocation3 + $0x150] sm:$0xff]
    %v1644 = vld [vmem:[#allocation3 + $0x158] sm:$0xff]
    %v1645 = vld [vmem:[#allocation3 + $0x160] sm:$0xff]
    %v1646 = vld [vmem:[#allocation3 + $0x168] sm:$0xff]
    %v1647 = vld [vmem:[#allocation3 + $0x170] sm:$0xff]
    %v1648 = vld [vmem:[#allocation3 + $0x178] sm:$0xff]
    %v1649 = vld [vmem:[#allocation3 + $0x180] sm:$0xff]
    %v1650 = vld [vmem:[#allocation3 + $0x188] sm:$0xff]
    %v1651 = vld [vmem:[#allocation3 + $0x190] sm:$0xff]
    %v1652 = vld [vmem:[#allocation3 + $0x198] sm:$0xff]
    %v1653 = vld [vmem:[#allocation3 + $0x1a0] sm:$0xff]
    %v1654 = vld [vmem:[#allocation3 + $0x1a8] sm:$0xff]
    %v1655 = vld [vmem:[#allocation3 + $0x1b0] sm:$0xff]
    %v1656 = vld [vmem:[#allocation3 + $0x1b8] sm:$0xff]
    %v1657 = vld [vmem:[#allocation3 + $0x1c0] sm:$0xff]
    %v1658 = vld [vmem:[#allocation3 + $0x1c8] sm:$0xff]
    %v1659 = vld [vmem:[#allocation3 + $0x1d0] sm:$0xff]
    %v1660 = vld [vmem:[#allocation3 + $0x1d8] sm:$0xff]
    %v1661 = vld [vmem:[#allocation3 + $0x1e0] sm:$0xff]
    %v1662 = vld [vmem:[#allocation3 + $0x1e8] sm:$0xff]
    %v1663 = vld [vmem:[#allocation3 + $0x1f0] sm:$0xff]
    %v1664 = vld [vmem:[#allocation3 + $0x1f8] sm:$0xff]
    %v1665 = vunpack.c.l.s8.bf16 %v1601
    %v1666 = vunpack.c.l.s8.bf16 %v1602
    %v1667 = vunpack.c.l.s8.bf16 %v1603
    %v1668 = vunpack.c.l.s8.bf16 %v1604
    %v1669 = vunpack.c.h.s8.bf16 %v1601
    %v1670 = vunpack.c.h.s8.bf16 %v1602
    %v1671 = vunpack.c.h.s8.bf16 %v1603
    %v1672 = vunpack.c.h.s8.bf16 %v1604
    %v1673 = vunpack.c.l.s8.bf16 %v1605
    %v1674 = vunpack.c.l.s8.bf16 %v1606
    %v1675 = vunpack.c.l.s8.bf16 %v1607
    %v1676 = vunpack.c.l.s8.bf16 %v1608
    %v1677 = vunpack.c.h.s8.bf16 %v1605
    %v1678 = vunpack.c.h.s8.bf16 %v1606
    %v1679 = vunpack.c.h.s8.bf16 %v1607
    %v1680 = vunpack.c.h.s8.bf16 %v1608
    %v1681 = vunpack.c.l.s8.bf16 %v1609
    %v1682 = vunpack.c.l.s8.bf16 %v1610
    %v1683 = vunpack.c.l.s8.bf16 %v1611
    %v1684 = vunpack.c.l.s8.bf16 %v1612
    %v1685 = vunpack.c.h.s8.bf16 %v1609
    %v1686 = vunpack.c.h.s8.bf16 %v1610
    %v1687 = vunpack.c.h.s8.bf16 %v1611
    %v1688 = vunpack.c.h.s8.bf16 %v1612
    %v1689 = vunpack.c.l.s8.bf16 %v1613
    %v1690 = vunpack.c.l.s8.bf16 %v1614
    %v1691 = vunpack.c.l.s8.bf16 %v1615
    %v1692 = vunpack.c.l.s8.bf16 %v1616
    %v1693 = vunpack.c.h.s8.bf16 %v1613
    %v1694 = vunpack.c.h.s8.bf16 %v1614
    %v1695 = vunpack.c.h.s8.bf16 %v1615
    %v1696 = vunpack.c.h.s8.bf16 %v1616
    %v1697 = vunpack.c.l.s8.bf16 %v1617
    %v1698 = vunpack.c.l.s8.bf16 %v1618
    %v1699 = vunpack.c.l.s8.bf16 %v1619
    %v1700 = vunpack.c.l.s8.bf16 %v1620
    %v1701 = vunpack.c.h.s8.bf16 %v1617
    %v1702 = vunpack.c.h.s8.bf16 %v1618
    %v1703 = vunpack.c.h.s8.bf16 %v1619
    %v1704 = vunpack.c.h.s8.bf16 %v1620
    %v1705 = vunpack.c.l.s8.bf16 %v1621
    %v1706 = vunpack.c.l.s8.bf16 %v1622
    %v1707 = vunpack.c.l.s8.bf16 %v1623
    %v1708 = vunpack.c.l.s8.bf16 %v1624
    %v1709 = vunpack.c.h.s8.bf16 %v1621
    %v1710 = vunpack.c.h.s8.bf16 %v1622
    %v1711 = vunpack.c.h.s8.bf16 %v1623
    %v1712 = vunpack.c.h.s8.bf16 %v1624
    %v1713 = vunpack.c.l.s8.bf16 %v1625
    %v1714 = vunpack.c.l.s8.bf16 %v1626
    %v1715 = vunpack.c.l.s8.bf16 %v1627
    %v1716 = vunpack.c.l.s8.bf16 %v1628
    %v1717 = vunpack.c.h.s8.bf16 %v1625
    %v1718 = vunpack.c.h.s8.bf16 %v1626
    %v1719 = vunpack.c.h.s8.bf16 %v1627
    %v1720 = vunpack.c.h.s8.bf16 %v1628
    %v1721 = vunpack.c.l.s8.bf16 %v1629
    %v1722 = vunpack.c.l.s8.bf16 %v1630
    %v1723 = vunpack.c.l.s8.bf16 %v1631
    %v1724 = vunpack.c.l.s8.bf16 %v1632
    %v1725 = vunpack.c.h.s8.bf16 %v1629
    %v1726 = vunpack.c.h.s8.bf16 %v1630
    %v1727 = vunpack.c.h.s8.bf16 %v1631
    %v1728 = vunpack.c.h.s8.bf16 %v1632
    %v1729 = vunpack.c.l.s8.bf16 %v1633
    %v1730 = vunpack.c.l.s8.bf16 %v1634
    %v1731 = vunpack.c.l.s8.bf16 %v1635
    %v1732 = vunpack.c.l.s8.bf16 %v1636
    %v1733 = vunpack.c.h.s8.bf16 %v1633
    %v1734 = vunpack.c.h.s8.bf16 %v1634
    %v1735 = vunpack.c.h.s8.bf16 %v1635
    %v1736 = vunpack.c.h.s8.bf16 %v1636
    %v1737 = vunpack.c.l.s8.bf16 %v1637
    %v1738 = vunpack.c.l.s8.bf16 %v1638
    %v1739 = vunpack.c.l.s8.bf16 %v1639
    %v1740 = vunpack.c.l.s8.bf16 %v1640
    %v1741 = vunpack.c.h.s8.bf16 %v1637
    %v1742 = vunpack.c.h.s8.bf16 %v1638
    %v1743 = vunpack.c.h.s8.bf16 %v1639
    %v1744 = vunpack.c.h.s8.bf16 %v1640
    %v1745 = vunpack.c.l.s8.bf16 %v1641
    %v1746 = vunpack.c.l.s8.bf16 %v1642
    %v1747 = vunpack.c.l.s8.bf16 %v1643
    %v1748 = vunpack.c.l.s8.bf16 %v1644
    %v1749 = vunpack.c.h.s8.bf16 %v1641
    %v1750 = vunpack.c.h.s8.bf16 %v1642
    %v1751 = vunpack.c.h.s8.bf16 %v1643
    %v1752 = vunpack.c.h.s8.bf16 %v1644
    %v1753 = vunpack.c.l.s8.bf16 %v1645
    %v1754 = vunpack.c.l.s8.bf16 %v1646
    %v1755 = vunpack.c.l.s8.bf16 %v1647
    %v1756 = vunpack.c.l.s8.bf16 %v1648
    %v1757 = vunpack.c.h.s8.bf16 %v1645
    %v1758 = vunpack.c.h.s8.bf16 %v1646
    %v1759 = vunpack.c.h.s8.bf16 %v1647
    %v1760 = vunpack.c.h.s8.bf16 %v1648
    %v1761 = vunpack.c.l.s8.bf16 %v1649
    %v1762 = vunpack.c.l.s8.bf16 %v1650
    %v1763 = vunpack.c.l.s8.bf16 %v1651
    %v1764 = vunpack.c.l.s8.bf16 %v1652
    %v1765 = vunpack.c.h.s8.bf16 %v1649
    %v1766 = vunpack.c.h.s8.bf16 %v1650
    %v1767 = vunpack.c.h.s8.bf16 %v1651
    %v1768 = vunpack.c.h.s8.bf16 %v1652
    %v1769 = vunpack.c.l.s8.bf16 %v1653
    %v1770 = vunpack.c.l.s8.bf16 %v1654
    %v1771 = vunpack.c.l.s8.bf16 %v1655
    %v1772 = vunpack.c.l.s8.bf16 %v1656
    %v1773 = vunpack.c.h.s8.bf16 %v1653
    %v1774 = vunpack.c.h.s8.bf16 %v1654
    %v1775 = vunpack.c.h.s8.bf16 %v1655
    %v1776 = vunpack.c.h.s8.bf16 %v1656
    %v1777 = vunpack.c.l.s8.bf16 %v1657
    %v1778 = vunpack.c.l.s8.bf16 %v1658
    %v1779 = vunpack.c.l.s8.bf16 %v1659
    %v1780 = vunpack.c.l.s8.bf16 %v1660
    %v1781 = vunpack.c.h.s8.bf16 %v1657
    %v1782 = vunpack.c.h.s8.bf16 %v1658
    %v1783 = vunpack.c.h.s8.bf16 %v1659
    %v1784 = vunpack.c.h.s8.bf16 %v1660
    %v1785 = vunpack.c.l.s8.bf16 %v1661
    %v1786 = vunpack.c.l.s8.bf16 %v1662
    %v1787 = vunpack.c.l.s8.bf16 %v1663
    %v1788 = vunpack.c.l.s8.bf16 %v1664
    %v1789 = vunpack.c.h.s8.bf16 %v1661
    %v1790 = vunpack.c.h.s8.bf16 %v1662
    %v1791 = vunpack.c.h.s8.bf16 %v1663
    %v1792 = vunpack.c.h.s8.bf16 %v1664
    %1793 = vmatprep.subr.bf16.mxu0 %v1694
    %1794 = vmatpush1.bf16.msra.mxu0 %v1693
    %1795 = vmatprep.subr.bf16.mxu0 %v1690
    %1796 = vmatpush1.bf16.msra.mxu0 %v1689
    %1797 = vmatprep.subr.bf16.mxu0 %v1686
    %1798 = vmatpush1.bf16.msra.mxu0 %v1685
    %1799 = vmatprep.subr.bf16.mxu0 %v1682
    %1800 = vmatpush1.bf16.msra.mxu0 %v1681
    %1801 = vmatprep.subr.bf16.mxu0 %v1678
    %1802 = vmatpush1.bf16.msra.mxu0 %v1677
    %1803 = vmatprep.subr.bf16.mxu0 %v1674
    %1804 = vmatpush1.bf16.msra.mxu0 %v1673
    %1805 = vmatprep.subr.bf16.mxu0 %v1670
    %1806 = vmatpush1.bf16.msra.mxu0 %v1669
    %1807 = vmatprep.subr.bf16.mxu0 %v1666
    %1808 = vmatpush1.bf16.msra.mxu0 %v1665
    %1809 = vmatprep.subr.bf16.mxu0 %v1726
    %1810 = vmatpush2.bf16.msra.mxu0 %v1725
    %1811 = vmatprep.subr.bf16.mxu0 %v1722
    %1812 = vmatpush2.bf16.msra.mxu0 %v1721
    %1813 = vmatprep.subr.bf16.mxu0 %v1718
    %1814 = vmatpush2.bf16.msra.mxu0 %v1717
    %1815 = vmatprep.subr.bf16.mxu0 %v1714
    %1816 = vmatpush2.bf16.msra.mxu0 %v1713
    %1817 = vmatprep.subr.bf16.mxu0 %v1710
    %1818 = vmatpush2.bf16.msra.mxu0 %v1709
    %1819 = vmatprep.subr.bf16.mxu0 %v1706
    %1820 = vmatpush2.bf16.msra.mxu0 %v1705
    %1821 = vmatprep.subr.bf16.mxu0 %v1702
    %1822 = vmatpush2.bf16.msra.mxu0 %v1701
    %1823 = vmatprep.subr.bf16.mxu0 %v1698
    %1824 = vmatpush2.bf16.msra.mxu0 %v1697
    %1825 = vmatprep.mubr.bf16.mxu0 %v1568
    %1826 = vmatmul.mubr.bf16.gmra.mxu0 %v1567
    %v1827 = vpop.f32.mrf.mxu0
    %v1828 = vadd.f32 0.0, %v1827
    %v1829 = vpop.f32.mrf.mxu0
    %v1830 = vadd.f32 0.0, %v1829
    %v1831 = vpop.f32.mrf.mxu0
    %v1832 = vadd.f32 0.0, %v1831
    %v1833 = vpop.f32.mrf.mxu0
    %v1834 = vadd.f32 0.0, %v1833
    %1835 = vmatprep.mubr.bf16.mxu0 %v1572
    %1836 = vmatmul.mubr.bf16.gmra.mxu0 %v1571
    %v1837 = vpop.f32.mrf.mxu0
    %v1838 = vadd.f32 0.0, %v1837
    %v1839 = vpop.f32.mrf.mxu0
    %v1840 = vadd.f32 0.0, %v1839
    %v1841 = vpop.f32.mrf.mxu0
    %v1842 = vadd.f32 0.0, %v1841
    %v1843 = vpop.f32.mrf.mxu0
    %v1844 = vadd.f32 0.0, %v1843
    %1845 = vmatprep.mubr.bf16.mxu0 %v1576
    %1846 = vmatmul.mubr.bf16.gmra.mxu0 %v1575
    %v1847 = vpop.f32.mrf.mxu0
    %v1848 = vadd.f32 0.0, %v1847
    %v1849 = vpop.f32.mrf.mxu0
    %v1850 = vadd.f32 0.0, %v1849
    %v1851 = vpop.f32.mrf.mxu0
    %v1852 = vadd.f32 0.0, %v1851
    %v1853 = vpop.f32.mrf.mxu0
    %v1854 = vadd.f32 0.0, %v1853
    %1855 = vmatprep.mubr.bf16.mxu0 %v1580
    %1856 = vmatmul.mubr.bf16.gmra.mxu0 %v1579
    %v1857 = vpop.f32.mrf.mxu0
    %v1858 = vadd.f32 0.0, %v1857
    %v1859 = vpop.f32.mrf.mxu0
    %v1860 = vadd.f32 0.0, %v1859
    %v1861 = vpop.f32.mrf.mxu0
    %v1862 = vadd.f32 0.0, %v1861
    %v1863 = vpop.f32.mrf.mxu0
    %v1864 = vadd.f32 0.0, %v1863
    %1865 = vmatprep.mubr.bf16.mxu0 %v1584
    %1866 = vmatmul.mubr.bf16.gmra.mxu0 %v1583
    %v1867 = vpop.f32.mrf.mxu0
    %v1868 = vadd.f32 0.0, %v1867
    %v1869 = vpop.f32.mrf.mxu0
    %v1870 = vadd.f32 0.0, %v1869
    %v1871 = vpop.f32.mrf.mxu0
    %v1872 = vadd.f32 0.0, %v1871
    %v1873 = vpop.f32.mrf.mxu0
    %v1874 = vadd.f32 0.0, %v1873
    %1875 = vmatprep.mubr.bf16.mxu0 %v1588
    %1876 = vmatmul.mubr.bf16.gmra.mxu0 %v1587
    %v1877 = vpop.f32.mrf.mxu0
    %v1878 = vadd.f32 0.0, %v1877
    %v1879 = vpop.f32.mrf.mxu0
    %v1880 = vadd.f32 0.0, %v1879
    %v1881 = vpop.f32.mrf.mxu0
    %v1882 = vadd.f32 0.0, %v1881
    %v1883 = vpop.f32.mrf.mxu0
    %v1884 = vadd.f32 0.0, %v1883
    %1885 = vmatprep.mubr.bf16.mxu0 %v1592
    %1886 = vmatmul.mubr.bf16.gmra.mxu0 %v1591
    %v1887 = vpop.f32.mrf.mxu0
    %v1888 = vadd.f32 0.0, %v1887
    %v1889 = vpop.f32.mrf.mxu0
    %v1890 = vadd.f32 0.0, %v1889
    %v1891 = vpop.f32.mrf.mxu0
    %v1892 = vadd.f32 0.0, %v1891
    %v1893 = vpop.f32.mrf.mxu0
    %v1894 = vadd.f32 0.0, %v1893
    %1895 = vmatprep.mubr.bf16.mxu0 %v1596
    %1896 = vmatmul.mubr.bf16.gmra.mxu0 %v1595
    %v1897 = vpop.f32.mrf.mxu0
    %v1898 = vadd.f32 0.0, %v1897
    %v1899 = vpop.f32.mrf.mxu0
    %v1900 = vadd.f32 0.0, %v1899
    %v1901 = vpop.f32.mrf.mxu0
    %v1902 = vadd.f32 0.0, %v1901
    %v1903 = vpop.f32.mrf.mxu0
    %v1904 = vadd.f32 0.0, %v1903
    %1905 = vdwg.mxu0
    %1906 = vmatprep.subr.bf16.mxu0 %v1758
    %1907 = vmatpush1.bf16.msra.mxu0 %v1757
    %1908 = vmatprep.subr.bf16.mxu0 %v1754
    %1909 = vmatpush1.bf16.msra.mxu0 %v1753
    %1910 = vmatprep.subr.bf16.mxu0 %v1750
    %1911 = vmatpush1.bf16.msra.mxu0 %v1749
    %1912 = vmatprep.subr.bf16.mxu0 %v1746
    %1913 = vmatpush1.bf16.msra.mxu0 %v1745
    %1914 = vmatprep.subr.bf16.mxu0 %v1742
    %1915 = vmatpush1.bf16.msra.mxu0 %v1741
    %1916 = vmatprep.subr.bf16.mxu0 %v1738
    %1917 = vmatpush1.bf16.msra.mxu0 %v1737
    %1918 = vmatprep.subr.bf16.mxu0 %v1734
    %1919 = vmatpush1.bf16.msra.mxu0 %v1733
    %1920 = vmatprep.subr.bf16.mxu0 %v1730
    %1921 = vmatpush1.bf16.msra.mxu0 %v1729
    %1922 = vmatprep.subr.bf16.mxu0 %v1790
    %1923 = vmatpush2.bf16.msra.mxu0 %v1789
    %1924 = vmatprep.subr.bf16.mxu0 %v1786
    %1925 = vmatpush2.bf16.msra.mxu0 %v1785
    %1926 = vmatprep.subr.bf16.mxu0 %v1782
    %1927 = vmatpush2.bf16.msra.mxu0 %v1781
    %1928 = vmatprep.subr.bf16.mxu0 %v1778
    %1929 = vmatpush2.bf16.msra.mxu0 %v1777
    %1930 = vmatprep.subr.bf16.mxu0 %v1774
    %1931 = vmatpush2.bf16.msra.mxu0 %v1773
    %1932 = vmatprep.subr.bf16.mxu0 %v1770
    %1933 = vmatpush2.bf16.msra.mxu0 %v1769
    %1934 = vmatprep.subr.bf16.mxu0 %v1766
    %1935 = vmatpush2.bf16.msra.mxu0 %v1765
    %1936 = vmatprep.subr.bf16.mxu0 %v1762
    %1937 = vmatpush2.bf16.msra.mxu0 %v1761
    %1938 = vmatprep.mubr.bf16.mxu0 %v1570
    %1939 = vmatmul.mubr.bf16.gmra.mxu0 %v1569
    %v1940 = vpop.f32.mrf.mxu0
    %v1941 = vadd.f32 %v1828, %v1940
    %v1942 = vpop.f32.mrf.mxu0
    %v1943 = vadd.f32 %v1830, %v1942
    %v1944 = vpop.f32.mrf.mxu0
    %v1945 = vadd.f32 %v1832, %v1944
    %v1946 = vpop.f32.mrf.mxu0
    %v1947 = vadd.f32 %v1834, %v1946
    %1948 = vmatprep.mubr.bf16.mxu0 %v1574
    %1949 = vmatmul.mubr.bf16.gmra.mxu0 %v1573
    %v1950 = vpop.f32.mrf.mxu0
    %v1951 = vadd.f32 %v1838, %v1950
    %v1952 = vpop.f32.mrf.mxu0
    %v1953 = vadd.f32 %v1840, %v1952
    %v1954 = vpop.f32.mrf.mxu0
    %v1955 = vadd.f32 %v1842, %v1954
    %v1956 = vpop.f32.mrf.mxu0
    %v1957 = vadd.f32 %v1844, %v1956
    %1958 = vmatprep.mubr.bf16.mxu0 %v1578
    %1959 = vmatmul.mubr.bf16.gmra.mxu0 %v1577
    %v1960 = vpop.f32.mrf.mxu0
    %v1961 = vadd.f32 %v1848, %v1960
    %v1962 = vpop.f32.mrf.mxu0
    %v1963 = vadd.f32 %v1850, %v1962
    %v1964 = vpop.f32.mrf.mxu0
    %v1965 = vadd.f32 %v1852, %v1964
    %v1966 = vpop.f32.mrf.mxu0
    %v1967 = vadd.f32 %v1854, %v1966
    %1968 = vmatprep.mubr.bf16.mxu0 %v1582
    %1969 = vmatmul.mubr.bf16.gmra.mxu0 %v1581
    %v1970 = vpop.f32.mrf.mxu0
    %v1971 = vadd.f32 %v1858, %v1970
    %v1972 = vpop.f32.mrf.mxu0
    %v1973 = vadd.f32 %v1860, %v1972
    %v1974 = vpop.f32.mrf.mxu0
    %v1975 = vadd.f32 %v1862, %v1974
    %v1976 = vpop.f32.mrf.mxu0
    %v1977 = vadd.f32 %v1864, %v1976
    %1978 = vmatprep.mubr.bf16.mxu0 %v1586
    %1979 = vmatmul.mubr.bf16.gmra.mxu0 %v1585
    %v1980 = vpop.f32.mrf.mxu0
    %v1981 = vadd.f32 %v1868, %v1980
    %v1982 = vpop.f32.mrf.mxu0
    %v1983 = vadd.f32 %v1870, %v1982
    %v1984 = vpop.f32.mrf.mxu0
    %v1985 = vadd.f32 %v1872, %v1984
    %v1986 = vpop.f32.mrf.mxu0
    %v1987 = vadd.f32 %v1874, %v1986
    %1988 = vmatprep.mubr.bf16.mxu0 %v1590
    %1989 = vmatmul.mubr.bf16.gmra.mxu0 %v1589
    %v1990 = vpop.f32.mrf.mxu0
    %v1991 = vadd.f32 %v1878, %v1990
    %v1992 = vpop.f32.mrf.mxu0
    %v1993 = vadd.f32 %v1880, %v1992
    %v1994 = vpop.f32.mrf.mxu0
    %v1995 = vadd.f32 %v1882, %v1994
    %v1996 = vpop.f32.mrf.mxu0
    %v1997 = vadd.f32 %v1884, %v1996
    %1998 = vmatprep.mubr.bf16.mxu0 %v1594
    %1999 = vmatmul.mubr.bf16.gmra.mxu0 %v1593
    %v2000 = vpop.f32.mrf.mxu0
    %v2001 = vadd.f32 %v1888, %v2000
    %v2002 = vpop.f32.mrf.mxu0
    %v2003 = vadd.f32 %v1890, %v2002
    %v2004 = vpop.f32.mrf.mxu0
    %v2005 = vadd.f32 %v1892, %v2004
    %v2006 = vpop.f32.mrf.mxu0
    %v2007 = vadd.f32 %v1894, %v2006
    %2008 = vmatprep.mubr.bf16.mxu0 %v1598
    %2009 = vmatmul.mubr.bf16.gmra.mxu0 %v1597
    %v2010 = vpop.f32.mrf.mxu0
    %v2011 = vadd.f32 %v1898, %v2010
    %v2012 = vpop.f32.mrf.mxu0
    %v2013 = vadd.f32 %v1900, %v2012
    %v2014 = vpop.f32.mrf.mxu0
    %v2015 = vadd.f32 %v1902, %v2014
    %v2016 = vpop.f32.mrf.mxu0
    %v2017 = vadd.f32 %v1904, %v2016
    %2018 = vdwg.mxu0
    %2019 = vmatprep.subr.bf16.mxu0 %v1696
    %2020 = vmatpush1.bf16.msra.mxu0 %v1695
    %2021 = vmatprep.subr.bf16.mxu0 %v1692
    %2022 = vmatpush1.bf16.msra.mxu0 %v1691
    %2023 = vmatprep.subr.bf16.mxu0 %v1688
    %2024 = vmatpush1.bf16.msra.mxu0 %v1687
    %2025 = vmatprep.subr.bf16.mxu0 %v1684
    %2026 = vmatpush1.bf16.msra.mxu0 %v1683
    %2027 = vmatprep.subr.bf16.mxu0 %v1680
    %2028 = vmatpush1.bf16.msra.mxu0 %v1679
    %2029 = vmatprep.subr.bf16.mxu0 %v1676
    %2030 = vmatpush1.bf16.msra.mxu0 %v1675
    %2031 = vmatprep.subr.bf16.mxu0 %v1672
    %2032 = vmatpush1.bf16.msra.mxu0 %v1671
    %2033 = vmatprep.subr.bf16.mxu0 %v1668
    %2034 = vmatpush1.bf16.msra.mxu0 %v1667
    %2035 = vmatprep.subr.bf16.mxu0 %v1728
    %2036 = vmatpush2.bf16.msra.mxu0 %v1727
    %2037 = vmatprep.subr.bf16.mxu0 %v1724
    %2038 = vmatpush2.bf16.msra.mxu0 %v1723
    %2039 = vmatprep.subr.bf16.mxu0 %v1720
    %2040 = vmatpush2.bf16.msra.mxu0 %v1719
    %2041 = vmatprep.subr.bf16.mxu0 %v1716
    %2042 = vmatpush2.bf16.msra.mxu0 %v1715
    %2043 = vmatprep.subr.bf16.mxu0 %v1712
    %2044 = vmatpush2.bf16.msra.mxu0 %v1711
    %2045 = vmatprep.subr.bf16.mxu0 %v1708
    %2046 = vmatpush2.bf16.msra.mxu0 %v1707
    %2047 = vmatprep.subr.bf16.mxu0 %v1704
    %2048 = vmatpush2.bf16.msra.mxu0 %v1703
    %2049 = vmatprep.subr.bf16.mxu0 %v1700
    %2050 = vmatpush2.bf16.msra.mxu0 %v1699
    %2051 = vmatprep.mubr.bf16.mxu0 %v1568
    %2052 = vmatmul.mubr.bf16.gmra.mxu0 %v1567
    %v2053 = vpop.f32.mrf.mxu0
    %v2054 = vadd.f32 0.0, %v2053
    %v2055 = vpop.f32.mrf.mxu0
    %v2056 = vadd.f32 0.0, %v2055
    %v2057 = vpop.f32.mrf.mxu0
    %v2058 = vadd.f32 0.0, %v2057
    %v2059 = vpop.f32.mrf.mxu0
    %v2060 = vadd.f32 0.0, %v2059
    %2061 = vmatprep.mubr.bf16.mxu0 %v1572
    %2062 = vmatmul.mubr.bf16.gmra.mxu0 %v1571
    %v2063 = vpop.f32.mrf.mxu0
    %v2064 = vadd.f32 0.0, %v2063
    %v2065 = vpop.f32.mrf.mxu0
    %v2066 = vadd.f32 0.0, %v2065
    %v2067 = vpop.f32.mrf.mxu0
    %v2068 = vadd.f32 0.0, %v2067
    %v2069 = vpop.f32.mrf.mxu0
    %v2070 = vadd.f32 0.0, %v2069
    %2071 = vmatprep.mubr.bf16.mxu0 %v1576
    %2072 = vmatmul.mubr.bf16.gmra.mxu0 %v1575
    %v2073 = vpop.f32.mrf.mxu0
    %v2074 = vadd.f32 0.0, %v2073
    %v2075 = vpop.f32.mrf.mxu0
    %v2076 = vadd.f32 0.0, %v2075
    %v2077 = vpop.f32.mrf.mxu0
    %v2078 = vadd.f32 0.0, %v2077
    %v2079 = vpop.f32.mrf.mxu0
    %v2080 = vadd.f32 0.0, %v2079
    %2081 = vmatprep.mubr.bf16.mxu0 %v1580
    %2082 = vmatmul.mubr.bf16.gmra.mxu0 %v1579
    %v2083 = vpop.f32.mrf.mxu0
    %v2084 = vadd.f32 0.0, %v2083
    %v2085 = vpop.f32.mrf.mxu0
    %v2086 = vadd.f32 0.0, %v2085
    %v2087 = vpop.f32.mrf.mxu0
    %v2088 = vadd.f32 0.0, %v2087
    %v2089 = vpop.f32.mrf.mxu0
    %v2090 = vadd.f32 0.0, %v2089
    %2091 = vmatprep.mubr.bf16.mxu0 %v1584
    %2092 = vmatmul.mubr.bf16.gmra.mxu0 %v1583
    %v2093 = vpop.f32.mrf.mxu0
    %v2094 = vadd.f32 0.0, %v2093
    %v2095 = vpop.f32.mrf.mxu0
    %v2096 = vadd.f32 0.0, %v2095
    %v2097 = vpop.f32.mrf.mxu0
    %v2098 = vadd.f32 0.0, %v2097
    %v2099 = vpop.f32.mrf.mxu0
    %v2100 = vadd.f32 0.0, %v2099
    %2101 = vmatprep.mubr.bf16.mxu0 %v1588
    %2102 = vmatmul.mubr.bf16.gmra.mxu0 %v1587
    %v2103 = vpop.f32.mrf.mxu0
    %v2104 = vadd.f32 0.0, %v2103
    %v2105 = vpop.f32.mrf.mxu0
    %v2106 = vadd.f32 0.0, %v2105
    %v2107 = vpop.f32.mrf.mxu0
    %v2108 = vadd.f32 0.0, %v2107
    %v2109 = vpop.f32.mrf.mxu0
    %v2110 = vadd.f32 0.0, %v2109
    %2111 = vmatprep.mubr.bf16.mxu0 %v1592
    %2112 = vmatmul.mubr.bf16.gmra.mxu0 %v1591
    %v2113 = vpop.f32.mrf.mxu0
    %v2114 = vadd.f32 0.0, %v2113
    %v2115 = vpop.f32.mrf.mxu0
    %v2116 = vadd.f32 0.0, %v2115
    %v2117 = vpop.f32.mrf.mxu0
    %v2118 = vadd.f32 0.0, %v2117
    %v2119 = vpop.f32.mrf.mxu0
    %v2120 = vadd.f32 0.0, %v2119
    %2121 = vmatprep.mubr.bf16.mxu0 %v1596
    %2122 = vmatmul.mubr.bf16.gmra.mxu0 %v1595
    %v2123 = vpop.f32.mrf.mxu0
    %v2124 = vadd.f32 0.0, %v2123
    %v2125 = vpop.f32.mrf.mxu0
    %v2126 = vadd.f32 0.0, %v2125
    %v2127 = vpop.f32.mrf.mxu0
    %v2128 = vadd.f32 0.0, %v2127
    %v2129 = vpop.f32.mrf.mxu0
    %v2130 = vadd.f32 0.0, %v2129
    %2131 = vdwg.mxu0
    %2132 = vmatprep.subr.bf16.mxu0 %v1760
    %2133 = vmatpush1.bf16.msra.mxu0 %v1759
    %2134 = vmatprep.subr.bf16.mxu0 %v1756
    %2135 = vmatpush1.bf16.msra.mxu0 %v1755
    %2136 = vmatprep.subr.bf16.mxu0 %v1752
    %2137 = vmatpush1.bf16.msra.mxu0 %v1751
    %2138 = vmatprep.subr.bf16.mxu0 %v1748
    %2139 = vmatpush1.bf16.msra.mxu0 %v1747
    %2140 = vmatprep.subr.bf16.mxu0 %v1744
    %2141 = vmatpush1.bf16.msra.mxu0 %v1743
    %2142 = vmatprep.subr.bf16.mxu0 %v1740
    %2143 = vmatpush1.bf16.msra.mxu0 %v1739
    %2144 = vmatprep.subr.bf16.mxu0 %v1736
    %2145 = vmatpush1.bf16.msra.mxu0 %v1735
    %2146 = vmatprep.subr.bf16.mxu0 %v1732
    %2147 = vmatpush1.bf16.msra.mxu0 %v1731
    %2148 = vmatprep.subr.bf16.mxu0 %v1792
    %2149 = vmatpush2.bf16.msra.mxu0 %v1791
    %2150 = vmatprep.subr.bf16.mxu0 %v1788
    %2151 = vmatpush2.bf16.msra.mxu0 %v1787
    %2152 = vmatprep.subr.bf16.mxu0 %v1784
    %2153 = vmatpush2.bf16.msra.mxu0 %v1783
    %2154 = vmatprep.subr.bf16.mxu0 %v1780
    %2155 = vmatpush2.bf16.msra.mxu0 %v1779
    %2156 = vmatprep.subr.bf16.mxu0 %v1776
    %2157 = vmatpush2.bf16.msra.mxu0 %v1775
    %2158 = vmatprep.subr.bf16.mxu0 %v1772
    %2159 = vmatpush2.bf16.msra.mxu0 %v1771
    %2160 = vmatprep.subr.bf16.mxu0 %v1768
    %2161 = vmatpush2.bf16.msra.mxu0 %v1767
    %2162 = vmatprep.subr.bf16.mxu0 %v1764
    %2163 = vmatpush2.bf16.msra.mxu0 %v1763
    %2164 = vmatprep.mubr.bf16.mxu0 %v1570
    %2165 = vmatmul.mubr.bf16.gmra.mxu0 %v1569
    %v2166 = vpop.f32.mrf.mxu0
    %v2167 = vadd.f32 %v2054, %v2166
    %v2168 = vpop.f32.mrf.mxu0
    %v2169 = vadd.f32 %v2056, %v2168
    %v2170 = vpop.f32.mrf.mxu0
    %v2171 = vadd.f32 %v2058, %v2170
    %v2172 = vpop.f32.mrf.mxu0
    %v2173 = vadd.f32 %v2060, %v2172
    %2174 = vmatprep.mubr.bf16.mxu0 %v1574
    %2175 = vmatmul.mubr.bf16.gmra.mxu0 %v1573
    %v2176 = vpop.f32.mrf.mxu0
    %v2177 = vadd.f32 %v2064, %v2176
    %v2178 = vpop.f32.mrf.mxu0
    %v2179 = vadd.f32 %v2066, %v2178
    %v2180 = vpop.f32.mrf.mxu0
    %v2181 = vadd.f32 %v2068, %v2180
    %v2182 = vpop.f32.mrf.mxu0
    %v2183 = vadd.f32 %v2070, %v2182
    %2184 = vmatprep.mubr.bf16.mxu0 %v1578
    %2185 = vmatmul.mubr.bf16.gmra.mxu0 %v1577
    %v2186 = vpop.f32.mrf.mxu0
    %v2187 = vadd.f32 %v2074, %v2186
    %v2188 = vpop.f32.mrf.mxu0
    %v2189 = vadd.f32 %v2076, %v2188
    %v2190 = vpop.f32.mrf.mxu0
    %v2191 = vadd.f32 %v2078, %v2190
    %v2192 = vpop.f32.mrf.mxu0
    %v2193 = vadd.f32 %v2080, %v2192
    %2194 = vmatprep.mubr.bf16.mxu0 %v1582
    %2195 = vmatmul.mubr.bf16.gmra.mxu0 %v1581
    %v2196 = vpop.f32.mrf.mxu0
    %v2197 = vadd.f32 %v2084, %v2196
    %v2198 = vpop.f32.mrf.mxu0
    %v2199 = vadd.f32 %v2086, %v2198
    %v2200 = vpop.f32.mrf.mxu0
    %v2201 = vadd.f32 %v2088, %v2200
    %v2202 = vpop.f32.mrf.mxu0
    %v2203 = vadd.f32 %v2090, %v2202
    %2204 = vmatprep.mubr.bf16.mxu0 %v1586
    %2205 = vmatmul.mubr.bf16.gmra.mxu0 %v1585
    %v2206 = vpop.f32.mrf.mxu0
    %v2207 = vadd.f32 %v2094, %v2206
    %v2208 = vpop.f32.mrf.mxu0
    %v2209 = vadd.f32 %v2096, %v2208
    %v2210 = vpop.f32.mrf.mxu0
    %v2211 = vadd.f32 %v2098, %v2210
    %v2212 = vpop.f32.mrf.mxu0
    %v2213 = vadd.f32 %v2100, %v2212
    %2214 = vmatprep.mubr.bf16.mxu0 %v1590
    %2215 = vmatmul.mubr.bf16.gmra.mxu0 %v1589
    %v2216 = vpop.f32.mrf.mxu0
    %v2217 = vadd.f32 %v2104, %v2216
    %v2218 = vpop.f32.mrf.mxu0
    %v2219 = vadd.f32 %v2106, %v2218
    %v2220 = vpop.f32.mrf.mxu0
    %v2221 = vadd.f32 %v2108, %v2220
    %v2222 = vpop.f32.mrf.mxu0
    %v2223 = vadd.f32 %v2110, %v2222
    %2224 = vmatprep.mubr.bf16.mxu0 %v1594
    %2225 = vmatmul.mubr.bf16.gmra.mxu0 %v1593
    %v2226 = vpop.f32.mrf.mxu0
    %v2227 = vadd.f32 %v2114, %v2226
    %v2228 = vpop.f32.mrf.mxu0
    %v2229 = vadd.f32 %v2116, %v2228
    %v2230 = vpop.f32.mrf.mxu0
    %v2231 = vadd.f32 %v2118, %v2230
    %v2232 = vpop.f32.mrf.mxu0
    %v2233 = vadd.f32 %v2120, %v2232
    %2234 = vmatprep.mubr.bf16.mxu0 %v1598
    %2235 = vmatmul.mubr.bf16.gmra.mxu0 %v1597
    %v2236 = vpop.f32.mrf.mxu0
    %v2237 = vadd.f32 %v2124, %v2236
    %v2238 = vpop.f32.mrf.mxu0
    %v2239 = vadd.f32 %v2126, %v2238
    %v2240 = vpop.f32.mrf.mxu0
    %v2241 = vadd.f32 %v2128, %v2240
    %v2242 = vpop.f32.mrf.mxu0
    %v2243 = vadd.f32 %v2130, %v2242
    %2244 = vdwg.mxu0
    %v2245 = vld [vmem:[%s7] sm:$0xf]
    %v2247 = vlaneseq
    %v2248 = vshrl.u32 %v2247, 7
    %v2249 = vsub.s32 0, %v2248
    %v2250 = vrot.slane %v2245, %v2249
    %v2251 = vlaneseq
    %v2252 = vshrl.u32 %v2251, 7
    %v2253 = vsub.s32 1, %v2252
    %v2254 = vrot.slane %v2245, %v2253
    %v2255 = vlaneseq
    %v2256 = vshrl.u32 %v2255, 7
    %v2257 = vsub.s32 2, %v2256
    %v2258 = vrot.slane %v2245, %v2257
    %v2259 = vlaneseq
    %v2260 = vshrl.u32 %v2259, 7
    %v2261 = vsub.s32 3, %v2260
    %v2262 = vrot.slane %v2245, %v2261
    %v2267 = vmul.f32 %v1941, %v2250
    %v2268 = vmul.f32 %v1943, %v2254
    %v2269 = vmul.f32 %v2167, %v2258
    %v2270 = vmul.f32 %v2169, %v2262
    %v2271 = vmul.f32 %v1945, %v2250
    %v2272 = vmul.f32 %v1947, %v2254
    %v2273 = vmul.f32 %v2171, %v2258
    %v2274 = vmul.f32 %v2173, %v2262
    %v2275 = vmul.f32 %v1951, %v2250
    %v2276 = vmul.f32 %v1953, %v2254
    %v2277 = vmul.f32 %v2177, %v2258
    %v2278 = vmul.f32 %v2179, %v2262
    %v2279 = vmul.f32 %v1955, %v2250
    %v2280 = vmul.f32 %v1957, %v2254
    %v2281 = vmul.f32 %v2181, %v2258
    %v2282 = vmul.f32 %v2183, %v2262
    %v2283 = vmul.f32 %v1961, %v2250
    %v2284 = vmul.f32 %v1963, %v2254
    %v2285 = vmul.f32 %v2187, %v2258
    %v2286 = vmul.f32 %v2189, %v2262
    %v2287 = vmul.f32 %v1965, %v2250
    %v2288 = vmul.f32 %v1967, %v2254
    %v2289 = vmul.f32 %v2191, %v2258
    %v2290 = vmul.f32 %v2193, %v2262
    %v2291 = vmul.f32 %v1971, %v2250
    %v2292 = vmul.f32 %v1973, %v2254
    %v2293 = vmul.f32 %v2197, %v2258
    %v2294 = vmul.f32 %v2199, %v2262
    %v2295 = vmul.f32 %v1975, %v2250
    %v2296 = vmul.f32 %v1977, %v2254
    %v2297 = vmul.f32 %v2201, %v2258
    %v2298 = vmul.f32 %v2203, %v2262
    %v2299 = vmul.f32 %v1981, %v2250
    %v2300 = vmul.f32 %v1983, %v2254
    %v2301 = vmul.f32 %v2207, %v2258
    %v2302 = vmul.f32 %v2209, %v2262
    %v2303 = vmul.f32 %v1985, %v2250
    %v2304 = vmul.f32 %v1987, %v2254
    %v2305 = vmul.f32 %v2211, %v2258
    %v2306 = vmul.f32 %v2213, %v2262
    %v2307 = vmul.f32 %v1991, %v2250
    %v2308 = vmul.f32 %v1993, %v2254
    %v2309 = vmul.f32 %v2217, %v2258
    %v2310 = vmul.f32 %v2219, %v2262
    %v2311 = vmul.f32 %v1995, %v2250
    %v2312 = vmul.f32 %v1997, %v2254
    %v2313 = vmul.f32 %v2221, %v2258
    %v2314 = vmul.f32 %v2223, %v2262
    %v2315 = vmul.f32 %v2001, %v2250
    %v2316 = vmul.f32 %v2003, %v2254
    %v2317 = vmul.f32 %v2227, %v2258
    %v2318 = vmul.f32 %v2229, %v2262
    %v2319 = vmul.f32 %v2005, %v2250
    %v2320 = vmul.f32 %v2007, %v2254
    %v2321 = vmul.f32 %v2231, %v2258
    %v2322 = vmul.f32 %v2233, %v2262
    %v2323 = vmul.f32 %v2011, %v2250
    %v2324 = vmul.f32 %v2013, %v2254
    %v2325 = vmul.f32 %v2237, %v2258
    %v2326 = vmul.f32 %v2239, %v2262
    %v2327 = vmul.f32 %v2015, %v2250
    %v2328 = vmul.f32 %v2017, %v2254
    %v2329 = vmul.f32 %v2241, %v2258
    %v2330 = vmul.f32 %v2243, %v2262
    %v2331 = vld [vmem:[#allocation12] sm:$0xf]
    %v2333 = vlaneseq
    %v2334 = vshrl.u32 %v2333, 7
    %v2335 = vsub.s32 0, %v2334
    %v2336 = vrot.slane %v2331, %v2335
    %v2337 = vlaneseq
    %v2338 = vshrl.u32 %v2337, 7
    %v2339 = vsub.s32 1, %v2338
    %v2340 = vrot.slane %v2331, %v2339
    %v2341 = vlaneseq
    %v2342 = vshrl.u32 %v2341, 7
    %v2343 = vsub.s32 2, %v2342
    %v2344 = vrot.slane %v2331, %v2343
    %v2345 = vlaneseq
    %v2346 = vshrl.u32 %v2345, 7
    %v2347 = vsub.s32 3, %v2346
    %v2348 = vrot.slane %v2331, %v2347
    %v2353 = vadd.f32 %v2267, %v2336
    %v2354 = vadd.f32 %v2268, %v2340
    %v2355 = vadd.f32 %v2269, %v2344
    %v2356 = vadd.f32 %v2270, %v2348
    %v2357 = vadd.f32 %v2271, %v2336
    %v2358 = vadd.f32 %v2272, %v2340
    %v2359 = vadd.f32 %v2273, %v2344
    %v2360 = vadd.f32 %v2274, %v2348
    %v2361 = vadd.f32 %v2275, %v2336
    %v2362 = vadd.f32 %v2276, %v2340
    %v2363 = vadd.f32 %v2277, %v2344
    %v2364 = vadd.f32 %v2278, %v2348
    %v2365 = vadd.f32 %v2279, %v2336
    %v2366 = vadd.f32 %v2280, %v2340
    %v2367 = vadd.f32 %v2281, %v2344
    %v2368 = vadd.f32 %v2282, %v2348
    %v2369 = vadd.f32 %v2283, %v2336
    %v2370 = vadd.f32 %v2284, %v2340
    %v2371 = vadd.f32 %v2285, %v2344
    %v2372 = vadd.f32 %v2286, %v2348
    %v2373 = vadd.f32 %v2287, %v2336
    %v2374 = vadd.f32 %v2288, %v2340
    %v2375 = vadd.f32 %v2289, %v2344
    %v2376 = vadd.f32 %v2290, %v2348
    %v2377 = vadd.f32 %v2291, %v2336
    %v2378 = vadd.f32 %v2292, %v2340
    %v2379 = vadd.f32 %v2293, %v2344
    %v2380 = vadd.f32 %v2294, %v2348
    %v2381 = vadd.f32 %v2295, %v2336
    %v2382 = vadd.f32 %v2296, %v2340
    %v2383 = vadd.f32 %v2297, %v2344
    %v2384 = vadd.f32 %v2298, %v2348
    %v2385 = vadd.f32 %v2299, %v2336
    %v2386 = vadd.f32 %v2300, %v2340
    %v2387 = vadd.f32 %v2301, %v2344
    %v2388 = vadd.f32 %v2302, %v2348
    %v2389 = vadd.f32 %v2303, %v2336
    %v2390 = vadd.f32 %v2304, %v2340
    %v2391 = vadd.f32 %v2305, %v2344
    %v2392 = vadd.f32 %v2306, %v2348
    %v2393 = vadd.f32 %v2307, %v2336
    %v2394 = vadd.f32 %v2308, %v2340
    %v2395 = vadd.f32 %v2309, %v2344
    %v2396 = vadd.f32 %v2310, %v2348
    %v2397 = vadd.f32 %v2311, %v2336
    %v2398 = vadd.f32 %v2312, %v2340
    %v2399 = vadd.f32 %v2313, %v2344
    %v2400 = vadd.f32 %v2314, %v2348
    %v2401 = vadd.f32 %v2315, %v2336
    %v2402 = vadd.f32 %v2316, %v2340
    %v2403 = vadd.f32 %v2317, %v2344
    %v2404 = vadd.f32 %v2318, %v2348
    %v2405 = vadd.f32 %v2319, %v2336
    %v2406 = vadd.f32 %v2320, %v2340
    %v2407 = vadd.f32 %v2321, %v2344
    %v2408 = vadd.f32 %v2322, %v2348
    %v2409 = vadd.f32 %v2323, %v2336
    %v2410 = vadd.f32 %v2324, %v2340
    %v2411 = vadd.f32 %v2325, %v2344
    %v2412 = vadd.f32 %v2326, %v2348
    %v2413 = vadd.f32 %v2327, %v2336
    %v2414 = vadd.f32 %v2328, %v2340
    %v2415 = vadd.f32 %v2329, %v2344
    %v2416 = vadd.f32 %v2330, %v2348
    %v2417 = vmax.f32 %v2353, 0.0
    %v2418 = vmax.f32 %v2354, 0.0
    %v2419 = vmax.f32 %v2355, 0.0
    %v2420 = vmax.f32 %v2356, 0.0
    %v2421 = vmax.f32 %v2357, 0.0
    %v2422 = vmax.f32 %v2358, 0.0
    %v2423 = vmax.f32 %v2359, 0.0
    %v2424 = vmax.f32 %v2360, 0.0
    %v2425 = vmax.f32 %v2361, 0.0
    %v2426 = vmax.f32 %v2362, 0.0
    %v2427 = vmax.f32 %v2363, 0.0
    %v2428 = vmax.f32 %v2364, 0.0
    %v2429 = vmax.f32 %v2365, 0.0
    %v2430 = vmax.f32 %v2366, 0.0
    %v2431 = vmax.f32 %v2367, 0.0
    %v2432 = vmax.f32 %v2368, 0.0
    %v2433 = vmax.f32 %v2369, 0.0
    %v2434 = vmax.f32 %v2370, 0.0
    %v2435 = vmax.f32 %v2371, 0.0
    %v2436 = vmax.f32 %v2372, 0.0
    %v2437 = vmax.f32 %v2373, 0.0
    %v2438 = vmax.f32 %v2374, 0.0
    %v2439 = vmax.f32 %v2375, 0.0
    %v2440 = vmax.f32 %v2376, 0.0
    %v2441 = vmax.f32 %v2377, 0.0
    %v2442 = vmax.f32 %v2378, 0.0
    %v2443 = vmax.f32 %v2379, 0.0
    %v2444 = vmax.f32 %v2380, 0.0
    %v2445 = vmax.f32 %v2381, 0.0
    %v2446 = vmax.f32 %v2382, 0.0
    %v2447 = vmax.f32 %v2383, 0.0
    %v2448 = vmax.f32 %v2384, 0.0
    %v2449 = vmax.f32 %v2385, 0.0
    %v2450 = vmax.f32 %v2386, 0.0
    %v2451 = vmax.f32 %v2387, 0.0
    %v2452 = vmax.f32 %v2388, 0.0
    %v2453 = vmax.f32 %v2389, 0.0
    %v2454 = vmax.f32 %v2390, 0.0
    %v2455 = vmax.f32 %v2391, 0.0
    %v2456 = vmax.f32 %v2392, 0.0
    %v2457 = vmax.f32 %v2393, 0.0
    %v2458 = vmax.f32 %v2394, 0.0
    %v2459 = vmax.f32 %v2395, 0.0
    %v2460 = vmax.f32 %v2396, 0.0
    %v2461 = vmax.f32 %v2397, 0.0
    %v2462 = vmax.f32 %v2398, 0.0
    %v2463 = vmax.f32 %v2399, 0.0
    %v2464 = vmax.f32 %v2400, 0.0
    %v2465 = vmax.f32 %v2401, 0.0
    %v2466 = vmax.f32 %v2402, 0.0
    %v2467 = vmax.f32 %v2403, 0.0
    %v2468 = vmax.f32 %v2404, 0.0
    %v2469 = vmax.f32 %v2405, 0.0
    %v2470 = vmax.f32 %v2406, 0.0
    %v2471 = vmax.f32 %v2407, 0.0
    %v2472 = vmax.f32 %v2408, 0.0
    %v2473 = vmax.f32 %v2409, 0.0
    %v2474 = vmax.f32 %v2410, 0.0
    %v2475 = vmax.f32 %v2411, 0.0
    %v2476 = vmax.f32 %v2412, 0.0
    %v2477 = vmax.f32 %v2413, 0.0
    %v2478 = vmax.f32 %v2414, 0.0
    %v2479 = vmax.f32 %v2415, 0.0
    %v2480 = vmax.f32 %v2416, 0.0
    %v2481 = vpack.c.bf16 %v2421, %v2417
    %v2482 = vpack.c.bf16 %v2422, %v2418
    %v2483 = vpack.c.bf16 %v2423, %v2419
    %v2484 = vpack.c.bf16 %v2424, %v2420
    %v2485 = vpack.c.bf16 %v2429, %v2425
    %v2486 = vpack.c.bf16 %v2430, %v2426
    %v2487 = vpack.c.bf16 %v2431, %v2427
    %v2488 = vpack.c.bf16 %v2432, %v2428
    %v2489 = vpack.c.bf16 %v2437, %v2433
    %v2490 = vpack.c.bf16 %v2438, %v2434
    %v2491 = vpack.c.bf16 %v2439, %v2435
    %v2492 = vpack.c.bf16 %v2440, %v2436
    %v2493 = vpack.c.bf16 %v2445, %v2441
    %v2494 = vpack.c.bf16 %v2446, %v2442
    %v2495 = vpack.c.bf16 %v2447, %v2443
    %v2496 = vpack.c.bf16 %v2448, %v2444
    %v2497 = vpack.c.bf16 %v2453, %v2449
    %v2498 = vpack.c.bf16 %v2454, %v2450
    %v2499 = vpack.c.bf16 %v2455, %v2451
    %v2500 = vpack.c.bf16 %v2456, %v2452
    %v2501 = vpack.c.bf16 %v2461, %v2457
    %v2502 = vpack.c.bf16 %v2462, %v2458
    %v2503 = vpack.c.bf16 %v2463, %v2459
    %v2504 = vpack.c.bf16 %v2464, %v2460
    %v2505 = vpack.c.bf16 %v2469, %v2465
    %v2506 = vpack.c.bf16 %v2470, %v2466
    %v2507 = vpack.c.bf16 %v2471, %v2467
    %v2508 = vpack.c.bf16 %v2472, %v2468
    %v2509 = vpack.c.bf16 %v2477, %v2473
    %v2510 = vpack.c.bf16 %v2478, %v2474
    %v2511 = vpack.c.bf16 %v2479, %v2475
    %v2512 = vpack.c.bf16 %v2480, %v2476
    %s2513 = smul.u32 %s683, 1
    %s2514 = sshll.u32 %s2513, 4
    %2515 = dma.done %s111, %s2514
    %v2516 = vld [vmem:[#allocation4] sm:$0xff]
    %v2517 = vld [vmem:[#allocation4 + $0x8] sm:$0xff]
    %v2518 = vld [vmem:[#allocation4 + $0x10] sm:$0xff]
    %v2519 = vld [vmem:[#allocation4 + $0x18] sm:$0xff]
    %v2520 = vld [vmem:[#allocation4 + $0x20] sm:$0xff]
    %v2521 = vld [vmem:[#allocation4 + $0x28] sm:$0xff]
    %v2522 = vld [vmem:[#allocation4 + $0x30] sm:$0xff]
    %v2523 = vld [vmem:[#allocation4 + $0x38] sm:$0xff]
    %v2524 = vld [vmem:[#allocation4 + $0x40] sm:$0xff]
    %v2525 = vld [vmem:[#allocation4 + $0x48] sm:$0xff]
    %v2526 = vld [vmem:[#allocation4 + $0x50] sm:$0xff]
    %v2527 = vld [vmem:[#allocation4 + $0x58] sm:$0xff]
    %v2528 = vld [vmem:[#allocation4 + $0x60] sm:$0xff]
    %v2529 = vld [vmem:[#allocation4 + $0x68] sm:$0xff]
    %v2530 = vld [vmem:[#allocation4 + $0x70] sm:$0xff]
    %v2531 = vld [vmem:[#allocation4 + $0x78] sm:$0xff]
    %v2532 = vunpack.c.l.s8.bf16 %v2516
    %v2533 = vunpack.c.h.s8.bf16 %v2516
    %v2534 = vunpack.c.l.s8.bf16 %v2517
    %v2535 = vunpack.c.h.s8.bf16 %v2517
    %v2536 = vunpack.c.l.s8.bf16 %v2518
    %v2537 = vunpack.c.h.s8.bf16 %v2518
    %v2538 = vunpack.c.l.s8.bf16 %v2519
    %v2539 = vunpack.c.h.s8.bf16 %v2519
    %v2540 = vunpack.c.l.s8.bf16 %v2520
    %v2541 = vunpack.c.h.s8.bf16 %v2520
    %v2542 = vunpack.c.l.s8.bf16 %v2521
    %v2543 = vunpack.c.h.s8.bf16 %v2521
    %v2544 = vunpack.c.l.s8.bf16 %v2522
    %v2545 = vunpack.c.h.s8.bf16 %v2522
    %v2546 = vunpack.c.l.s8.bf16 %v2523
    %v2547 = vunpack.c.h.s8.bf16 %v2523
    %v2548 = vunpack.c.l.s8.bf16 %v2524
    %v2549 = vunpack.c.h.s8.bf16 %v2524
    %v2550 = vunpack.c.l.s8.bf16 %v2525
    %v2551 = vunpack.c.h.s8.bf16 %v2525
    %v2552 = vunpack.c.l.s8.bf16 %v2526
    %v2553 = vunpack.c.h.s8.bf16 %v2526
    %v2554 = vunpack.c.l.s8.bf16 %v2527
    %v2555 = vunpack.c.h.s8.bf16 %v2527
    %v2556 = vunpack.c.l.s8.bf16 %v2528
    %v2557 = vunpack.c.h.s8.bf16 %v2528
    %v2558 = vunpack.c.l.s8.bf16 %v2529
    %v2559 = vunpack.c.h.s8.bf16 %v2529
    %v2560 = vunpack.c.l.s8.bf16 %v2530
    %v2561 = vunpack.c.h.s8.bf16 %v2530
    %v2562 = vunpack.c.l.s8.bf16 %v2531
    %v2563 = vunpack.c.h.s8.bf16 %v2531
    %2564 = vmatprep.subr.bf16.mxu0 0
    %2565 = vmatpush1.bf16.msra.mxu0 %v2539
    %2566 = vmatprep.subr.bf16.mxu0 0
    %2567 = vmatpush1.bf16.msra.mxu0 %v2538
    %2568 = vmatprep.subr.bf16.mxu0 0
    %2569 = vmatpush1.bf16.msra.mxu0 %v2537
    %2570 = vmatprep.subr.bf16.mxu0 0
    %2571 = vmatpush1.bf16.msra.mxu0 %v2536
    %2572 = vmatprep.subr.bf16.mxu0 0
    %2573 = vmatpush1.bf16.msra.mxu0 %v2535
    %2574 = vmatprep.subr.bf16.mxu0 0
    %2575 = vmatpush1.bf16.msra.mxu0 %v2534
    %2576 = vmatprep.subr.bf16.mxu0 0
    %2577 = vmatpush1.bf16.msra.mxu0 %v2533
    %2578 = vmatprep.subr.bf16.mxu0 0
    %2579 = vmatpush1.bf16.msra.mxu0 %v2532
    %2580 = vmatprep.subr.bf16.mxu0 0
    %2581 = vmatpush2.bf16.msra.mxu0 %v2547
    %2582 = vmatprep.subr.bf16.mxu0 0
    %2583 = vmatpush2.bf16.msra.mxu0 %v2546
    %2584 = vmatprep.subr.bf16.mxu0 0
    %2585 = vmatpush2.bf16.msra.mxu0 %v2545
    %2586 = vmatprep.subr.bf16.mxu0 0
    %2587 = vmatpush2.bf16.msra.mxu0 %v2544
    %2588 = vmatprep.subr.bf16.mxu0 0
    %2589 = vmatpush2.bf16.msra.mxu0 %v2543
    %2590 = vmatprep.subr.bf16.mxu0 0
    %2591 = vmatpush2.bf16.msra.mxu0 %v2542
    %2592 = vmatprep.subr.bf16.mxu0 0
    %2593 = vmatpush2.bf16.msra.mxu0 %v2541
    %2594 = vmatprep.subr.bf16.mxu0 0
    %2595 = vmatpush2.bf16.msra.mxu0 %v2540
    %2596 = vmatprep.mubr.bf16.mxu0 %v2482
    %2597 = vmatmul.mubr.bf16.gmra.mxu0 %v2481
    %v2598 = vpop.f32.mrf.mxu0
    %v2599 = vadd.f32 0.0, %v2598
    %v2600 = vpop.f32.mrf.mxu0
    %v2601 = vpop.f32.mrf.mxu0
    %v2602 = vadd.f32 0.0, %v2601
    %v2603 = vpop.f32.mrf.mxu0
    %2604 = vmatprep.mubr.bf16.mxu0 %v2486
    %2605 = vmatmul.mubr.bf16.gmra.mxu0 %v2485
    %v2606 = vpop.f32.mrf.mxu0
    %v2607 = vadd.f32 0.0, %v2606
    %v2608 = vpop.f32.mrf.mxu0
    %v2609 = vpop.f32.mrf.mxu0
    %v2610 = vadd.f32 0.0, %v2609
    %v2611 = vpop.f32.mrf.mxu0
    %2612 = vmatprep.mubr.bf16.mxu0 %v2490
    %2613 = vmatmul.mubr.bf16.gmra.mxu0 %v2489
    %v2614 = vpop.f32.mrf.mxu0
    %v2615 = vadd.f32 0.0, %v2614
    %v2616 = vpop.f32.mrf.mxu0
    %v2617 = vpop.f32.mrf.mxu0
    %v2618 = vadd.f32 0.0, %v2617
    %v2619 = vpop.f32.mrf.mxu0
    %2620 = vmatprep.mubr.bf16.mxu0 %v2494
    %2621 = vmatmul.mubr.bf16.gmra.mxu0 %v2493
    %v2622 = vpop.f32.mrf.mxu0
    %v2623 = vadd.f32 0.0, %v2622
    %v2624 = vpop.f32.mrf.mxu0
    %v2625 = vpop.f32.mrf.mxu0
    %v2626 = vadd.f32 0.0, %v2625
    %v2627 = vpop.f32.mrf.mxu0
    %2628 = vmatprep.mubr.bf16.mxu0 %v2498
    %2629 = vmatmul.mubr.bf16.gmra.mxu0 %v2497
    %v2630 = vpop.f32.mrf.mxu0
    %v2631 = vadd.f32 0.0, %v2630
    %v2632 = vpop.f32.mrf.mxu0
    %v2633 = vpop.f32.mrf.mxu0
    %v2634 = vadd.f32 0.0, %v2633
    %v2635 = vpop.f32.mrf.mxu0
    %2636 = vmatprep.mubr.bf16.mxu0 %v2502
    %2637 = vmatmul.mubr.bf16.gmra.mxu0 %v2501
    %v2638 = vpop.f32.mrf.mxu0
    %v2639 = vadd.f32 0.0, %v2638
    %v2640 = vpop.f32.mrf.mxu0
    %v2641 = vpop.f32.mrf.mxu0
    %v2642 = vadd.f32 0.0, %v2641
    %v2643 = vpop.f32.mrf.mxu0
    %2644 = vmatprep.mubr.bf16.mxu0 %v2506
    %2645 = vmatmul.mubr.bf16.gmra.mxu0 %v2505
    %v2646 = vpop.f32.mrf.mxu0
    %v2647 = vadd.f32 0.0, %v2646
    %v2648 = vpop.f32.mrf.mxu0
    %v2649 = vpop.f32.mrf.mxu0
    %v2650 = vadd.f32 0.0, %v2649
    %v2651 = vpop.f32.mrf.mxu0
    %2652 = vmatprep.mubr.bf16.mxu0 %v2510
    %2653 = vmatmul.mubr.bf16.gmra.mxu0 %v2509
    %v2654 = vpop.f32.mrf.mxu0
    %v2655 = vadd.f32 0.0, %v2654
    %v2656 = vpop.f32.mrf.mxu0
    %v2657 = vpop.f32.mrf.mxu0
    %v2658 = vadd.f32 0.0, %v2657
    %v2659 = vpop.f32.mrf.mxu0
    %2660 = vdwg.mxu0
    %2661 = vmatprep.subr.bf16.mxu0 0
    %2662 = vmatpush1.bf16.msra.mxu0 %v2555
    %2663 = vmatprep.subr.bf16.mxu0 0
    %2664 = vmatpush1.bf16.msra.mxu0 %v2554
    %2665 = vmatprep.subr.bf16.mxu0 0
    %2666 = vmatpush1.bf16.msra.mxu0 %v2553
    %2667 = vmatprep.subr.bf16.mxu0 0
    %2668 = vmatpush1.bf16.msra.mxu0 %v2552
    %2669 = vmatprep.subr.bf16.mxu0 0
    %2670 = vmatpush1.bf16.msra.mxu0 %v2551
    %2671 = vmatprep.subr.bf16.mxu0 0
    %2672 = vmatpush1.bf16.msra.mxu0 %v2550
    %2673 = vmatprep.subr.bf16.mxu0 0
    %2674 = vmatpush1.bf16.msra.mxu0 %v2549
    %2675 = vmatprep.subr.bf16.mxu0 0
    %2676 = vmatpush1.bf16.msra.mxu0 %v2548
    %2677 = vmatprep.subr.bf16.mxu0 0
    %2678 = vmatpush2.bf16.msra.mxu0 %v2563
    %2679 = vmatprep.subr.bf16.mxu0 0
    %2680 = vmatpush2.bf16.msra.mxu0 %v2562
    %2681 = vmatprep.subr.bf16.mxu0 0
    %2682 = vmatpush2.bf16.msra.mxu0 %v2561
    %2683 = vmatprep.subr.bf16.mxu0 0
    %2684 = vmatpush2.bf16.msra.mxu0 %v2560
    %2685 = vmatprep.subr.bf16.mxu0 0
    %2686 = vmatpush2.bf16.msra.mxu0 %v2559
    %2687 = vmatprep.subr.bf16.mxu0 0
    %2688 = vmatpush2.bf16.msra.mxu0 %v2558
    %2689 = vmatprep.subr.bf16.mxu0 0
    %2690 = vmatpush2.bf16.msra.mxu0 %v2557
    %2691 = vmatprep.subr.bf16.mxu0 0
    %2692 = vmatpush2.bf16.msra.mxu0 %v2556
    %2693 = vmatprep.mubr.bf16.mxu0 %v2484
    %2694 = vmatmul.mubr.bf16.gmra.mxu0 %v2483
    %v2695 = vpop.f32.mrf.mxu0
    %v2696 = vadd.f32 %v2599, %v2695
    %v2697 = vpop.f32.mrf.mxu0
    %v2698 = vpop.f32.mrf.mxu0
    %v2699 = vadd.f32 %v2602, %v2698
    %v2700 = vpop.f32.mrf.mxu0
    %2701 = vmatprep.mubr.bf16.mxu0 %v2488
    %2702 = vmatmul.mubr.bf16.gmra.mxu0 %v2487
    %v2703 = vpop.f32.mrf.mxu0
    %v2704 = vadd.f32 %v2607, %v2703
    %v2705 = vpop.f32.mrf.mxu0
    %v2706 = vpop.f32.mrf.mxu0
    %v2707 = vadd.f32 %v2610, %v2706
    %v2708 = vpop.f32.mrf.mxu0
    %2709 = vmatprep.mubr.bf16.mxu0 %v2492
    %2710 = vmatmul.mubr.bf16.gmra.mxu0 %v2491
    %v2711 = vpop.f32.mrf.mxu0
    %v2712 = vadd.f32 %v2615, %v2711
    %v2713 = vpop.f32.mrf.mxu0
    %v2714 = vpop.f32.mrf.mxu0
    %v2715 = vadd.f32 %v2618, %v2714
    %v2716 = vpop.f32.mrf.mxu0
    %2717 = vmatprep.mubr.bf16.mxu0 %v2496
    %2718 = vmatmul.mubr.bf16.gmra.mxu0 %v2495
    %v2719 = vpop.f32.mrf.mxu0
    %v2720 = vadd.f32 %v2623, %v2719
    %v2721 = vpop.f32.mrf.mxu0
    %v2722 = vpop.f32.mrf.mxu0
    %v2723 = vadd.f32 %v2626, %v2722
    %v2724 = vpop.f32.mrf.mxu0
    %2725 = vmatprep.mubr.bf16.mxu0 %v2500
    %2726 = vmatmul.mubr.bf16.gmra.mxu0 %v2499
    %v2727 = vpop.f32.mrf.mxu0
    %v2728 = vadd.f32 %v2631, %v2727
    %v2729 = vpop.f32.mrf.mxu0
    %v2730 = vpop.f32.mrf.mxu0
    %v2731 = vadd.f32 %v2634, %v2730
    %v2732 = vpop.f32.mrf.mxu0
    %2733 = vmatprep.mubr.bf16.mxu0 %v2504
    %2734 = vmatmul.mubr.bf16.gmra.mxu0 %v2503
    %v2735 = vpop.f32.mrf.mxu0
    %v2736 = vadd.f32 %v2639, %v2735
    %v2737 = vpop.f32.mrf.mxu0
    %v2738 = vpop.f32.mrf.mxu0
    %v2739 = vadd.f32 %v2642, %v2738
    %v2740 = vpop.f32.mrf.mxu0
    %2741 = vmatprep.mubr.bf16.mxu0 %v2508
    %2742 = vmatmul.mubr.bf16.gmra.mxu0 %v2507
    %v2743 = vpop.f32.mrf.mxu0
    %v2744 = vadd.f32 %v2647, %v2743
    %v2745 = vpop.f32.mrf.mxu0
    %v2746 = vpop.f32.mrf.mxu0
    %v2747 = vadd.f32 %v2650, %v2746
    %v2748 = vpop.f32.mrf.mxu0
    %2749 = vmatprep.mubr.bf16.mxu0 %v2512
    %2750 = vmatmul.mubr.bf16.gmra.mxu0 %v2511
    %v2751 = vpop.f32.mrf.mxu0
    %v2752 = vadd.f32 %v2655, %v2751
    %v2753 = vpop.f32.mrf.mxu0
    %v2754 = vpop.f32.mrf.mxu0
    %v2755 = vadd.f32 %v2658, %v2754
    %v2756 = vpop.f32.mrf.mxu0
    %2757 = vdwg.mxu0
    %v2758 = vld [vmem:[%s10] sm:$0x1]
    %v2760 = vlaneseq
    %v2761 = vshrl.u32 %v2760, 7
    %v2762 = vsub.s32 0, %v2761
    %v2763 = vrot.slane %v2758, %v2762
    %v2765 = vmul.f32 %v2696, %v2763
    %v2766 = vmul.f32 %v2699, %v2763
    %v2767 = vmul.f32 %v2704, %v2763
    %v2768 = vmul.f32 %v2707, %v2763
    %v2769 = vmul.f32 %v2712, %v2763
    %v2770 = vmul.f32 %v2715, %v2763
    %v2771 = vmul.f32 %v2720, %v2763
    %v2772 = vmul.f32 %v2723, %v2763
    %v2773 = vmul.f32 %v2728, %v2763
    %v2774 = vmul.f32 %v2731, %v2763
    %v2775 = vmul.f32 %v2736, %v2763
    %v2776 = vmul.f32 %v2739, %v2763
    %v2777 = vmul.f32 %v2744, %v2763
    %v2778 = vmul.f32 %v2747, %v2763
    %v2779 = vmul.f32 %v2752, %v2763
    %v2780 = vmul.f32 %v2755, %v2763
    %v2781 = vld [vmem:[%s11] sm:$0x1]
    %v2783 = vlaneseq
    %v2784 = vshrl.u32 %v2783, 7
    %v2785 = vsub.s32 0, %v2784
    %v2786 = vrot.slane %v2781, %v2785
    %v2788 = vadd.f32 %v2765, %v2786
    %v2789 = vadd.f32 %v2766, %v2786
    %v2790 = vadd.f32 %v2767, %v2786
    %v2791 = vadd.f32 %v2768, %v2786
    %v2792 = vadd.f32 %v2769, %v2786
    %v2793 = vadd.f32 %v2770, %v2786
    %v2794 = vadd.f32 %v2771, %v2786
    %v2795 = vadd.f32 %v2772, %v2786
    %v2796 = vadd.f32 %v2773, %v2786
    %v2797 = vadd.f32 %v2774, %v2786
    %v2798 = vadd.f32 %v2775, %v2786
    %v2799 = vadd.f32 %v2776, %v2786
    %v2800 = vadd.f32 %v2777, %v2786
    %v2801 = vadd.f32 %v2778, %v2786
    %v2802 = vadd.f32 %v2779, %v2786
    %v2803 = vadd.f32 %v2780, %v2786
    %v2804 = vmax.f32 %v2788, 0.0
    %v2805 = vmax.f32 %v2789, 0.0
    %v2806 = vmax.f32 %v2790, 0.0
    %v2807 = vmax.f32 %v2791, 0.0
    %v2808 = vmax.f32 %v2792, 0.0
    %v2809 = vmax.f32 %v2793, 0.0
    %v2810 = vmax.f32 %v2794, 0.0
    %v2811 = vmax.f32 %v2795, 0.0
    %v2812 = vmax.f32 %v2796, 0.0
    %v2813 = vmax.f32 %v2797, 0.0
    %v2814 = vmax.f32 %v2798, 0.0
    %v2815 = vmax.f32 %v2799, 0.0
    %v2816 = vmax.f32 %v2800, 0.0
    %v2817 = vmax.f32 %v2801, 0.0
    %v2818 = vmax.f32 %v2802, 0.0
    %v2819 = vmax.f32 %v2803, 0.0
    %2820 = vst [vmem:[#allocation14] sm:$0xff] %v2804
    %2821 = vst [vmem:[#allocation14 + $0x8] sm:$0xff] %v2805
    %2822 = vst [vmem:[#allocation14 + $0x10] sm:$0xff] %v2806
    %2823 = vst [vmem:[#allocation14 + $0x18] sm:$0xff] %v2807
    %2824 = vst [vmem:[#allocation14 + $0x20] sm:$0xff] %v2808
    %2825 = vst [vmem:[#allocation14 + $0x28] sm:$0xff] %v2809
    %2826 = vst [vmem:[#allocation14 + $0x30] sm:$0xff] %v2810
    %2827 = vst [vmem:[#allocation14 + $0x38] sm:$0xff] %v2811
    %2828 = vst [vmem:[#allocation14 + $0x40] sm:$0xff] %v2812
    %2829 = vst [vmem:[#allocation14 + $0x48] sm:$0xff] %v2813
    %2830 = vst [vmem:[#allocation14 + $0x50] sm:$0xff] %v2814
    %2831 = vst [vmem:[#allocation14 + $0x58] sm:$0xff] %v2815
    %2832 = vst [vmem:[#allocation14 + $0x60] sm:$0xff] %v2816
    %2833 = vst [vmem:[#allocation14 + $0x68] sm:$0xff] %v2817
    %2834 = vst [vmem:[#allocation14 + $0x70] sm:$0xff] %v2818
    %2835 = vst [vmem:[#allocation14 + $0x78] sm:$0xff] %v2819
    // Predicated region
    $region66: #{tpu_custom_call.1} parent=1 // pred_check
      _
    $region67: #{tpu_custom_call.1} parent=1 // pred_check_branch
      %2837 = sbr.rel (0) target = $region69
    $region68: #{tpu_custom_call.1} parent=1 // pred_region
      %s2839 = ssub.s32 2048, 2048
      %2840 = vsyncadd [#allocation8], %s2839
      %s2841 = sshll.u32 [#allocation14], 4
      %s2842 = int_to_ptr.vmem [resolvable:$true] %s2841
      %2847 = dma.vmem_to_hbm [thread:$0]  %s2842, 2048, %s12, [#allocation8], 128, 128, 8
    $region69: #{tpu_custom_call.1} parent=1 // pred_fallthru
      _
    // Predicated region
    $region70: #{tpu_custom_call.1} parent=1 // pred_check
      _
    $region71: #{tpu_custom_call.1} parent=1 // pred_check_branch
      %2849 = sbr.rel (0) target = $region73
    $region72: #{tpu_custom_call.1} parent=1 // pred_region
      %2850 = dma.done [#allocation8], 2048
    $region73: #{tpu_custom_call.1} parent=1 // pred_fallthru
      _
    %2851 = vsyncpa [#allocation7], 1
    %2852 = vsyncpa [#allocation10], 1
    %2853 = vsyncpa [#allocation13], 1
    %2854 = vsyncpa [#allocation8], 1
  %2855 = vsyncmov [#allocation5]
  %s2856 = vpop.sfrf %2855
  %p2857 = scmp.eq.s32.totalorder %s2856, 0
  %p2858 = pneg %p2857
  %2860 = shalt.err (%p2858)
  %s2861 = scalar_lea.sflag [#allocation5], 1
  %2862 = vsyncmov %s2861
  %s2863 = vpop.sfrf %2862
  %p2864 = scmp.eq.s32.totalorder %s2863, 0
  %p2865 = pneg %p2864
  %2867 = shalt.err (%p2865)
  %s2868 = scalar_lea.sflag [#allocation5], 2
  %2869 = vsyncmov %s2868
  %s2870 = vpop.sfrf %2869
  %p2871 = scmp.eq.s32.totalorder %s2870, 0
  %p2872 = pneg %p2871
  %2874 = shalt.err (%p2872)

</llo_original>
